<compile_context>
chip_gen: v7x
topology: tpu7x:2x2x1
jax: 0.10.0
libtpu: 0.0.40
codegen_flags: <defaults>
</compile_context>

<pallas_src>
import functools

import jax
import jax.numpy as jnp
from jax import lax
from jax.experimental import pallas as pl
from jax.experimental.pallas import tpu as pltpu

M = 2           # number of SK branches (branch i: padding = dilation = 1 + i)
GROUPS = 32     # grouped conv -> channels must equal groups (depthwise) here
BN_EPS = 1e-5


# ----------------------------------------------------------------------------- kernel
def _sknet_kernel(x_ref, w_ref, bns_ref, bnb_ref, w1_ref, bn1s_ref, bn1b_ref,
                  w2d_ref, o_ref, xs_ref, y0_ref, *, C):
    # x_ref   : (1, D, H, W*C)      unpadded input tile, W folded into lanes
    # w_ref   : (M, 27, H, W*C)     depthwise tap weights, H/W replicated,
    #                               taps crossing the W boundary pre-zeroed
    # bns/bnb : (M, W*C)            folded BatchNorm3d scale / bias
    # w1_ref  : (W*C, d)            fc1 weight, W-replicated rows
    # bn1s/bn1b : (1, d)            folded BN after fc1 (1/(D*H*W) folded in)
    # w2d_ref : (d, W*C)            fc2 (branch0 - branch1) weight, W-replicated
    # o_ref   : (1, D, H, W*C)
    # xs_ref  : (3, D+2M, H, W*C)   d-halo-padded source slabs for kh = 0 / 1 / 2
    # y0_ref  : (D, H, W*C)         branch-0 output (branch 1 stays live)
    _, D, H, WC = o_ref.shape
    PD = M                                     # d halo = max dilation
    f32 = jnp.float32

    # d-halo rows of every slab slot are the conv zero padding along D.
    zpad = jnp.zeros((PD, H, WC), f32)
    for k in range(3):
        xs_ref[k, 0:PD] = zpad
        xs_ref[k, PD + D:PD + D + PD] = zpad
    # slot 1 = unshifted copy (kh == 1 taps), shared by both branches.
    xs_ref[1, PD:PD + D] = x_ref[0]

    pooled = jnp.zeros((H, WC), f32)
    y1 = None
    for i in range(M):
        dil = 1 + i
        # slots 0 / 2 = h-shifted copies  xs[h] = x[h -/+ dil]  with zero h-halo
        # (the only sublane-relayout copies in the kernel: 2 per branch).
        xs_ref[0, PD:PD + D, dil:H] = x_ref[0, :, 0:H - dil]
        xs_ref[0, PD:PD + D, 0:dil] = jnp.zeros((D, dil, WC), f32)
        xs_ref[2, PD:PD + D, 0:H - dil] = x_ref[0, :, dil:H]
        xs_ref[2, PD:PD + D, H - dil:H] = jnp.zeros((D, dil, WC), f32)

        def taps(kw, init):
            # 9 (kd, kh) taps of column kw; every read is a leading-dim (free)
            # slice of an aligned slab -> pure vld + VALU.
            acc = init
            for kh in range(3):
                for kd in range(3):
                    s_d = dil * (kd - 1)
                    t = (kd * 3 + kh) * 3 + kw
                    prod = xs_ref[kh, PD + s_d:PD + s_d + D] * w_ref[i, t]
                    acc = prod if acc is None else acc + prod
            return acc

        # kw = 0 / 2 partials get ONE lane roll each (the kw shift, deferred);
        # kw = 1 accumulates straight into the branch accumulator (no roll).
        bacc = pltpu.roll(taps(0, None), shift=(dil * C) % WC, axis=2)
        bacc = bacc + pltpu.roll(taps(2, None), shift=(-dil * C) % WC, axis=2)
        bacc = taps(1, bacc)

        # folded BatchNorm3d + ReLU
        y = jnp.maximum(bacc * bns_ref[i] + bnb_ref[i], 0.0)
        pooled = pooled + jnp.sum(y, axis=0)       # on-the-fly global-pool partial
        if i == 0:
            y0_ref[...] = y
        else:
            y1 = y

    # --- attention: pool -> fc1 -> BN -> ReLU -> fc2 diff -> sigmoid -----------
    s_vec = jnp.sum(pooled, axis=0, keepdims=True)                      # (1, W*C)
    z = jnp.dot(s_vec, w1_ref[...], preferred_element_type=jnp.float32)  # (1, d)
    z = jnp.maximum(z * bn1s_ref[...] + bn1b_ref[...], 0.0)
    logit = jnp.dot(z, w2d_ref[...], preferred_element_type=jnp.float32)  # (1, W*C)
    att0 = 1.0 / (1.0 + jnp.exp(-logit))        # softmax over 2 == sigmoid(l0 - l1)

    # V = att0*y0 + (1-att0)*y1 = y1 + att0*(y0 - y1)
    o_ref[0] = y1 + (y0_ref[...] - y1) * att0


# ----------------------------------------------------------------------------- packing
def pack_params(params, D, H, W):
    """One-time (hoisted) packing of SKNet parameters into the kernel layout."""
    conv_w = params["conv_w"]
    n_branch, C = conv_w.shape[0], conv_w.shape[1]
    if n_branch != M:
        raise NotImplementedError("kernel is specialised for M == 2 branches")
    if C != GROUPS:
        raise NotImplementedError("depthwise packing assumes in_channels == groups")
    d = params["fc1_w"].shape[0]
    WC = W * C

    def fold(gamma, beta, mean, var):
        sc = gamma / jnp.sqrt(var + BN_EPS)
        return sc, beta - mean * sc

    # depthwise taps (M, C, 1, 3, 3, 3) -> (M, 27, C); zero the taps that would
    # read across the W boundary (conv zero padding), then replicate over H, W.
    wt = jnp.transpose(conv_w[:, :, 0], (0, 2, 3, 4, 1)).reshape(M, 27, C)
    w_idx = jnp.arange(W)
    rows = []
    for i in range(M):
        dil = 1 + i
        for kd in range(3):
            for kh in range(3):
                for kw in range(3):
                    s_w = dil * (kw - 1)
                    rows.append(((w_idx - s_w >= 0) & (w_idx - s_w < W))
                                .astype(jnp.float32))
    wmask = jnp.stack(rows).reshape(M, 27, W)                       # (M, 27, W)
    w_vec = (wt[:, :, None, :] * wmask[..., None]).reshape(M, 27, 1, WC)
    w_vec = jnp.asarray(jnp.broadcast_to(w_vec, (M, 27, H, WC)), jnp.float32)

    bns, bnb = fold(params["bn_gamma"], params["bn_beta"],
                    params["bn_mean"], params["bn_var"])            # (M, C)
    bn1s, bn1b = fold(params["bn1_gamma"], params["bn1_beta"],
                      params["bn1_mean"], params["bn1_var"])        # (d,)

    w2diff = (params["fc2_w"][:C] - params["fc2_w"][C:2 * C]).T     # (d, C)

    return {
        "w": w_vec,
        "bns": jnp.tile(bns, (1, W)),                               # (M, W*C)
        "bnb": jnp.tile(bnb, (1, W)),
        "w1": jnp.tile(params["fc1_w"].T, (W, 1)),                  # (W*C, d)
        "bn1s": (bn1s / float(D * H * W)).reshape(1, d),            # pool 1/N folded
        "bn1b": bn1b.reshape(1, d),
        "w2d": jnp.tile(w2diff, (1, W)),                            # (d, W*C)
    }


# ----------------------------------------------------------------------------- wrapper
@jax.jit
def sknet_forward(x_ncdhw, packed):
    B, C, D, H, W = x_ncdhw.shape
    WC = W * C

    # NCDHW -> NDHWC, fold W into lanes (lane-dense: W*C = 256).  No host padding.
    x = jnp.transpose(x_ncdhw, (0, 2, 3, 4, 1)).astype(jnp.float32)
    x = x.reshape(B, D, H, WC)

    kernel = functools.partial(_sknet_kernel, C=C)

    def const_spec(shape):
        n = len(shape)

        def imap(b):
            return (0,) * n

        return pl.BlockSpec(shape, imap)

    out = pl.pallas_call(
        kernel,
        out_shape=jax.ShapeDtypeStruct((B, D, H, WC), jnp.float32),
        grid=(B,),
        in_specs=[
            pl.BlockSpec((1, D, H, WC), lambda b: (b, 0, 0, 0)),
            const_spec(packed["w"].shape),
            const_spec(packed["bns"].shape),
            const_spec(packed["bnb"].shape),
            const_spec(packed["w1"].shape),
            const_spec(packed["bn1s"].shape),
            const_spec(packed["bn1b"].shape),
            const_spec(packed["w2d"].shape),
        ],
        out_specs=pl.BlockSpec((1, D, H, WC), lambda b: (b, 0, 0, 0)),
        scratch_shapes=[
            pltpu.VMEM((3, D + 2 * M, H, WC), jnp.float32),   # kh slabs, d-halo padded
            pltpu.VMEM((D, H, WC), jnp.float32),              # branch-0 output
        ],
        compiler_params=pltpu.CompilerParams(
            dimension_semantics=("parallel",),
            vmem_limit_bytes=32 * 1024 * 1024),
    )(x, packed["w"], packed["bns"], packed["bnb"], packed["w1"],
      packed["bn1s"], packed["bn1b"], packed["w2d"])

    out = out.reshape(B, D, H, W, C)
    return jnp.transpose(out, (0, 4, 1, 2, 3))        # back to NCDHW


# ----------------------------------------------------------------------------- pure-JAX reference
def sknet_reference(x, params):
    B, C = x.shape[0], x.shape[1]

    def fold(g, b, m, v):
        sc = g / jnp.sqrt(v + BN_EPS)
        return sc, b - m * sc

    bns, bnb = fold(params["bn_gamma"], params["bn_beta"],
                    params["bn_mean"], params["bn_var"])
    bn1s, bn1b = fold(params["bn1_gamma"], params["bn1_beta"],
                      params["bn1_mean"], params["bn1_var"])

    outs = []
    for i in range(M):
        p = 1 + i
        y = lax.conv_general_dilated(
            x, params["conv_w"][i], window_strides=(1, 1, 1),
            padding=[(p, p)] * 3, rhs_dilation=(p, p, p),
            dimension_numbers=("NCDHW", "OIDHW", "NCDHW"),
            feature_group_count=GROUPS, precision=lax.Precision.HIGHEST)
        y = y * bns[i][None, :, None, None, None] + bnb[i][None, :, None, None, None]
        outs.append(jnp.maximum(y, 0.0))

    U = functools.reduce(lambda a, b: a + b, outs)
    s = jnp.mean(U, axis=(2, 3, 4))                                       # (B, C)
    z = jnp.dot(s, params["fc1_w"].T, precision=lax.Precision.HIGHEST)    # (B, d)
    z = jnp.maximum(z * bn1s[None] + bn1b[None], 0.0)
    a = jnp.dot(z, params["fc2_w"].T, precision=lax.Precision.HIGHEST)    # (B, M*C)
    a = jax.nn.softmax(a.reshape(B, M, C), axis=1)
    V = functools.reduce(
        lambda u, v: u + v,
        [outs[i] * a[:, i][:, :, None, None, None] for i in range(M)])
    return V


# ----------------------------------------------------------------------------- params
def init_params(key, out_c, d):
    ks = jax.random.split(key, 10)
    return {
        "conv_w": 0.2 * jax.random.normal(ks[0], (M, out_c, out_c // GROUPS, 3, 3, 3),
                                          jnp.float32),
        "fc1_w": 0.2 * jax.random.normal(ks[1], (d, out_c), jnp.float32),
        "fc2_w": 0.2 * jax.random.normal(ks[2], (out_c * M, d), jnp.float32),
        "bn_gamma": 1.0 + 0.1 * jax.random.normal(ks[3], (M, out_c), jnp.float32),
        "bn_beta": 0.1 * jax.random.normal(ks[4], (M, out_c), jnp.float32),
        "bn_mean": 0.05 * jax.random.normal(ks[5], (M, out_c), jnp.float32),
        "bn_var": jnp.abs(1.0 + 0.1 * jax.random.normal(ks[6], (M, out_c), jnp.float32)),
        "bn1_gamma": 1.0 + 0.1 * jax.random.normal(ks[7], (d,), jnp.float32),
        "bn1_beta": 0.1 * jax.random.normal(ks[8], (d,), jnp.float32),
        "bn1_mean": jnp.zeros((d,), jnp.float32),
        "bn1_var": jnp.ones((d,), jnp.float32),
    }


if __name__ == "__main__":
    key = jax.random.PRNGKey(0)
    # groups=32 forces channels to be a multiple of 32; keep spatial small.
    B, C, D, H, W = 2, 32, 8, 8, 8
    d = max(C // 16, 32)                       # d = max(in_channels // r, L)

    kx, kp = jax.random.split(key)
    x = jax.random.normal(kx, (B, C, D, H, W), jnp.float32)
    params = init_params(kp, C, d)

    packed = pack_params(params, D, H, W)      # one-time packing, hoisted off the call path
    out = jax.block_until_ready(sknet_forward(x, packed))
    ref = jax.block_until_ready(sknet_reference(x, params))

    assert out.shape == (B, C, D, H, W), out.shape
    rel_err = jnp.max(jnp.abs(out - ref)) / (jnp.max(jnp.abs(ref)) + 1e-6)
    assert rel_err < 5e-3, f"relative error too large: {rel_err}"
    print("KERNEL_OK")
</pallas_src>

<mosaic_0001>
module attributes {stable_mosaic.version = 11 : i64} {
  func.func @_sknet_kernel(%arg0: i32, %arg1: memref<1x8x8x256xf32, #tpu.memory_space<vmem>>, %arg2: memref<2x27x8x256xf32, #tpu.memory_space<vmem>>, %arg3: memref<2x256xf32, #tpu.memory_space<vmem>>, %arg4: memref<2x256xf32, #tpu.memory_space<vmem>>, %arg5: memref<256x32xf32, #tpu.memory_space<vmem>>, %arg6: memref<1x32xf32, #tpu.memory_space<vmem>>, %arg7: memref<1x32xf32, #tpu.memory_space<vmem>>, %arg8: memref<32x256xf32, #tpu.memory_space<vmem>>, %arg9: memref<1x8x8x256xf32, #tpu.memory_space<vmem>>, %arg10: memref<3x12x8x256xf32, #tpu.memory_space<vmem>>, %arg11: memref<8x8x256xf32, #tpu.memory_space<vmem>>) attributes {dimension_semantics = [#tpu.dimension_semantics<parallel>], iteration_bounds = array<i64: 2>, scalar_prefetch = 0 : i64, scratch_operands = 2 : i64, tpu.core_type = #tpu.core_type<tc>, window_params = [{transform_indices = @transform_0, window_bounds = array<i64: 1, 8, 8, 256>}, {pipeline_mode = #tpu.pipeline_mode<synchronous>, transform_indices = @transform_1, window_bounds = array<i64: 2, 27, 8, 256>}, {pipeline_mode = #tpu.pipeline_mode<synchronous>, transform_indices = @transform_2, window_bounds = array<i64: 2, 256>}, {pipeline_mode = #tpu.pipeline_mode<synchronous>, transform_indices = @transform_3, window_bounds = array<i64: 2, 256>}, {pipeline_mode = #tpu.pipeline_mode<synchronous>, transform_indices = @transform_4, window_bounds = array<i64: 256, 32>}, {pipeline_mode = #tpu.pipeline_mode<synchronous>, transform_indices = @transform_5, window_bounds = array<i64: 1, 32>}, {pipeline_mode = #tpu.pipeline_mode<synchronous>, transform_indices = @transform_6, window_bounds = array<i64: 1, 32>}, {pipeline_mode = #tpu.pipeline_mode<synchronous>, transform_indices = @transform_7, window_bounds = array<i64: 32, 256>}, {transform_indices = @transform_8, window_bounds = array<i64: 1, 8, 8, 256>}]} {
    %cst = arith.constant 0.000000e+00 : f32
    %0 = vector.broadcast %cst : f32 to vector<2x8x256xf32>
    %c0 = arith.constant 0 : index
    %c0_0 = arith.constant 0 : index
    %c0_1 = arith.constant 0 : index
    %c0_2 = arith.constant 0 : index
    %1 = vector.load %arg10[%c0, %c0_0, %c0_1, %c0_2] : memref<3x12x8x256xf32, #tpu.memory_space<vmem>>, vector<1x2x8x256xf32>
    %2 = vector.shape_cast %1 : vector<1x2x8x256xf32> to vector<2x8x256xf32>
    %3 = vector.shape_cast %0 : vector<2x8x256xf32> to vector<1x2x8x256xf32>
    tpu.vector_store %arg10[%c0, %c0_0, %c0_1, %c0_2], %3 {strides = array<i32>} : memref<3x12x8x256xf32, #tpu.memory_space<vmem>>, vector<1x2x8x256xf32>,
    %c0_3 = arith.constant 0 : index
    %c10 = arith.constant 10 : index
    %c0_4 = arith.constant 0 : index
    %c0_5 = arith.constant 0 : index
    %4 = vector.load %arg10[%c0_3, %c10, %c0_4, %c0_5] : memref<3x12x8x256xf32, #tpu.memory_space<vmem>>, vector<1x2x8x256xf32>
    %5 = vector.shape_cast %4 : vector<1x2x8x256xf32> to vector<2x8x256xf32>
    %6 = vector.shape_cast %0 : vector<2x8x256xf32> to vector<1x2x8x256xf32>
    tpu.vector_store %arg10[%c0_3, %c10, %c0_4, %c0_5], %6 {strides = array<i32>} : memref<3x12x8x256xf32, #tpu.memory_space<vmem>>, vector<1x2x8x256xf32>,
    %c1 = arith.constant 1 : index
    %c0_6 = arith.constant 0 : index
    %c0_7 = arith.constant 0 : index
    %c0_8 = arith.constant 0 : index
    %7 = vector.load %arg10[%c1, %c0_6, %c0_7, %c0_8] : memref<3x12x8x256xf32, #tpu.memory_space<vmem>>, vector<1x2x8x256xf32>
    %8 = vector.shape_cast %7 : vector<1x2x8x256xf32> to vector<2x8x256xf32>
    %9 = vector.shape_cast %0 : vector<2x8x256xf32> to vector<1x2x8x256xf32>
    tpu.vector_store %arg10[%c1, %c0_6, %c0_7, %c0_8], %9 {strides = array<i32>} : memref<3x12x8x256xf32, #tpu.memory_space<vmem>>, vector<1x2x8x256xf32>,
    %c1_9 = arith.constant 1 : index
    %c10_10 = arith.constant 10 : index
    %c0_11 = arith.constant 0 : index
    %c0_12 = arith.constant 0 : index
    %10 = vector.load %arg10[%c1_9, %c10_10, %c0_11, %c0_12] : memref<3x12x8x256xf32, #tpu.memory_space<vmem>>, vector<1x2x8x256xf32>
    %11 = vector.shape_cast %10 : vector<1x2x8x256xf32> to vector<2x8x256xf32>
    %12 = vector.shape_cast %0 : vector<2x8x256xf32> to vector<1x2x8x256xf32>
    tpu.vector_store %arg10[%c1_9, %c10_10, %c0_11, %c0_12], %12 {strides = array<i32>} : memref<3x12x8x256xf32, #tpu.memory_space<vmem>>, vector<1x2x8x256xf32>,
    %c2 = arith.constant 2 : index
    %c0_13 = arith.constant 0 : index
    %c0_14 = arith.constant 0 : index
    %c0_15 = arith.constant 0 : index
    %13 = vector.load %arg10[%c2, %c0_13, %c0_14, %c0_15] : memref<3x12x8x256xf32, #tpu.memory_space<vmem>>, vector<1x2x8x256xf32>
    %14 = vector.shape_cast %13 : vector<1x2x8x256xf32> to vector<2x8x256xf32>
    %15 = vector.shape_cast %0 : vector<2x8x256xf32> to vector<1x2x8x256xf32>
    tpu.vector_store %arg10[%c2, %c0_13, %c0_14, %c0_15], %15 {strides = array<i32>} : memref<3x12x8x256xf32, #tpu.memory_space<vmem>>, vector<1x2x8x256xf32>,
    %c2_16 = arith.constant 2 : index
    %c10_17 = arith.constant 10 : index
    %c0_18 = arith.constant 0 : index
    %c0_19 = arith.constant 0 : index
    %16 = vector.load %arg10[%c2_16, %c10_17, %c0_18, %c0_19] : memref<3x12x8x256xf32, #tpu.memory_space<vmem>>, vector<1x2x8x256xf32>
    %17 = vector.shape_cast %16 : vector<1x2x8x256xf32> to vector<2x8x256xf32>
    %18 = vector.shape_cast %0 : vector<2x8x256xf32> to vector<1x2x8x256xf32>
    tpu.vector_store %arg10[%c2_16, %c10_17, %c0_18, %c0_19], %18 {strides = array<i32>} : memref<3x12x8x256xf32, #tpu.memory_space<vmem>>, vector<1x2x8x256xf32>,
    %c0_20 = arith.constant 0 : index
    %c0_21 = arith.constant 0 : index
    %c0_22 = arith.constant 0 : index
    %c0_23 = arith.constant 0 : index
    %19 = vector.load %arg1[%c0_20, %c0_21, %c0_22, %c0_23] : memref<1x8x8x256xf32, #tpu.memory_space<vmem>>, vector<1x8x8x256xf32>
    %20 = vector.shape_cast %19 : vector<1x8x8x256xf32> to vector<8x8x256xf32>
    %c1_24 = arith.constant 1 : index
    %c2_25 = arith.constant 2 : index
    %c0_26 = arith.constant 0 : index
    %c0_27 = arith.constant 0 : index
    %21 = vector.load %arg10[%c1_24, %c2_25, %c0_26, %c0_27] : memref<3x12x8x256xf32, #tpu.memory_space<vmem>>, vector<1x8x8x256xf32>
    %22 = vector.shape_cast %21 : vector<1x8x8x256xf32> to vector<8x8x256xf32>
    %23 = vector.shape_cast %20 : vector<8x8x256xf32> to vector<1x8x8x256xf32>
    tpu.vector_store %arg10[%c1_24, %c2_25, %c0_26, %c0_27], %23 {strides = array<i32>} : memref<3x12x8x256xf32, #tpu.memory_space<vmem>>, vector<1x8x8x256xf32>,
    %cst_28 = arith.constant 0.000000e+00 : f32
    %24 = vector.broadcast %cst_28 : f32 to vector<8x256xf32>
    %c0_29 = arith.constant 0 : index
    %c0_30 = arith.constant 0 : index
    %c0_31 = arith.constant 0 : index
    %c0_32 = arith.constant 0 : index
    %25 = vector.load %arg1[%c0_29, %c0_30, %c0_31, %c0_32] : memref<1x8x8x256xf32, #tpu.memory_space<vmem>>, vector<1x8x7x256xf32>
    %26 = vector.shape_cast %25 : vector<1x8x7x256xf32> to vector<8x7x256xf32>
    %c0_33 = arith.constant 0 : index
    %c2_34 = arith.constant 2 : index
    %c1_35 = arith.constant 1 : index
    %c0_36 = arith.constant 0 : index
    %27 = vector.load %arg10[%c0_33, %c2_34, %c1_35, %c0_36] : memref<3x12x8x256xf32, #tpu.memory_space<vmem>>, vector<1x8x7x256xf32>
    %28 = vector.shape_cast %27 : vector<1x8x7x256xf32> to vector<8x7x256xf32>
    %29 = vector.shape_cast %26 : vector<8x7x256xf32> to vector<1x8x7x256xf32>
    tpu.vector_store %arg10[%c0_33, %c2_34, %c1_35, %c0_36], %29 {strides = array<i32>} : memref<3x12x8x256xf32, #tpu.memory_space<vmem>>, vector<1x8x7x256xf32>,
    %cst_37 = arith.constant 0.000000e+00 : f32
    %30 = vector.broadcast %cst_37 : f32 to vector<8x1x256xf32>
    %c0_38 = arith.constant 0 : index
    %c2_39 = arith.constant 2 : index
    %c0_40 = arith.constant 0 : index
    %c0_41 = arith.constant 0 : index
    %31 = vector.load %arg10[%c0_38, %c2_39, %c0_40, %c0_41] : memref<3x12x8x256xf32, #tpu.memory_space<vmem>>, vector<1x8x1x256xf32>
    %32 = vector.shape_cast %31 : vector<1x8x1x256xf32> to vector<8x1x256xf32>
    %33 = vector.shape_cast %30 : vector<8x1x256xf32> to vector<1x8x1x256xf32>
    tpu.vector_store %arg10[%c0_38, %c2_39, %c0_40, %c0_41], %33 {strides = array<i32>} : memref<3x12x8x256xf32, #tpu.memory_space<vmem>>, vector<1x8x1x256xf32>,
    %c0_42 = arith.constant 0 : index
    %c0_43 = arith.constant 0 : index
    %c1_44 = arith.constant 1 : index
    %c0_45 = arith.constant 0 : index
    %34 = vector.load %arg1[%c0_42, %c0_43, %c1_44, %c0_45] : memref<1x8x8x256xf32, #tpu.memory_space<vmem>>, vector<1x8x7x256xf32>
    %35 = vector.shape_cast %34 : vector<1x8x7x256xf32> to vector<8x7x256xf32>
    %c2_46 = arith.constant 2 : index
    %c2_47 = arith.constant 2 : index
    %c0_48 = arith.constant 0 : index
    %c0_49 = arith.constant 0 : index
    %36 = vector.load %arg10[%c2_46, %c2_47, %c0_48, %c0_49] : memref<3x12x8x256xf32, #tpu.memory_space<vmem>>, vector<1x8x7x256xf32>
    %37 = vector.shape_cast %36 : vector<1x8x7x256xf32> to vector<8x7x256xf32>
    %38 = vector.shape_cast %35 : vector<8x7x256xf32> to vector<1x8x7x256xf32>
    tpu.vector_store %arg10[%c2_46, %c2_47, %c0_48, %c0_49], %38 {strides = array<i32>} : memref<3x12x8x256xf32, #tpu.memory_space<vmem>>, vector<1x8x7x256xf32>,
    %cst_50 = arith.constant 0.000000e+00 : f32
    %39 = vector.broadcast %cst_50 : f32 to vector<8x1x256xf32>
    %c2_51 = arith.constant 2 : index
    %c2_52 = arith.constant 2 : index
    %c7 = arith.constant 7 : index
    %c0_53 = arith.constant 0 : index
    %40 = vector.load %arg10[%c2_51, %c2_52, %c7, %c0_53] : memref<3x12x8x256xf32, #tpu.memory_space<vmem>>, vector<1x8x1x256xf32>
    %41 = vector.shape_cast %40 : vector<1x8x1x256xf32> to vector<8x1x256xf32>
    %42 = vector.shape_cast %39 : vector<8x1x256xf32> to vector<1x8x1x256xf32>
    tpu.vector_store %arg10[%c2_51, %c2_52, %c7, %c0_53], %42 {strides = array<i32>} : memref<3x12x8x256xf32, #tpu.memory_space<vmem>>, vector<1x8x1x256xf32>,
    %c0_54 = arith.constant 0 : index
    %c1_55 = arith.constant 1 : index
    %c0_56 = arith.constant 0 : index
    %c0_57 = arith.constant 0 : index
    %43 = vector.load %arg10[%c0_54, %c1_55, %c0_56, %c0_57] : memref<3x12x8x256xf32, #tpu.memory_space<vmem>>, vector<1x8x8x256xf32>
    %44 = vector.shape_cast %43 : vector<1x8x8x256xf32> to vector<8x8x256xf32>
    %c0_58 = arith.constant 0 : index
    %c0_59 = arith.constant 0 : index
    %c0_60 = arith.constant 0 : index
    %c0_61 = arith.constant 0 : index
    %45 = vector.load %arg2[%c0_58, %c0_59, %c0_60, %c0_61] : memref<2x27x8x256xf32, #tpu.memory_space<vmem>>, vector<1x1x8x256xf32>
    %46 = vector.shape_cast %45 : vector<1x1x8x256xf32> to vector<8x256xf32>
    %47 = vector.shape_cast %46 : vector<8x256xf32> to vector<1x8x256xf32>
    %48 = vector.broadcast %47 : vector<1x8x256xf32> to vector<8x8x256xf32>
    %49 = arith.mulf %44, %48 : vector<8x8x256xf32>
    %c0_62 = arith.constant 0 : index
    %c2_63 = arith.constant 2 : index
    %c0_64 = arith.constant 0 : index
    %c0_65 = arith.constant 0 : index
    %50 = vector.load %arg10[%c0_62, %c2_63, %c0_64, %c0_65] : memref<3x12x8x256xf32, #tpu.memory_space<vmem>>, vector<1x8x8x256xf32>
    %51 = vector.shape_cast %50 : vector<1x8x8x256xf32> to vector<8x8x256xf32>
    %c0_66 = arith.constant 0 : index
    %c9 = arith.constant 9 : index
    %c0_67 = arith.constant 0 : index
    %c0_68 = arith.constant 0 : index
    %52 = vector.load %arg2[%c0_66, %c9, %c0_67, %c0_68] : memref<2x27x8x256xf32, #tpu.memory_space<vmem>>, vector<1x1x8x256xf32>
    %53 = vector.shape_cast %52 : vector<1x1x8x256xf32> to vector<8x256xf32>
    %54 = vector.shape_cast %53 : vector<8x256xf32> to vector<1x8x256xf32>
    %55 = vector.broadcast %54 : vector<1x8x256xf32> to vector<8x8x256xf32>
    %56 = arith.mulf %51, %55 : vector<8x8x256xf32>
    %57 = arith.addf %49, %56 : vector<8x8x256xf32>
    %c0_69 = arith.constant 0 : index
    %c3 = arith.constant 3 : index
    %c0_70 = arith.constant 0 : index
    %c0_71 = arith.constant 0 : index
    %58 = vector.load %arg10[%c0_69, %c3, %c0_70, %c0_71] : memref<3x12x8x256xf32, #tpu.memory_space<vmem>>, vector<1x8x8x256xf32>
    %59 = vector.shape_cast %58 : vector<1x8x8x256xf32> to vector<8x8x256xf32>
    %c0_72 = arith.constant 0 : index
    %c18 = arith.constant 18 : index
    %c0_73 = arith.constant 0 : index
    %c0_74 = arith.constant 0 : index
    %60 = vector.load %arg2[%c0_72, %c18, %c0_73, %c0_74] : memref<2x27x8x256xf32, #tpu.memory_space<vmem>>, vector<1x1x8x256xf32>
    %61 = vector.shape_cast %60 : vector<1x1x8x256xf32> to vector<8x256xf32>
    %62 = vector.shape_cast %61 : vector<8x256xf32> to vector<1x8x256xf32>
    %63 = vector.broadcast %62 : vector<1x8x256xf32> to vector<8x8x256xf32>
    %64 = arith.mulf %59, %63 : vector<8x8x256xf32>
    %65 = arith.addf %57, %64 : vector<8x8x256xf32>
    %c1_75 = arith.constant 1 : index
    %c1_76 = arith.constant 1 : index
    %c0_77 = arith.constant 0 : index
    %c0_78 = arith.constant 0 : index
    %66 = vector.load %arg10[%c1_75, %c1_76, %c0_77, %c0_78] : memref<3x12x8x256xf32, #tpu.memory_space<vmem>>, vector<1x8x8x256xf32>
    %67 = vector.shape_cast %66 : vector<1x8x8x256xf32> to vector<8x8x256xf32>
    %c0_79 = arith.constant 0 : index
    %c3_80 = arith.constant 3 : index
    %c0_81 = arith.constant 0 : index
    %c0_82 = arith.constant 0 : index
    %68 = vector.load %arg2[%c0_79, %c3_80, %c0_81, %c0_82] : memref<2x27x8x256xf32, #tpu.memory_space<vmem>>, vector<1x1x8x256xf32>
    %69 = vector.shape_cast %68 : vector<1x1x8x256xf32> to vector<8x256xf32>
    %70 = vector.shape_cast %69 : vector<8x256xf32> to vector<1x8x256xf32>
    %71 = vector.broadcast %70 : vector<1x8x256xf32> to vector<8x8x256xf32>
    %72 = arith.mulf %67, %71 : vector<8x8x256xf32>
    %73 = arith.addf %65, %72 : vector<8x8x256xf32>
    %c1_83 = arith.constant 1 : index
    %c2_84 = arith.constant 2 : index
    %c0_85 = arith.constant 0 : index
    %c0_86 = arith.constant 0 : index
    %74 = vector.load %arg10[%c1_83, %c2_84, %c0_85, %c0_86] : memref<3x12x8x256xf32, #tpu.memory_space<vmem>>, vector<1x8x8x256xf32>
    %75 = vector.shape_cast %74 : vector<1x8x8x256xf32> to vector<8x8x256xf32>
    %c0_87 = arith.constant 0 : index
    %c12 = arith.constant 12 : index
    %c0_88 = arith.constant 0 : index
    %c0_89 = arith.constant 0 : index
    %76 = vector.load %arg2[%c0_87, %c12, %c0_88, %c0_89] : memref<2x27x8x256xf32, #tpu.memory_space<vmem>>, vector<1x1x8x256xf32>
    %77 = vector.shape_cast %76 : vector<1x1x8x256xf32> to vector<8x256xf32>
    %78 = vector.shape_cast %77 : vector<8x256xf32> to vector<1x8x256xf32>
    %79 = vector.broadcast %78 : vector<1x8x256xf32> to vector<8x8x256xf32>
    %80 = arith.mulf %75, %79 : vector<8x8x256xf32>
    %81 = arith.addf %73, %80 : vector<8x8x256xf32>
    %c1_90 = arith.constant 1 : index
    %c3_91 = arith.constant 3 : index
    %c0_92 = arith.constant 0 : index
    %c0_93 = arith.constant 0 : index
    %82 = vector.load %arg10[%c1_90, %c3_91, %c0_92, %c0_93] : memref<3x12x8x256xf32, #tpu.memory_space<vmem>>, vector<1x8x8x256xf32>
    %83 = vector.shape_cast %82 : vector<1x8x8x256xf32> to vector<8x8x256xf32>
    %c0_94 = arith.constant 0 : index
    %c21 = arith.constant 21 : index
    %c0_95 = arith.constant 0 : index
    %c0_96 = arith.constant 0 : index
    %84 = vector.load %arg2[%c0_94, %c21, %c0_95, %c0_96] : memref<2x27x8x256xf32, #tpu.memory_space<vmem>>, vector<1x1x8x256xf32>
    %85 = vector.shape_cast %84 : vector<1x1x8x256xf32> to vector<8x256xf32>
    %86 = vector.shape_cast %85 : vector<8x256xf32> to vector<1x8x256xf32>
    %87 = vector.broadcast %86 : vector<1x8x256xf32> to vector<8x8x256xf32>
    %88 = arith.mulf %83, %87 : vector<8x8x256xf32>
    %89 = arith.addf %81, %88 : vector<8x8x256xf32>
    %c2_97 = arith.constant 2 : index
    %c1_98 = arith.constant 1 : index
    %c0_99 = arith.constant 0 : index
    %c0_100 = arith.constant 0 : index
    %90 = vector.load %arg10[%c2_97, %c1_98, %c0_99, %c0_100] : memref<3x12x8x256xf32, #tpu.memory_space<vmem>>, vector<1x8x8x256xf32>
    %91 = vector.shape_cast %90 : vector<1x8x8x256xf32> to vector<8x8x256xf32>
    %c0_101 = arith.constant 0 : index
    %c6 = arith.constant 6 : index
    %c0_102 = arith.constant 0 : index
    %c0_103 = arith.constant 0 : index
    %92 = vector.load %arg2[%c0_101, %c6, %c0_102, %c0_103] : memref<2x27x8x256xf32, #tpu.memory_space<vmem>>, vector<1x1x8x256xf32>
    %93 = vector.shape_cast %92 : vector<1x1x8x256xf32> to vector<8x256xf32>
    %94 = vector.shape_cast %93 : vector<8x256xf32> to vector<1x8x256xf32>
    %95 = vector.broadcast %94 : vector<1x8x256xf32> to vector<8x8x256xf32>
    %96 = arith.mulf %91, %95 : vector<8x8x256xf32>
    %97 = arith.addf %89, %96 : vector<8x8x256xf32>
    %c2_104 = arith.constant 2 : index
    %c2_105 = arith.constant 2 : index
    %c0_106 = arith.constant 0 : index
    %c0_107 = arith.constant 0 : index
    %98 = vector.load %arg10[%c2_104, %c2_105, %c0_106, %c0_107] : memref<3x12x8x256xf32, #tpu.memory_space<vmem>>, vector<1x8x8x256xf32>
    %99 = vector.shape_cast %98 : vector<1x8x8x256xf32> to vector<8x8x256xf32>
    %c0_108 = arith.constant 0 : index
    %c15 = arith.constant 15 : index
    %c0_109 = arith.constant 0 : index
    %c0_110 = arith.constant 0 : index
    %100 = vector.load %arg2[%c0_108, %c15, %c0_109, %c0_110] : memref<2x27x8x256xf32, #tpu.memory_space<vmem>>, vector<1x1x8x256xf32>
    %101 = vector.shape_cast %100 : vector<1x1x8x256xf32> to vector<8x256xf32>
    %102 = vector.shape_cast %101 : vector<8x256xf32> to vector<1x8x256xf32>
    %103 = vector.broadcast %102 : vector<1x8x256xf32> to vector<8x8x256xf32>
    %104 = arith.mulf %99, %103 : vector<8x8x256xf32>
    %105 = arith.addf %97, %104 : vector<8x8x256xf32>
    %c2_111 = arith.constant 2 : index
    %c3_112 = arith.constant 3 : index
    %c0_113 = arith.constant 0 : index
    %c0_114 = arith.constant 0 : index
    %106 = vector.load %arg10[%c2_111, %c3_112, %c0_113, %c0_114] : memref<3x12x8x256xf32, #tpu.memory_space<vmem>>, vector<1x8x8x256xf32>
    %107 = vector.shape_cast %106 : vector<1x8x8x256xf32> to vector<8x8x256xf32>
    %c0_115 = arith.constant 0 : index
    %c24 = arith.constant 24 : index
    %c0_116 = arith.constant 0 : index
    %c0_117 = arith.constant 0 : index
    %108 = vector.load %arg2[%c0_115, %c24, %c0_116, %c0_117] : memref<2x27x8x256xf32, #tpu.memory_space<vmem>>, vector<1x1x8x256xf32>
    %109 = vector.shape_cast %108 : vector<1x1x8x256xf32> to vector<8x256xf32>
    %110 = vector.shape_cast %109 : vector<8x256xf32> to vector<1x8x256xf32>
    %111 = vector.broadcast %110 : vector<1x8x256xf32> to vector<8x8x256xf32>
    %112 = arith.mulf %107, %111 : vector<8x8x256xf32>
    %113 = arith.addf %105, %112 : vector<8x8x256xf32>
    %c32_i32 = arith.constant 32 : i32
    %114 = tpu.dynamic_rotate %113 by %c32_i32 dim 2 : vector<8x8x256xf32>, i32 -> vector<8x8x256xf32>
    %c0_118 = arith.constant 0 : index
    %c1_119 = arith.constant 1 : index
    %c0_120 = arith.constant 0 : index
    %c0_121 = arith.constant 0 : index
    %115 = vector.load %arg10[%c0_118, %c1_119, %c0_120, %c0_121] : memref<3x12x8x256xf32, #tpu.memory_space<vmem>>, vector<1x8x8x256xf32>
    %116 = vector.shape_cast %115 : vector<1x8x8x256xf32> to vector<8x8x256xf32>
    %c0_122 = arith.constant 0 : index
    %c2_123 = arith.constant 2 : index
    %c0_124 = arith.constant 0 : index
    %c0_125 = arith.constant 0 : index
    %117 = vector.load %arg2[%c0_122, %c2_123, %c0_124, %c0_125] : memref<2x27x8x256xf32, #tpu.memory_space<vmem>>, vector<1x1x8x256xf32>
    %118 = vector.shape_cast %117 : vector<1x1x8x256xf32> to vector<8x256xf32>
    %119 = vector.shape_cast %118 : vector<8x256xf32> to vector<1x8x256xf32>
    %120 = vector.broadcast %119 : vector<1x8x256xf32> to vector<8x8x256xf32>
    %121 = arith.mulf %116, %120 : vector<8x8x256xf32>
    %c0_126 = arith.constant 0 : index
    %c2_127 = arith.constant 2 : index
    %c0_128 = arith.constant 0 : index
    %c0_129 = arith.constant 0 : index
    %122 = vector.load %arg10[%c0_126, %c2_127, %c0_128, %c0_129] : memref<3x12x8x256xf32, #tpu.memory_space<vmem>>, vector<1x8x8x256xf32>
    %123 = vector.shape_cast %122 : vector<1x8x8x256xf32> to vector<8x8x256xf32>
    %c0_130 = arith.constant 0 : index
    %c11 = arith.constant 11 : index
    %c0_131 = arith.constant 0 : index
    %c0_132 = arith.constant 0 : index
    %124 = vector.load %arg2[%c0_130, %c11, %c0_131, %c0_132] : memref<2x27x8x256xf32, #tpu.memory_space<vmem>>, vector<1x1x8x256xf32>
    %125 = vector.shape_cast %124 : vector<1x1x8x256xf32> to vector<8x256xf32>
    %126 = vector.shape_cast %125 : vector<8x256xf32> to vector<1x8x256xf32>
    %127 = vector.broadcast %126 : vector<1x8x256xf32> to vector<8x8x256xf32>
    %128 = arith.mulf %123, %127 : vector<8x8x256xf32>
    %129 = arith.addf %121, %128 : vector<8x8x256xf32>
    %c0_133 = arith.constant 0 : index
    %c3_134 = arith.constant 3 : index
    %c0_135 = arith.constant 0 : index
    %c0_136 = arith.constant 0 : index
    %130 = vector.load %arg10[%c0_133, %c3_134, %c0_135, %c0_136] : memref<3x12x8x256xf32, #tpu.memory_space<vmem>>, vector<1x8x8x256xf32>
    %131 = vector.shape_cast %130 : vector<1x8x8x256xf32> to vector<8x8x256xf32>
    %c0_137 = arith.constant 0 : index
    %c20 = arith.constant 20 : index
    %c0_138 = arith.constant 0 : index
    %c0_139 = arith.constant 0 : index
    %132 = vector.load %arg2[%c0_137, %c20, %c0_138, %c0_139] : memref<2x27x8x256xf32, #tpu.memory_space<vmem>>, vector<1x1x8x256xf32>
    %133 = vector.shape_cast %132 : vector<1x1x8x256xf32> to vector<8x256xf32>
    %134 = vector.shape_cast %133 : vector<8x256xf32> to vector<1x8x256xf32>
    %135 = vector.broadcast %134 : vector<1x8x256xf32> to vector<8x8x256xf32>
    %136 = arith.mulf %131, %135 : vector<8x8x256xf32>
    %137 = arith.addf %129, %136 : vector<8x8x256xf32>
    %c1_140 = arith.constant 1 : index
    %c1_141 = arith.constant 1 : index
    %c0_142 = arith.constant 0 : index
    %c0_143 = arith.constant 0 : index
    %138 = vector.load %arg10[%c1_140, %c1_141, %c0_142, %c0_143] : memref<3x12x8x256xf32, #tpu.memory_space<vmem>>, vector<1x8x8x256xf32>
    %139 = vector.shape_cast %138 : vector<1x8x8x256xf32> to vector<8x8x256xf32>
    %c0_144 = arith.constant 0 : index
    %c5 = arith.constant 5 : index
    %c0_145 = arith.constant 0 : index
    %c0_146 = arith.constant 0 : index
    %140 = vector.load %arg2[%c0_144, %c5, %c0_145, %c0_146] : memref<2x27x8x256xf32, #tpu.memory_space<vmem>>, vector<1x1x8x256xf32>
    %141 = vector.shape_cast %140 : vector<1x1x8x256xf32> to vector<8x256xf32>
    %142 = vector.shape_cast %141 : vector<8x256xf32> to vector<1x8x256xf32>
    %143 = vector.broadcast %142 : vector<1x8x256xf32> to vector<8x8x256xf32>
    %144 = arith.mulf %139, %143 : vector<8x8x256xf32>
    %145 = arith.addf %137, %144 : vector<8x8x256xf32>
    %c1_147 = arith.constant 1 : index
    %c2_148 = arith.constant 2 : index
    %c0_149 = arith.constant 0 : index
    %c0_150 = arith.constant 0 : index
    %146 = vector.load %arg10[%c1_147, %c2_148, %c0_149, %c0_150] : memref<3x12x8x256xf32, #tpu.memory_space<vmem>>, vector<1x8x8x256xf32>
    %147 = vector.shape_cast %146 : vector<1x8x8x256xf32> to vector<8x8x256xf32>
    %c0_151 = arith.constant 0 : index
    %c14 = arith.constant 14 : index
    %c0_152 = arith.constant 0 : index
    %c0_153 = arith.constant 0 : index
    %148 = vector.load %arg2[%c0_151, %c14, %c0_152, %c0_153] : memref<2x27x8x256xf32, #tpu.memory_space<vmem>>, vector<1x1x8x256xf32>
    %149 = vector.shape_cast %148 : vector<1x1x8x256xf32> to vector<8x256xf32>
    %150 = vector.shape_cast %149 : vector<8x256xf32> to vector<1x8x256xf32>
    %151 = vector.broadcast %150 : vector<1x8x256xf32> to vector<8x8x256xf32>
    %152 = arith.mulf %147, %151 : vector<8x8x256xf32>
    %153 = arith.addf %145, %152 : vector<8x8x256xf32>
    %c1_154 = arith.constant 1 : index
    %c3_155 = arith.constant 3 : index
    %c0_156 = arith.constant 0 : index
    %c0_157 = arith.constant 0 : index
    %154 = vector.load %arg10[%c1_154, %c3_155, %c0_156, %c0_157] : memref<3x12x8x256xf32, #tpu.memory_space<vmem>>, vector<1x8x8x256xf32>
    %155 = vector.shape_cast %154 : vector<1x8x8x256xf32> to vector<8x8x256xf32>
    %c0_158 = arith.constant 0 : index
    %c23 = arith.constant 23 : index
    %c0_159 = arith.constant 0 : index
    %c0_160 = arith.constant 0 : index
    %156 = vector.load %arg2[%c0_158, %c23, %c0_159, %c0_160] : memref<2x27x8x256xf32, #tpu.memory_space<vmem>>, vector<1x1x8x256xf32>
    %157 = vector.shape_cast %156 : vector<1x1x8x256xf32> to vector<8x256xf32>
    %158 = vector.shape_cast %157 : vector<8x256xf32> to vector<1x8x256xf32>
    %159 = vector.broadcast %158 : vector<1x8x256xf32> to vector<8x8x256xf32>
    %160 = arith.mulf %155, %159 : vector<8x8x256xf32>
    %161 = arith.addf %153, %160 : vector<8x8x256xf32>
    %c2_161 = arith.constant 2 : index
    %c1_162 = arith.constant 1 : index
    %c0_163 = arith.constant 0 : index
    %c0_164 = arith.constant 0 : index
    %162 = vector.load %arg10[%c2_161, %c1_162, %c0_163, %c0_164] : memref<3x12x8x256xf32, #tpu.memory_space<vmem>>, vector<1x8x8x256xf32>
    %163 = vector.shape_cast %162 : vector<1x8x8x256xf32> to vector<8x8x256xf32>
    %c0_165 = arith.constant 0 : index
    %c8 = arith.constant 8 : index
    %c0_166 = arith.constant 0 : index
    %c0_167 = arith.constant 0 : index
    %164 = vector.load %arg2[%c0_165, %c8, %c0_166, %c0_167] : memref<2x27x8x256xf32, #tpu.memory_space<vmem>>, vector<1x1x8x256xf32>
    %165 = vector.shape_cast %164 : vector<1x1x8x256xf32> to vector<8x256xf32>
    %166 = vector.shape_cast %165 : vector<8x256xf32> to vector<1x8x256xf32>
    %167 = vector.broadcast %166 : vector<1x8x256xf32> to vector<8x8x256xf32>
    %168 = arith.mulf %163, %167 : vector<8x8x256xf32>
    %169 = arith.addf %161, %168 : vector<8x8x256xf32>
    %c2_168 = arith.constant 2 : index
    %c2_169 = arith.constant 2 : index
    %c0_170 = arith.constant 0 : index
    %c0_171 = arith.constant 0 : index
    %170 = vector.load %arg10[%c2_168, %c2_169, %c0_170, %c0_171] : memref<3x12x8x256xf32, #tpu.memory_space<vmem>>, vector<1x8x8x256xf32>
    %171 = vector.shape_cast %170 : vector<1x8x8x256xf32> to vector<8x8x256xf32>
    %c0_172 = arith.constant 0 : index
    %c17 = arith.constant 17 : index
    %c0_173 = arith.constant 0 : index
    %c0_174 = arith.constant 0 : index
    %172 = vector.load %arg2[%c0_172, %c17, %c0_173, %c0_174] : memref<2x27x8x256xf32, #tpu.memory_space<vmem>>, vector<1x1x8x256xf32>
    %173 = vector.shape_cast %172 : vector<1x1x8x256xf32> to vector<8x256xf32>
    %174 = vector.shape_cast %173 : vector<8x256xf32> to vector<1x8x256xf32>
    %175 = vector.broadcast %174 : vector<1x8x256xf32> to vector<8x8x256xf32>
    %176 = arith.mulf %171, %175 : vector<8x8x256xf32>
    %177 = arith.addf %169, %176 : vector<8x8x256xf32>
    %c2_175 = arith.constant 2 : index
    %c3_176 = arith.constant 3 : index
    %c0_177 = arith.constant 0 : index
    %c0_178 = arith.constant 0 : index
    %178 = vector.load %arg10[%c2_175, %c3_176, %c0_177, %c0_178] : memref<3x12x8x256xf32, #tpu.memory_space<vmem>>, vector<1x8x8x256xf32>
    %179 = vector.shape_cast %178 : vector<1x8x8x256xf32> to vector<8x8x256xf32>
    %c0_179 = arith.constant 0 : index
    %c26 = arith.constant 26 : index
    %c0_180 = arith.constant 0 : index
    %c0_181 = arith.constant 0 : index
    %180 = vector.load %arg2[%c0_179, %c26, %c0_180, %c0_181] : memref<2x27x8x256xf32, #tpu.memory_space<vmem>>, vector<1x1x8x256xf32>
    %181 = vector.shape_cast %180 : vector<1x1x8x256xf32> to vector<8x256xf32>
    %182 = vector.shape_cast %181 : vector<8x256xf32> to vector<1x8x256xf32>
    %183 = vector.broadcast %182 : vector<1x8x256xf32> to vector<8x8x256xf32>
    %184 = arith.mulf %179, %183 : vector<8x8x256xf32>
    %185 = arith.addf %177, %184 : vector<8x8x256xf32>
    %c224_i32 = arith.constant 224 : i32
    %186 = tpu.dynamic_rotate %185 by %c224_i32 dim 2 : vector<8x8x256xf32>, i32 -> vector<8x8x256xf32>
    %187 = arith.addf %114, %186 : vector<8x8x256xf32>
    %c0_182 = arith.constant 0 : index
    %c1_183 = arith.constant 1 : index
    %c0_184 = arith.constant 0 : index
    %c0_185 = arith.constant 0 : index
    %188 = vector.load %arg10[%c0_182, %c1_183, %c0_184, %c0_185] : memref<3x12x8x256xf32, #tpu.memory_space<vmem>>, vector<1x8x8x256xf32>
    %189 = vector.shape_cast %188 : vector<1x8x8x256xf32> to vector<8x8x256xf32>
    %c0_186 = arith.constant 0 : index
    %c1_187 = arith.constant 1 : index
    %c0_188 = arith.constant 0 : index
    %c0_189 = arith.constant 0 : index
    %190 = vector.load %arg2[%c0_186, %c1_187, %c0_188, %c0_189] : memref<2x27x8x256xf32, #tpu.memory_space<vmem>>, vector<1x1x8x256xf32>
    %191 = vector.shape_cast %190 : vector<1x1x8x256xf32> to vector<8x256xf32>
    %192 = vector.shape_cast %191 : vector<8x256xf32> to vector<1x8x256xf32>
    %193 = vector.broadcast %192 : vector<1x8x256xf32> to vector<8x8x256xf32>
    %194 = arith.mulf %189, %193 : vector<8x8x256xf32>
    %195 = arith.addf %187, %194 : vector<8x8x256xf32>
    %c0_190 = arith.constant 0 : index
    %c2_191 = arith.constant 2 : index
    %c0_192 = arith.constant 0 : index
    %c0_193 = arith.constant 0 : index
    %196 = vector.load %arg10[%c0_190, %c2_191, %c0_192, %c0_193] : memref<3x12x8x256xf32, #tpu.memory_space<vmem>>, vector<1x8x8x256xf32>
    %197 = vector.shape_cast %196 : vector<1x8x8x256xf32> to vector<8x8x256xf32>
    %c0_194 = arith.constant 0 : index
    %c10_195 = arith.constant 10 : index
    %c0_196 = arith.constant 0 : index
    %c0_197 = arith.constant 0 : index
    %198 = vector.load %arg2[%c0_194, %c10_195, %c0_196, %c0_197] : memref<2x27x8x256xf32, #tpu.memory_space<vmem>>, vector<1x1x8x256xf32>
    %199 = vector.shape_cast %198 : vector<1x1x8x256xf32> to vector<8x256xf32>
    %200 = vector.shape_cast %199 : vector<8x256xf32> to vector<1x8x256xf32>
    %201 = vector.broadcast %200 : vector<1x8x256xf32> to vector<8x8x256xf32>
    %202 = arith.mulf %197, %201 : vector<8x8x256xf32>
    %203 = arith.addf %195, %202 : vector<8x8x256xf32>
    %c0_198 = arith.constant 0 : index
    %c3_199 = arith.constant 3 : index
    %c0_200 = arith.constant 0 : index
    %c0_201 = arith.constant 0 : index
    %204 = vector.load %arg10[%c0_198, %c3_199, %c0_200, %c0_201] : memref<3x12x8x256xf32, #tpu.memory_space<vmem>>, vector<1x8x8x256xf32>
    %205 = vector.shape_cast %204 : vector<1x8x8x256xf32> to vector<8x8x256xf32>
    %c0_202 = arith.constant 0 : index
    %c19 = arith.constant 19 : index
    %c0_203 = arith.constant 0 : index
    %c0_204 = arith.constant 0 : index
    %206 = vector.load %arg2[%c0_202, %c19, %c0_203, %c0_204] : memref<2x27x8x256xf32, #tpu.memory_space<vmem>>, vector<1x1x8x256xf32>
    %207 = vector.shape_cast %206 : vector<1x1x8x256xf32> to vector<8x256xf32>
    %208 = vector.shape_cast %207 : vector<8x256xf32> to vector<1x8x256xf32>
    %209 = vector.broadcast %208 : vector<1x8x256xf32> to vector<8x8x256xf32>
    %210 = arith.mulf %205, %209 : vector<8x8x256xf32>
    %211 = arith.addf %203, %210 : vector<8x8x256xf32>
    %c1_205 = arith.constant 1 : index
    %c1_206 = arith.constant 1 : index
    %c0_207 = arith.constant 0 : index
    %c0_208 = arith.constant 0 : index
    %212 = vector.load %arg10[%c1_205, %c1_206, %c0_207, %c0_208] : memref<3x12x8x256xf32, #tpu.memory_space<vmem>>, vector<1x8x8x256xf32>
    %213 = vector.shape_cast %212 : vector<1x8x8x256xf32> to vector<8x8x256xf32>
    %c0_209 = arith.constant 0 : index
    %c4 = arith.constant 4 : index
    %c0_210 = arith.constant 0 : index
    %c0_211 = arith.constant 0 : index
    %214 = vector.load %arg2[%c0_209, %c4, %c0_210, %c0_211] : memref<2x27x8x256xf32, #tpu.memory_space<vmem>>, vector<1x1x8x256xf32>
    %215 = vector.shape_cast %214 : vector<1x1x8x256xf32> to vector<8x256xf32>
    %216 = vector.shape_cast %215 : vector<8x256xf32> to vector<1x8x256xf32>
    %217 = vector.broadcast %216 : vector<1x8x256xf32> to vector<8x8x256xf32>
    %218 = arith.mulf %213, %217 : vector<8x8x256xf32>
    %219 = arith.addf %211, %218 : vector<8x8x256xf32>
    %c1_212 = arith.constant 1 : index
    %c2_213 = arith.constant 2 : index
    %c0_214 = arith.constant 0 : index
    %c0_215 = arith.constant 0 : index
    %220 = vector.load %arg10[%c1_212, %c2_213, %c0_214, %c0_215] : memref<3x12x8x256xf32, #tpu.memory_space<vmem>>, vector<1x8x8x256xf32>
    %221 = vector.shape_cast %220 : vector<1x8x8x256xf32> to vector<8x8x256xf32>
    %c0_216 = arith.constant 0 : index
    %c13 = arith.constant 13 : index
    %c0_217 = arith.constant 0 : index
    %c0_218 = arith.constant 0 : index
    %222 = vector.load %arg2[%c0_216, %c13, %c0_217, %c0_218] : memref<2x27x8x256xf32, #tpu.memory_space<vmem>>, vector<1x1x8x256xf32>
    %223 = vector.shape_cast %222 : vector<1x1x8x256xf32> to vector<8x256xf32>
    %224 = vector.shape_cast %223 : vector<8x256xf32> to vector<1x8x256xf32>
    %225 = vector.broadcast %224 : vector<1x8x256xf32> to vector<8x8x256xf32>
    %226 = arith.mulf %221, %225 : vector<8x8x256xf32>
    %227 = arith.addf %219, %226 : vector<8x8x256xf32>
    %c1_219 = arith.constant 1 : index
    %c3_220 = arith.constant 3 : index
    %c0_221 = arith.constant 0 : index
    %c0_222 = arith.constant 0 : index
    %228 = vector.load %arg10[%c1_219, %c3_220, %c0_221, %c0_222] : memref<3x12x8x256xf32, #tpu.memory_space<vmem>>, vector<1x8x8x256xf32>
    %229 = vector.shape_cast %228 : vector<1x8x8x256xf32> to vector<8x8x256xf32>
    %c0_223 = arith.constant 0 : index
    %c22 = arith.constant 22 : index
    %c0_224 = arith.constant 0 : index
    %c0_225 = arith.constant 0 : index
    %230 = vector.load %arg2[%c0_223, %c22, %c0_224, %c0_225] : memref<2x27x8x256xf32, #tpu.memory_space<vmem>>, vector<1x1x8x256xf32>
    %231 = vector.shape_cast %230 : vector<1x1x8x256xf32> to vector<8x256xf32>
    %232 = vector.shape_cast %231 : vector<8x256xf32> to vector<1x8x256xf32>
    %233 = vector.broadcast %232 : vector<1x8x256xf32> to vector<8x8x256xf32>
    %234 = arith.mulf %229, %233 : vector<8x8x256xf32>
    %235 = arith.addf %227, %234 : vector<8x8x256xf32>
    %c2_226 = arith.constant 2 : index
    %c1_227 = arith.constant 1 : index
    %c0_228 = arith.constant 0 : index
    %c0_229 = arith.constant 0 : index
    %236 = vector.load %arg10[%c2_226, %c1_227, %c0_228, %c0_229] : memref<3x12x8x256xf32, #tpu.memory_space<vmem>>, vector<1x8x8x256xf32>
    %237 = vector.shape_cast %236 : vector<1x8x8x256xf32> to vector<8x8x256xf32>
    %c0_230 = arith.constant 0 : index
    %c7_231 = arith.constant 7 : index
    %c0_232 = arith.constant 0 : index
    %c0_233 = arith.constant 0 : index
    %238 = vector.load %arg2[%c0_230, %c7_231, %c0_232, %c0_233] : memref<2x27x8x256xf32, #tpu.memory_space<vmem>>, vector<1x1x8x256xf32>
    %239 = vector.shape_cast %238 : vector<1x1x8x256xf32> to vector<8x256xf32>
    %240 = vector.shape_cast %239 : vector<8x256xf32> to vector<1x8x256xf32>
    %241 = vector.broadcast %240 : vector<1x8x256xf32> to vector<8x8x256xf32>
    %242 = arith.mulf %237, %241 : vector<8x8x256xf32>
    %243 = arith.addf %235, %242 : vector<8x8x256xf32>
    %c2_234 = arith.constant 2 : index
    %c2_235 = arith.constant 2 : index
    %c0_236 = arith.constant 0 : index
    %c0_237 = arith.constant 0 : index
    %244 = vector.load %arg10[%c2_234, %c2_235, %c0_236, %c0_237] : memref<3x12x8x256xf32, #tpu.memory_space<vmem>>, vector<1x8x8x256xf32>
    %245 = vector.shape_cast %244 : vector<1x8x8x256xf32> to vector<8x8x256xf32>
    %c0_238 = arith.constant 0 : index
    %c16 = arith.constant 16 : index
    %c0_239 = arith.constant 0 : index
    %c0_240 = arith.constant 0 : index
    %246 = vector.load %arg2[%c0_238, %c16, %c0_239, %c0_240] : memref<2x27x8x256xf32, #tpu.memory_space<vmem>>, vector<1x1x8x256xf32>
    %247 = vector.shape_cast %246 : vector<1x1x8x256xf32> to vector<8x256xf32>
    %248 = vector.shape_cast %247 : vector<8x256xf32> to vector<1x8x256xf32>
    %249 = vector.broadcast %248 : vector<1x8x256xf32> to vector<8x8x256xf32>
    %250 = arith.mulf %245, %249 : vector<8x8x256xf32>
    %251 = arith.addf %243, %250 : vector<8x8x256xf32>
    %c2_241 = arith.constant 2 : index
    %c3_242 = arith.constant 3 : index
    %c0_243 = arith.constant 0 : index
    %c0_244 = arith.constant 0 : index
    %252 = vector.load %arg10[%c2_241, %c3_242, %c0_243, %c0_244] : memref<3x12x8x256xf32, #tpu.memory_space<vmem>>, vector<1x8x8x256xf32>
    %253 = vector.shape_cast %252 : vector<1x8x8x256xf32> to vector<8x8x256xf32>
    %c0_245 = arith.constant 0 : index
    %c25 = arith.constant 25 : index
    %c0_246 = arith.constant 0 : index
    %c0_247 = arith.constant 0 : index
    %254 = vector.load %arg2[%c0_245, %c25, %c0_246, %c0_247] : memref<2x27x8x256xf32, #tpu.memory_space<vmem>>, vector<1x1x8x256xf32>
    %255 = vector.shape_cast %254 : vector<1x1x8x256xf32> to vector<8x256xf32>
    %256 = vector.shape_cast %255 : vector<8x256xf32> to vector<1x8x256xf32>
    %257 = vector.broadcast %256 : vector<1x8x256xf32> to vector<8x8x256xf32>
    %258 = arith.mulf %253, %257 : vector<8x8x256xf32>
    %259 = arith.addf %251, %258 : vector<8x8x256xf32>
    %c0_248 = arith.constant 0 : index
    %c0_249 = arith.constant 0 : index
    %260 = vector.load %arg3[%c0_248, %c0_249] : memref<2x256xf32, #tpu.memory_space<vmem>>, vector<1x256xf32>
    %261 = vector.shape_cast %260 : vector<1x256xf32> to vector<256xf32>
    %262 = vector.shape_cast %261 : vector<256xf32> to vector<1x1x256xf32>
    %263 = vector.broadcast %262 : vector<1x1x256xf32> to vector<8x8x256xf32>
    %264 = arith.mulf %259, %263 : vector<8x8x256xf32>
    %c0_250 = arith.constant 0 : index
    %c0_251 = arith.constant 0 : index
    %265 = vector.load %arg4[%c0_250, %c0_251] : memref<2x256xf32, #tpu.memory_space<vmem>>, vector<1x256xf32>
    %266 = vector.shape_cast %265 : vector<1x256xf32> to vector<256xf32>
    %267 = vector.shape_cast %266 : vector<256xf32> to vector<1x1x256xf32>
    %268 = vector.broadcast %267 : vector<1x1x256xf32> to vector<8x8x256xf32>
    %269 = arith.addf %264, %268 : vector<8x8x256xf32>
    %cst_252 = arith.constant 0.000000e+00 : f32
    %270 = vector.broadcast %cst_252 : f32 to vector<8x8x256xf32>
    %271 = arith.maximumf %269, %270 : vector<8x8x256xf32>
    %cst_253 = arith.constant dense<0.000000e+00> : vector<8x256xf32>
    %272 = vector.multi_reduction <add>, %271, %cst_253 [0] : vector<8x8x256xf32> to vector<8x256xf32>
    %273 = arith.addf %24, %272 : vector<8x256xf32>
    %c0_254 = arith.constant 0 : index
    %c0_255 = arith.constant 0 : index
    %c0_256 = arith.constant 0 : index
    %274 = vector.load %arg11[%c0_254, %c0_255, %c0_256] : memref<8x8x256xf32, #tpu.memory_space<vmem>>, vector<8x8x256xf32>
    tpu.vector_store %arg11[%c0_254, %c0_255, %c0_256], %271 {strides = array<i32>} : memref<8x8x256xf32, #tpu.memory_space<vmem>>, vector<8x8x256xf32>,
    %c0_257 = arith.constant 0 : index
    %c0_258 = arith.constant 0 : index
    %c0_259 = arith.constant 0 : index
    %c0_260 = arith.constant 0 : index
    %275 = vector.load %arg1[%c0_257, %c0_258, %c0_259, %c0_260] : memref<1x8x8x256xf32, #tpu.memory_space<vmem>>, vector<1x8x6x256xf32>
    %276 = vector.shape_cast %275 : vector<1x8x6x256xf32> to vector<8x6x256xf32>
    %c0_261 = arith.constant 0 : index
    %c2_262 = arith.constant 2 : index
    %c2_263 = arith.constant 2 : index
    %c0_264 = arith.constant 0 : index
    %277 = vector.load %arg10[%c0_261, %c2_262, %c2_263, %c0_264] : memref<3x12x8x256xf32, #tpu.memory_space<vmem>>, vector<1x8x6x256xf32>
    %278 = vector.shape_cast %277 : vector<1x8x6x256xf32> to vector<8x6x256xf32>
    %279 = vector.shape_cast %276 : vector<8x6x256xf32> to vector<1x8x6x256xf32>
    tpu.vector_store %arg10[%c0_261, %c2_262, %c2_263, %c0_264], %279 {strides = array<i32>} : memref<3x12x8x256xf32, #tpu.memory_space<vmem>>, vector<1x8x6x256xf32>,
    %cst_265 = arith.constant 0.000000e+00 : f32
    %280 = vector.broadcast %cst_265 : f32 to vector<8x2x256xf32>
    %c0_266 = arith.constant 0 : index
    %c2_267 = arith.constant 2 : index
    %c0_268 = arith.constant 0 : index
    %c0_269 = arith.constant 0 : index
    %281 = vector.load %arg10[%c0_266, %c2_267, %c0_268, %c0_269] : memref<3x12x8x256xf32, #tpu.memory_space<vmem>>, vector<1x8x2x256xf32>
    %282 = vector.shape_cast %281 : vector<1x8x2x256xf32> to vector<8x2x256xf32>
    %283 = vector.shape_cast %280 : vector<8x2x256xf32> to vector<1x8x2x256xf32>
    tpu.vector_store %arg10[%c0_266, %c2_267, %c0_268, %c0_269], %283 {strides = array<i32>} : memref<3x12x8x256xf32, #tpu.memory_space<vmem>>, vector<1x8x2x256xf32>,
    %c0_270 = arith.constant 0 : index
    %c0_271 = arith.constant 0 : index
    %c2_272 = arith.constant 2 : index
    %c0_273 = arith.constant 0 : index
    %284 = vector.load %arg1[%c0_270, %c0_271, %c2_272, %c0_273] : memref<1x8x8x256xf32, #tpu.memory_space<vmem>>, vector<1x8x6x256xf32>
    %285 = vector.shape_cast %284 : vector<1x8x6x256xf32> to vector<8x6x256xf32>
    %c2_274 = arith.constant 2 : index
    %c2_275 = arith.constant 2 : index
    %c0_276 = arith.constant 0 : index
    %c0_277 = arith.constant 0 : index
    %286 = vector.load %arg10[%c2_274, %c2_275, %c0_276, %c0_277] : memref<3x12x8x256xf32, #tpu.memory_space<vmem>>, vector<1x8x6x256xf32>
    %287 = vector.shape_cast %286 : vector<1x8x6x256xf32> to vector<8x6x256xf32>
    %288 = vector.shape_cast %285 : vector<8x6x256xf32> to vector<1x8x6x256xf32>
    tpu.vector_store %arg10[%c2_274, %c2_275, %c0_276, %c0_277], %288 {strides = array<i32>} : memref<3x12x8x256xf32, #tpu.memory_space<vmem>>, vector<1x8x6x256xf32>,
    %cst_278 = arith.constant 0.000000e+00 : f32
    %289 = vector.broadcast %cst_278 : f32 to vector<8x2x256xf32>
    %c2_279 = arith.constant 2 : index
    %c2_280 = arith.constant 2 : index
    %c6_281 = arith.constant 6 : index
    %c0_282 = arith.constant 0 : index
    %290 = vector.load %arg10[%c2_279, %c2_280, %c6_281, %c0_282] : memref<3x12x8x256xf32, #tpu.memory_space<vmem>>, vector<1x8x2x256xf32>
    %291 = vector.shape_cast %290 : vector<1x8x2x256xf32> to vector<8x2x256xf32>
    %292 = vector.shape_cast %289 : vector<8x2x256xf32> to vector<1x8x2x256xf32>
    tpu.vector_store %arg10[%c2_279, %c2_280, %c6_281, %c0_282], %292 {strides = array<i32>} : memref<3x12x8x256xf32, #tpu.memory_space<vmem>>, vector<1x8x2x256xf32>,
    %c0_283 = arith.constant 0 : index
    %c0_284 = arith.constant 0 : index
    %c0_285 = arith.constant 0 : index
    %c0_286 = arith.constant 0 : index
    %293 = vector.load %arg10[%c0_283, %c0_284, %c0_285, %c0_286] : memref<3x12x8x256xf32, #tpu.memory_space<vmem>>, vector<1x8x8x256xf32>
    %294 = vector.shape_cast %293 : vector<1x8x8x256xf32> to vector<8x8x256xf32>
    %c1_287 = arith.constant 1 : index
    %c0_288 = arith.constant 0 : index
    %c0_289 = arith.constant 0 : index
    %c0_290 = arith.constant 0 : index
    %295 = vector.load %arg2[%c1_287, %c0_288, %c0_289, %c0_290] : memref<2x27x8x256xf32, #tpu.memory_space<vmem>>, vector<1x1x8x256xf32>
    %296 = vector.shape_cast %295 : vector<1x1x8x256xf32> to vector<8x256xf32>
    %297 = vector.shape_cast %296 : vector<8x256xf32> to vector<1x8x256xf32>
    %298 = vector.broadcast %297 : vector<1x8x256xf32> to vector<8x8x256xf32>
    %299 = arith.mulf %294, %298 : vector<8x8x256xf32>
    %c0_291 = arith.constant 0 : index
    %c2_292 = arith.constant 2 : index
    %c0_293 = arith.constant 0 : index
    %c0_294 = arith.constant 0 : index
    %300 = vector.load %arg10[%c0_291, %c2_292, %c0_293, %c0_294] : memref<3x12x8x256xf32, #tpu.memory_space<vmem>>, vector<1x8x8x256xf32>
    %301 = vector.shape_cast %300 : vector<1x8x8x256xf32> to vector<8x8x256xf32>
    %c1_295 = arith.constant 1 : index
    %c9_296 = arith.constant 9 : index
    %c0_297 = arith.constant 0 : index
    %c0_298 = arith.constant 0 : index
    %302 = vector.load %arg2[%c1_295, %c9_296, %c0_297, %c0_298] : memref<2x27x8x256xf32, #tpu.memory_space<vmem>>, vector<1x1x8x256xf32>
    %303 = vector.shape_cast %302 : vector<1x1x8x256xf32> to vector<8x256xf32>
    %304 = vector.shape_cast %303 : vector<8x256xf32> to vector<1x8x256xf32>
    %305 = vector.broadcast %304 : vector<1x8x256xf32> to vector<8x8x256xf32>
    %306 = arith.mulf %301, %305 : vector<8x8x256xf32>
    %307 = arith.addf %299, %306 : vector<8x8x256xf32>
    %c0_299 = arith.constant 0 : index
    %c4_300 = arith.constant 4 : index
    %c0_301 = arith.constant 0 : index
    %c0_302 = arith.constant 0 : index
    %308 = vector.load %arg10[%c0_299, %c4_300, %c0_301, %c0_302] : memref<3x12x8x256xf32, #tpu.memory_space<vmem>>, vector<1x8x8x256xf32>
    %309 = vector.shape_cast %308 : vector<1x8x8x256xf32> to vector<8x8x256xf32>
    %c1_303 = arith.constant 1 : index
    %c18_304 = arith.constant 18 : index
    %c0_305 = arith.constant 0 : index
    %c0_306 = arith.constant 0 : index
    %310 = vector.load %arg2[%c1_303, %c18_304, %c0_305, %c0_306] : memref<2x27x8x256xf32, #tpu.memory_space<vmem>>, vector<1x1x8x256xf32>
    %311 = vector.shape_cast %310 : vector<1x1x8x256xf32> to vector<8x256xf32>
    %312 = vector.shape_cast %311 : vector<8x256xf32> to vector<1x8x256xf32>
    %313 = vector.broadcast %312 : vector<1x8x256xf32> to vector<8x8x256xf32>
    %314 = arith.mulf %309, %313 : vector<8x8x256xf32>
    %315 = arith.addf %307, %314 : vector<8x8x256xf32>
    %c1_307 = arith.constant 1 : index
    %c0_308 = arith.constant 0 : index
    %c0_309 = arith.constant 0 : index
    %c0_310 = arith.constant 0 : index
    %316 = vector.load %arg10[%c1_307, %c0_308, %c0_309, %c0_310] : memref<3x12x8x256xf32, #tpu.memory_space<vmem>>, vector<1x8x8x256xf32>
    %317 = vector.shape_cast %316 : vector<1x8x8x256xf32> to vector<8x8x256xf32>
    %c1_311 = arith.constant 1 : index
    %c3_312 = arith.constant 3 : index
    %c0_313 = arith.constant 0 : index
    %c0_314 = arith.constant 0 : index
    %318 = vector.load %arg2[%c1_311, %c3_312, %c0_313, %c0_314] : memref<2x27x8x256xf32, #tpu.memory_space<vmem>>, vector<1x1x8x256xf32>
    %319 = vector.shape_cast %318 : vector<1x1x8x256xf32> to vector<8x256xf32>
    %320 = vector.shape_cast %319 : vector<8x256xf32> to vector<1x8x256xf32>
    %321 = vector.broadcast %320 : vector<1x8x256xf32> to vector<8x8x256xf32>
    %322 = arith.mulf %317, %321 : vector<8x8x256xf32>
    %323 = arith.addf %315, %322 : vector<8x8x256xf32>
    %c1_315 = arith.constant 1 : index
    %c2_316 = arith.constant 2 : index
    %c0_317 = arith.constant 0 : index
    %c0_318 = arith.constant 0 : index
    %324 = vector.load %arg10[%c1_315, %c2_316, %c0_317, %c0_318] : memref<3x12x8x256xf32, #tpu.memory_space<vmem>>, vector<1x8x8x256xf32>
    %325 = vector.shape_cast %324 : vector<1x8x8x256xf32> to vector<8x8x256xf32>
    %c1_319 = arith.constant 1 : index
    %c12_320 = arith.constant 12 : index
    %c0_321 = arith.constant 0 : index
    %c0_322 = arith.constant 0 : index
    %326 = vector.load %arg2[%c1_319, %c12_320, %c0_321, %c0_322] : memref<2x27x8x256xf32, #tpu.memory_space<vmem>>, vector<1x1x8x256xf32>
    %327 = vector.shape_cast %326 : vector<1x1x8x256xf32> to vector<8x256xf32>
    %328 = vector.shape_cast %327 : vector<8x256xf32> to vector<1x8x256xf32>
    %329 = vector.broadcast %328 : vector<1x8x256xf32> to vector<8x8x256xf32>
    %330 = arith.mulf %325, %329 : vector<8x8x256xf32>
    %331 = arith.addf %323, %330 : vector<8x8x256xf32>
    %c1_323 = arith.constant 1 : index
    %c4_324 = arith.constant 4 : index
    %c0_325 = arith.constant 0 : index
    %c0_326 = arith.constant 0 : index
    %332 = vector.load %arg10[%c1_323, %c4_324, %c0_325, %c0_326] : memref<3x12x8x256xf32, #tpu.memory_space<vmem>>, vector<1x8x8x256xf32>
    %333 = vector.shape_cast %332 : vector<1x8x8x256xf32> to vector<8x8x256xf32>
    %c1_327 = arith.constant 1 : index
    %c21_328 = arith.constant 21 : index
    %c0_329 = arith.constant 0 : index
    %c0_330 = arith.constant 0 : index
    %334 = vector.load %arg2[%c1_327, %c21_328, %c0_329, %c0_330] : memref<2x27x8x256xf32, #tpu.memory_space<vmem>>, vector<1x1x8x256xf32>
    %335 = vector.shape_cast %334 : vector<1x1x8x256xf32> to vector<8x256xf32>
    %336 = vector.shape_cast %335 : vector<8x256xf32> to vector<1x8x256xf32>
    %337 = vector.broadcast %336 : vector<1x8x256xf32> to vector<8x8x256xf32>
    %338 = arith.mulf %333, %337 : vector<8x8x256xf32>
    %339 = arith.addf %331, %338 : vector<8x8x256xf32>
    %c2_331 = arith.constant 2 : index
    %c0_332 = arith.constant 0 : index
    %c0_333 = arith.constant 0 : index
    %c0_334 = arith.constant 0 : index
    %340 = vector.load %arg10[%c2_331, %c0_332, %c0_333, %c0_334] : memref<3x12x8x256xf32, #tpu.memory_space<vmem>>, vector<1x8x8x256xf32>
    %341 = vector.shape_cast %340 : vector<1x8x8x256xf32> to vector<8x8x256xf32>
    %c1_335 = arith.constant 1 : index
    %c6_336 = arith.constant 6 : index
    %c0_337 = arith.constant 0 : index
    %c0_338 = arith.constant 0 : index
    %342 = vector.load %arg2[%c1_335, %c6_336, %c0_337, %c0_338] : memref<2x27x8x256xf32, #tpu.memory_space<vmem>>, vector<1x1x8x256xf32>
    %343 = vector.shape_cast %342 : vector<1x1x8x256xf32> to vector<8x256xf32>
    %344 = vector.shape_cast %343 : vector<8x256xf32> to vector<1x8x256xf32>
    %345 = vector.broadcast %344 : vector<1x8x256xf32> to vector<8x8x256xf32>
    %346 = arith.mulf %341, %345 : vector<8x8x256xf32>
    %347 = arith.addf %339, %346 : vector<8x8x256xf32>
    %c2_339 = arith.constant 2 : index
    %c2_340 = arith.constant 2 : index
    %c0_341 = arith.constant 0 : index
    %c0_342 = arith.constant 0 : index
    %348 = vector.load %arg10[%c2_339, %c2_340, %c0_341, %c0_342] : memref<3x12x8x256xf32, #tpu.memory_space<vmem>>, vector<1x8x8x256xf32>
    %349 = vector.shape_cast %348 : vector<1x8x8x256xf32> to vector<8x8x256xf32>
    %c1_343 = arith.constant 1 : index
    %c15_344 = arith.constant 15 : index
    %c0_345 = arith.constant 0 : index
    %c0_346 = arith.constant 0 : index
    %350 = vector.load %arg2[%c1_343, %c15_344, %c0_345, %c0_346] : memref<2x27x8x256xf32, #tpu.memory_space<vmem>>, vector<1x1x8x256xf32>
    %351 = vector.shape_cast %350 : vector<1x1x8x256xf32> to vector<8x256xf32>
    %352 = vector.shape_cast %351 : vector<8x256xf32> to vector<1x8x256xf32>
    %353 = vector.broadcast %352 : vector<1x8x256xf32> to vector<8x8x256xf32>
    %354 = arith.mulf %349, %353 : vector<8x8x256xf32>
    %355 = arith.addf %347, %354 : vector<8x8x256xf32>
    %c2_347 = arith.constant 2 : index
    %c4_348 = arith.constant 4 : index
    %c0_349 = arith.constant 0 : index
    %c0_350 = arith.constant 0 : index
    %356 = vector.load %arg10[%c2_347, %c4_348, %c0_349, %c0_350] : memref<3x12x8x256xf32, #tpu.memory_space<vmem>>, vector<1x8x8x256xf32>
    %357 = vector.shape_cast %356 : vector<1x8x8x256xf32> to vector<8x8x256xf32>
    %c1_351 = arith.constant 1 : index
    %c24_352 = arith.constant 24 : index
    %c0_353 = arith.constant 0 : index
    %c0_354 = arith.constant 0 : index
    %358 = vector.load %arg2[%c1_351, %c24_352, %c0_353, %c0_354] : memref<2x27x8x256xf32, #tpu.memory_space<vmem>>, vector<1x1x8x256xf32>
    %359 = vector.shape_cast %358 : vector<1x1x8x256xf32> to vector<8x256xf32>
    %360 = vector.shape_cast %359 : vector<8x256xf32> to vector<1x8x256xf32>
    %361 = vector.broadcast %360 : vector<1x8x256xf32> to vector<8x8x256xf32>
    %362 = arith.mulf %357, %361 : vector<8x8x256xf32>
    %363 = arith.addf %355, %362 : vector<8x8x256xf32>
    %c64_i32 = arith.constant 64 : i32
    %364 = tpu.dynamic_rotate %363 by %c64_i32 dim 2 : vector<8x8x256xf32>, i32 -> vector<8x8x256xf32>
    %c0_355 = arith.constant 0 : index
    %c0_356 = arith.constant 0 : index
    %c0_357 = arith.constant 0 : index
    %c0_358 = arith.constant 0 : index
    %365 = vector.load %arg10[%c0_355, %c0_356, %c0_357, %c0_358] : memref<3x12x8x256xf32, #tpu.memory_space<vmem>>, vector<1x8x8x256xf32>
    %366 = vector.shape_cast %365 : vector<1x8x8x256xf32> to vector<8x8x256xf32>
    %c1_359 = arith.constant 1 : index
    %c2_360 = arith.constant 2 : index
    %c0_361 = arith.constant 0 : index
    %c0_362 = arith.constant 0 : index
    %367 = vector.load %arg2[%c1_359, %c2_360, %c0_361, %c0_362] : memref<2x27x8x256xf32, #tpu.memory_space<vmem>>, vector<1x1x8x256xf32>
    %368 = vector.shape_cast %367 : vector<1x1x8x256xf32> to vector<8x256xf32>
    %369 = vector.shape_cast %368 : vector<8x256xf32> to vector<1x8x256xf32>
    %370 = vector.broadcast %369 : vector<1x8x256xf32> to vector<8x8x256xf32>
    %371 = arith.mulf %366, %370 : vector<8x8x256xf32>
    %c0_363 = arith.constant 0 : index
    %c2_364 = arith.constant 2 : index
    %c0_365 = arith.constant 0 : index
    %c0_366 = arith.constant 0 : index
    %372 = vector.load %arg10[%c0_363, %c2_364, %c0_365, %c0_366] : memref<3x12x8x256xf32, #tpu.memory_space<vmem>>, vector<1x8x8x256xf32>
    %373 = vector.shape_cast %372 : vector<1x8x8x256xf32> to vector<8x8x256xf32>
    %c1_367 = arith.constant 1 : index
    %c11_368 = arith.constant 11 : index
    %c0_369 = arith.constant 0 : index
    %c0_370 = arith.constant 0 : index
    %374 = vector.load %arg2[%c1_367, %c11_368, %c0_369, %c0_370] : memref<2x27x8x256xf32, #tpu.memory_space<vmem>>, vector<1x1x8x256xf32>
    %375 = vector.shape_cast %374 : vector<1x1x8x256xf32> to vector<8x256xf32>
    %376 = vector.shape_cast %375 : vector<8x256xf32> to vector<1x8x256xf32>
    %377 = vector.broadcast %376 : vector<1x8x256xf32> to vector<8x8x256xf32>
    %378 = arith.mulf %373, %377 : vector<8x8x256xf32>
    %379 = arith.addf %371, %378 : vector<8x8x256xf32>
    %c0_371 = arith.constant 0 : index
    %c4_372 = arith.constant 4 : index
    %c0_373 = arith.constant 0 : index
    %c0_374 = arith.constant 0 : index
    %380 = vector.load %arg10[%c0_371, %c4_372, %c0_373, %c0_374] : memref<3x12x8x256xf32, #tpu.memory_space<vmem>>, vector<1x8x8x256xf32>
    %381 = vector.shape_cast %380 : vector<1x8x8x256xf32> to vector<8x8x256xf32>
    %c1_375 = arith.constant 1 : index
    %c20_376 = arith.constant 20 : index
    %c0_377 = arith.constant 0 : index
    %c0_378 = arith.constant 0 : index
    %382 = vector.load %arg2[%c1_375, %c20_376, %c0_377, %c0_378] : memref<2x27x8x256xf32, #tpu.memory_space<vmem>>, vector<1x1x8x256xf32>
    %383 = vector.shape_cast %382 : vector<1x1x8x256xf32> to vector<8x256xf32>
    %384 = vector.shape_cast %383 : vector<8x256xf32> to vector<1x8x256xf32>
    %385 = vector.broadcast %384 : vector<1x8x256xf32> to vector<8x8x256xf32>
    %386 = arith.mulf %381, %385 : vector<8x8x256xf32>
    %387 = arith.addf %379, %386 : vector<8x8x256xf32>
    %c1_379 = arith.constant 1 : index
    %c0_380 = arith.constant 0 : index
    %c0_381 = arith.constant 0 : index
    %c0_382 = arith.constant 0 : index
    %388 = vector.load %arg10[%c1_379, %c0_380, %c0_381, %c0_382] : memref<3x12x8x256xf32, #tpu.memory_space<vmem>>, vector<1x8x8x256xf32>
    %389 = vector.shape_cast %388 : vector<1x8x8x256xf32> to vector<8x8x256xf32>
    %c1_383 = arith.constant 1 : index
    %c5_384 = arith.constant 5 : index
    %c0_385 = arith.constant 0 : index
    %c0_386 = arith.constant 0 : index
    %390 = vector.load %arg2[%c1_383, %c5_384, %c0_385, %c0_386] : memref<2x27x8x256xf32, #tpu.memory_space<vmem>>, vector<1x1x8x256xf32>
    %391 = vector.shape_cast %390 : vector<1x1x8x256xf32> to vector<8x256xf32>
    %392 = vector.shape_cast %391 : vector<8x256xf32> to vector<1x8x256xf32>
    %393 = vector.broadcast %392 : vector<1x8x256xf32> to vector<8x8x256xf32>
    %394 = arith.mulf %389, %393 : vector<8x8x256xf32>
    %395 = arith.addf %387, %394 : vector<8x8x256xf32>
    %c1_387 = arith.constant 1 : index
    %c2_388 = arith.constant 2 : index
    %c0_389 = arith.constant 0 : index
    %c0_390 = arith.constant 0 : index
    %396 = vector.load %arg10[%c1_387, %c2_388, %c0_389, %c0_390] : memref<3x12x8x256xf32, #tpu.memory_space<vmem>>, vector<1x8x8x256xf32>
    %397 = vector.shape_cast %396 : vector<1x8x8x256xf32> to vector<8x8x256xf32>
    %c1_391 = arith.constant 1 : index
    %c14_392 = arith.constant 14 : index
    %c0_393 = arith.constant 0 : index
    %c0_394 = arith.constant 0 : index
    %398 = vector.load %arg2[%c1_391, %c14_392, %c0_393, %c0_394] : memref<2x27x8x256xf32, #tpu.memory_space<vmem>>, vector<1x1x8x256xf32>
    %399 = vector.shape_cast %398 : vector<1x1x8x256xf32> to vector<8x256xf32>
    %400 = vector.shape_cast %399 : vector<8x256xf32> to vector<1x8x256xf32>
    %401 = vector.broadcast %400 : vector<1x8x256xf32> to vector<8x8x256xf32>
    %402 = arith.mulf %397, %401 : vector<8x8x256xf32>
    %403 = arith.addf %395, %402 : vector<8x8x256xf32>
    %c1_395 = arith.constant 1 : index
    %c4_396 = arith.constant 4 : index
    %c0_397 = arith.constant 0 : index
    %c0_398 = arith.constant 0 : index
    %404 = vector.load %arg10[%c1_395, %c4_396, %c0_397, %c0_398] : memref<3x12x8x256xf32, #tpu.memory_space<vmem>>, vector<1x8x8x256xf32>
    %405 = vector.shape_cast %404 : vector<1x8x8x256xf32> to vector<8x8x256xf32>
    %c1_399 = arith.constant 1 : index
    %c23_400 = arith.constant 23 : index
    %c0_401 = arith.constant 0 : index
    %c0_402 = arith.constant 0 : index
    %406 = vector.load %arg2[%c1_399, %c23_400, %c0_401, %c0_402] : memref<2x27x8x256xf32, #tpu.memory_space<vmem>>, vector<1x1x8x256xf32>
    %407 = vector.shape_cast %406 : vector<1x1x8x256xf32> to vector<8x256xf32>
    %408 = vector.shape_cast %407 : vector<8x256xf32> to vector<1x8x256xf32>
    %409 = vector.broadcast %408 : vector<1x8x256xf32> to vector<8x8x256xf32>
    %410 = arith.mulf %405, %409 : vector<8x8x256xf32>
    %411 = arith.addf %403, %410 : vector<8x8x256xf32>
    %c2_403 = arith.constant 2 : index
    %c0_404 = arith.constant 0 : index
    %c0_405 = arith.constant 0 : index
    %c0_406 = arith.constant 0 : index
    %412 = vector.load %arg10[%c2_403, %c0_404, %c0_405, %c0_406] : memref<3x12x8x256xf32, #tpu.memory_space<vmem>>, vector<1x8x8x256xf32>
    %413 = vector.shape_cast %412 : vector<1x8x8x256xf32> to vector<8x8x256xf32>
    %c1_407 = arith.constant 1 : index
    %c8_408 = arith.constant 8 : index
    %c0_409 = arith.constant 0 : index
    %c0_410 = arith.constant 0 : index
    %414 = vector.load %arg2[%c1_407, %c8_408, %c0_409, %c0_410] : memref<2x27x8x256xf32, #tpu.memory_space<vmem>>, vector<1x1x8x256xf32>
    %415 = vector.shape_cast %414 : vector<1x1x8x256xf32> to vector<8x256xf32>
    %416 = vector.shape_cast %415 : vector<8x256xf32> to vector<1x8x256xf32>
    %417 = vector.broadcast %416 : vector<1x8x256xf32> to vector<8x8x256xf32>
    %418 = arith.mulf %413, %417 : vector<8x8x256xf32>
    %419 = arith.addf %411, %418 : vector<8x8x256xf32>
    %c2_411 = arith.constant 2 : index
    %c2_412 = arith.constant 2 : index
    %c0_413 = arith.constant 0 : index
    %c0_414 = arith.constant 0 : index
    %420 = vector.load %arg10[%c2_411, %c2_412, %c0_413, %c0_414] : memref<3x12x8x256xf32, #tpu.memory_space<vmem>>, vector<1x8x8x256xf32>
    %421 = vector.shape_cast %420 : vector<1x8x8x256xf32> to vector<8x8x256xf32>
    %c1_415 = arith.constant 1 : index
    %c17_416 = arith.constant 17 : index
    %c0_417 = arith.constant 0 : index
    %c0_418 = arith.constant 0 : index
    %422 = vector.load %arg2[%c1_415, %c17_416, %c0_417, %c0_418] : memref<2x27x8x256xf32, #tpu.memory_space<vmem>>, vector<1x1x8x256xf32>
    %423 = vector.shape_cast %422 : vector<1x1x8x256xf32> to vector<8x256xf32>
    %424 = vector.shape_cast %423 : vector<8x256xf32> to vector<1x8x256xf32>
    %425 = vector.broadcast %424 : vector<1x8x256xf32> to vector<8x8x256xf32>
    %426 = arith.mulf %421, %425 : vector<8x8x256xf32>
    %427 = arith.addf %419, %426 : vector<8x8x256xf32>
    %c2_419 = arith.constant 2 : index
    %c4_420 = arith.constant 4 : index
    %c0_421 = arith.constant 0 : index
    %c0_422 = arith.constant 0 : index
    %428 = vector.load %arg10[%c2_419, %c4_420, %c0_421, %c0_422] : memref<3x12x8x256xf32, #tpu.memory_space<vmem>>, vector<1x8x8x256xf32>
    %429 = vector.shape_cast %428 : vector<1x8x8x256xf32> to vector<8x8x256xf32>
    %c1_423 = arith.constant 1 : index
    %c26_424 = arith.constant 26 : index
    %c0_425 = arith.constant 0 : index
    %c0_426 = arith.constant 0 : index
    %430 = vector.load %arg2[%c1_423, %c26_424, %c0_425, %c0_426] : memref<2x27x8x256xf32, #tpu.memory_space<vmem>>, vector<1x1x8x256xf32>
    %431 = vector.shape_cast %430 : vector<1x1x8x256xf32> to vector<8x256xf32>
    %432 = vector.shape_cast %431 : vector<8x256xf32> to vector<1x8x256xf32>
    %433 = vector.broadcast %432 : vector<1x8x256xf32> to vector<8x8x256xf32>
    %434 = arith.mulf %429, %433 : vector<8x8x256xf32>
    %435 = arith.addf %427, %434 : vector<8x8x256xf32>
    %c192_i32 = arith.constant 192 : i32
    %436 = tpu.dynamic_rotate %435 by %c192_i32 dim 2 : vector<8x8x256xf32>, i32 -> vector<8x8x256xf32>
    %437 = arith.addf %364, %436 : vector<8x8x256xf32>
    %c0_427 = arith.constant 0 : index
    %c0_428 = arith.constant 0 : index
    %c0_429 = arith.constant 0 : index
    %c0_430 = arith.constant 0 : index
    %438 = vector.load %arg10[%c0_427, %c0_428, %c0_429, %c0_430] : memref<3x12x8x256xf32, #tpu.memory_space<vmem>>, vector<1x8x8x256xf32>
    %439 = vector.shape_cast %438 : vector<1x8x8x256xf32> to vector<8x8x256xf32>
    %c1_431 = arith.constant 1 : index
    %c1_432 = arith.constant 1 : index
    %c0_433 = arith.constant 0 : index
    %c0_434 = arith.constant 0 : index
    %440 = vector.load %arg2[%c1_431, %c1_432, %c0_433, %c0_434] : memref<2x27x8x256xf32, #tpu.memory_space<vmem>>, vector<1x1x8x256xf32>
    %441 = vector.shape_cast %440 : vector<1x1x8x256xf32> to vector<8x256xf32>
    %442 = vector.shape_cast %441 : vector<8x256xf32> to vector<1x8x256xf32>
    %443 = vector.broadcast %442 : vector<1x8x256xf32> to vector<8x8x256xf32>
    %444 = arith.mulf %439, %443 : vector<8x8x256xf32>
    %445 = arith.addf %437, %444 : vector<8x8x256xf32>
    %c0_435 = arith.constant 0 : index
    %c2_436 = arith.constant 2 : index
    %c0_437 = arith.constant 0 : index
    %c0_438 = arith.constant 0 : index
    %446 = vector.load %arg10[%c0_435, %c2_436, %c0_437, %c0_438] : memref<3x12x8x256xf32, #tpu.memory_space<vmem>>, vector<1x8x8x256xf32>
    %447 = vector.shape_cast %446 : vector<1x8x8x256xf32> to vector<8x8x256xf32>
    %c1_439 = arith.constant 1 : index
    %c10_440 = arith.constant 10 : index
    %c0_441 = arith.constant 0 : index
    %c0_442 = arith.constant 0 : index
    %448 = vector.load %arg2[%c1_439, %c10_440, %c0_441, %c0_442] : memref<2x27x8x256xf32, #tpu.memory_space<vmem>>, vector<1x1x8x256xf32>
    %449 = vector.shape_cast %448 : vector<1x1x8x256xf32> to vector<8x256xf32>
    %450 = vector.shape_cast %449 : vector<8x256xf32> to vector<1x8x256xf32>
    %451 = vector.broadcast %450 : vector<1x8x256xf32> to vector<8x8x256xf32>
    %452 = arith.mulf %447, %451 : vector<8x8x256xf32>
    %453 = arith.addf %445, %452 : vector<8x8x256xf32>
    %c0_443 = arith.constant 0 : index
    %c4_444 = arith.constant 4 : index
    %c0_445 = arith.constant 0 : index
    %c0_446 = arith.constant 0 : index
    %454 = vector.load %arg10[%c0_443, %c4_444, %c0_445, %c0_446] : memref<3x12x8x256xf32, #tpu.memory_space<vmem>>, vector<1x8x8x256xf32>
    %455 = vector.shape_cast %454 : vector<1x8x8x256xf32> to vector<8x8x256xf32>
    %c1_447 = arith.constant 1 : index
    %c19_448 = arith.constant 19 : index
    %c0_449 = arith.constant 0 : index
    %c0_450 = arith.constant 0 : index
    %456 = vector.load %arg2[%c1_447, %c19_448, %c0_449, %c0_450] : memref<2x27x8x256xf32, #tpu.memory_space<vmem>>, vector<1x1x8x256xf32>
    %457 = vector.shape_cast %456 : vector<1x1x8x256xf32> to vector<8x256xf32>
    %458 = vector.shape_cast %457 : vector<8x256xf32> to vector<1x8x256xf32>
    %459 = vector.broadcast %458 : vector<1x8x256xf32> to vector<8x8x256xf32>
    %460 = arith.mulf %455, %459 : vector<8x8x256xf32>
    %461 = arith.addf %453, %460 : vector<8x8x256xf32>
    %c1_451 = arith.constant 1 : index
    %c0_452 = arith.constant 0 : index
    %c0_453 = arith.constant 0 : index
    %c0_454 = arith.constant 0 : index
    %462 = vector.load %arg10[%c1_451, %c0_452, %c0_453, %c0_454] : memref<3x12x8x256xf32, #tpu.memory_space<vmem>>, vector<1x8x8x256xf32>
    %463 = vector.shape_cast %462 : vector<1x8x8x256xf32> to vector<8x8x256xf32>
    %c1_455 = arith.constant 1 : index
    %c4_456 = arith.constant 4 : index
    %c0_457 = arith.constant 0 : index
    %c0_458 = arith.constant 0 : index
    %464 = vector.load %arg2[%c1_455, %c4_456, %c0_457, %c0_458] : memref<2x27x8x256xf32, #tpu.memory_space<vmem>>, vector<1x1x8x256xf32>
    %465 = vector.shape_cast %464 : vector<1x1x8x256xf32> to vector<8x256xf32>
    %466 = vector.shape_cast %465 : vector<8x256xf32> to vector<1x8x256xf32>
    %467 = vector.broadcast %466 : vector<1x8x256xf32> to vector<8x8x256xf32>
    %468 = arith.mulf %463, %467 : vector<8x8x256xf32>
    %469 = arith.addf %461, %468 : vector<8x8x256xf32>
    %c1_459 = arith.constant 1 : index
    %c2_460 = arith.constant 2 : index
    %c0_461 = arith.constant 0 : index
    %c0_462 = arith.constant 0 : index
    %470 = vector.load %arg10[%c1_459, %c2_460, %c0_461, %c0_462] : memref<3x12x8x256xf32, #tpu.memory_space<vmem>>, vector<1x8x8x256xf32>
    %471 = vector.shape_cast %470 : vector<1x8x8x256xf32> to vector<8x8x256xf32>
    %c1_463 = arith.constant 1 : index
    %c13_464 = arith.constant 13 : index
    %c0_465 = arith.constant 0 : index
    %c0_466 = arith.constant 0 : index
    %472 = vector.load %arg2[%c1_463, %c13_464, %c0_465, %c0_466] : memref<2x27x8x256xf32, #tpu.memory_space<vmem>>, vector<1x1x8x256xf32>
    %473 = vector.shape_cast %472 : vector<1x1x8x256xf32> to vector<8x256xf32>
    %474 = vector.shape_cast %473 : vector<8x256xf32> to vector<1x8x256xf32>
    %475 = vector.broadcast %474 : vector<1x8x256xf32> to vector<8x8x256xf32>
    %476 = arith.mulf %471, %475 : vector<8x8x256xf32>
    %477 = arith.addf %469, %476 : vector<8x8x256xf32>
    %c1_467 = arith.constant 1 : index
    %c4_468 = arith.constant 4 : index
    %c0_469 = arith.constant 0 : index
    %c0_470 = arith.constant 0 : index
    %478 = vector.load %arg10[%c1_467, %c4_468, %c0_469, %c0_470] : memref<3x12x8x256xf32, #tpu.memory_space<vmem>>, vector<1x8x8x256xf32>
    %479 = vector.shape_cast %478 : vector<1x8x8x256xf32> to vector<8x8x256xf32>
    %c1_471 = arith.constant 1 : index
    %c22_472 = arith.constant 22 : index
    %c0_473 = arith.constant 0 : index
    %c0_474 = arith.constant 0 : index
    %480 = vector.load %arg2[%c1_471, %c22_472, %c0_473, %c0_474] : memref<2x27x8x256xf32, #tpu.memory_space<vmem>>, vector<1x1x8x256xf32>
    %481 = vector.shape_cast %480 : vector<1x1x8x256xf32> to vector<8x256xf32>
    %482 = vector.shape_cast %481 : vector<8x256xf32> to vector<1x8x256xf32>
    %483 = vector.broadcast %482 : vector<1x8x256xf32> to vector<8x8x256xf32>
    %484 = arith.mulf %479, %483 : vector<8x8x256xf32>
    %485 = arith.addf %477, %484 : vector<8x8x256xf32>
    %c2_475 = arith.constant 2 : index
    %c0_476 = arith.constant 0 : index
    %c0_477 = arith.constant 0 : index
    %c0_478 = arith.constant 0 : index
    %486 = vector.load %arg10[%c2_475, %c0_476, %c0_477, %c0_478] : memref<3x12x8x256xf32, #tpu.memory_space<vmem>>, vector<1x8x8x256xf32>
    %487 = vector.shape_cast %486 : vector<1x8x8x256xf32> to vector<8x8x256xf32>
    %c1_479 = arith.constant 1 : index
    %c7_480 = arith.constant 7 : index
    %c0_481 = arith.constant 0 : index
    %c0_482 = arith.constant 0 : index
    %488 = vector.load %arg2[%c1_479, %c7_480, %c0_481, %c0_482] : memref<2x27x8x256xf32, #tpu.memory_space<vmem>>, vector<1x1x8x256xf32>
    %489 = vector.shape_cast %488 : vector<1x1x8x256xf32> to vector<8x256xf32>
    %490 = vector.shape_cast %489 : vector<8x256xf32> to vector<1x8x256xf32>
    %491 = vector.broadcast %490 : vector<1x8x256xf32> to vector<8x8x256xf32>
    %492 = arith.mulf %487, %491 : vector<8x8x256xf32>
    %493 = arith.addf %485, %492 : vector<8x8x256xf32>
    %c2_483 = arith.constant 2 : index
    %c2_484 = arith.constant 2 : index
    %c0_485 = arith.constant 0 : index
    %c0_486 = arith.constant 0 : index
    %494 = vector.load %arg10[%c2_483, %c2_484, %c0_485, %c0_486] : memref<3x12x8x256xf32, #tpu.memory_space<vmem>>, vector<1x8x8x256xf32>
    %495 = vector.shape_cast %494 : vector<1x8x8x256xf32> to vector<8x8x256xf32>
    %c1_487 = arith.constant 1 : index
    %c16_488 = arith.constant 16 : index
    %c0_489 = arith.constant 0 : index
    %c0_490 = arith.constant 0 : index
    %496 = vector.load %arg2[%c1_487, %c16_488, %c0_489, %c0_490] : memref<2x27x8x256xf32, #tpu.memory_space<vmem>>, vector<1x1x8x256xf32>
    %497 = vector.shape_cast %496 : vector<1x1x8x256xf32> to vector<8x256xf32>
    %498 = vector.shape_cast %497 : vector<8x256xf32> to vector<1x8x256xf32>
    %499 = vector.broadcast %498 : vector<1x8x256xf32> to vector<8x8x256xf32>
    %500 = arith.mulf %495, %499 : vector<8x8x256xf32>
    %501 = arith.addf %493, %500 : vector<8x8x256xf32>
    %c2_491 = arith.constant 2 : index
    %c4_492 = arith.constant 4 : index
    %c0_493 = arith.constant 0 : index
    %c0_494 = arith.constant 0 : index
    %502 = vector.load %arg10[%c2_491, %c4_492, %c0_493, %c0_494] : memref<3x12x8x256xf32, #tpu.memory_space<vmem>>, vector<1x8x8x256xf32>
    %503 = vector.shape_cast %502 : vector<1x8x8x256xf32> to vector<8x8x256xf32>
    %c1_495 = arith.constant 1 : index
    %c25_496 = arith.constant 25 : index
    %c0_497 = arith.constant 0 : index
    %c0_498 = arith.constant 0 : index
    %504 = vector.load %arg2[%c1_495, %c25_496, %c0_497, %c0_498] : memref<2x27x8x256xf32, #tpu.memory_space<vmem>>, vector<1x1x8x256xf32>
    %505 = vector.shape_cast %504 : vector<1x1x8x256xf32> to vector<8x256xf32>
    %506 = vector.shape_cast %505 : vector<8x256xf32> to vector<1x8x256xf32>
    %507 = vector.broadcast %506 : vector<1x8x256xf32> to vector<8x8x256xf32>
    %508 = arith.mulf %503, %507 : vector<8x8x256xf32>
    %509 = arith.addf %501, %508 : vector<8x8x256xf32>
    %c1_499 = arith.constant 1 : index
    %c0_500 = arith.constant 0 : index
    %510 = vector.load %arg3[%c1_499, %c0_500] : memref<2x256xf32, #tpu.memory_space<vmem>>, vector<1x256xf32>
    %511 = vector.shape_cast %510 : vector<1x256xf32> to vector<256xf32>
    %512 = vector.shape_cast %511 : vector<256xf32> to vector<1x1x256xf32>
    %513 = vector.broadcast %512 : vector<1x1x256xf32> to vector<8x8x256xf32>
    %514 = arith.mulf %509, %513 : vector<8x8x256xf32>
    %c1_501 = arith.constant 1 : index
    %c0_502 = arith.constant 0 : index
    %515 = vector.load %arg4[%c1_501, %c0_502] : memref<2x256xf32, #tpu.memory_space<vmem>>, vector<1x256xf32>
    %516 = vector.shape_cast %515 : vector<1x256xf32> to vector<256xf32>
    %517 = vector.shape_cast %516 : vector<256xf32> to vector<1x1x256xf32>
    %518 = vector.broadcast %517 : vector<1x1x256xf32> to vector<8x8x256xf32>
    %519 = arith.addf %514, %518 : vector<8x8x256xf32>
    %cst_503 = arith.constant 0.000000e+00 : f32
    %520 = vector.broadcast %cst_503 : f32 to vector<8x8x256xf32>
    %521 = arith.maximumf %519, %520 : vector<8x8x256xf32>
    %cst_504 = arith.constant dense<0.000000e+00> : vector<8x256xf32>
    %522 = vector.multi_reduction <add>, %521, %cst_504 [0] : vector<8x8x256xf32> to vector<8x256xf32>
    %523 = arith.addf %273, %522 : vector<8x256xf32>
    %cst_505 = arith.constant dense<0.000000e+00> : vector<256xf32>
    %524 = vector.multi_reduction <add>, %523, %cst_505 [0] : vector<8x256xf32> to vector<256xf32>
    %525 = vector.shape_cast %524 : vector<256xf32> to vector<1x256xf32>
    %c0_506 = arith.constant 0 : index
    %c0_507 = arith.constant 0 : index
    %526 = vector.load %arg5[%c0_506, %c0_507] : memref<256x32xf32, #tpu.memory_space<vmem>>, vector<256x32xf32>
    %cst_508 = arith.constant dense<0.000000e+00> : vector<1x32xf32>
    %527 = tpu.matmul %525, %526, %cst_508 {dimension_numbers = #tpu.dot_dimension_numbers<[1], [0], [0], [1], [0, 0, 1, 1], [], []>} : vector<1x256xf32>, vector<256x32xf32>, vector<1x32xf32> -> vector<1x32xf32>
    %c0_509 = arith.constant 0 : index
    %c0_510 = arith.constant 0 : index
    %528 = vector.load %arg6[%c0_509, %c0_510] : memref<1x32xf32, #tpu.memory_space<vmem>>, vector<1x32xf32>
    %529 = arith.mulf %527, %528 : vector<1x32xf32>
    %c0_511 = arith.constant 0 : index
    %c0_512 = arith.constant 0 : index
    %530 = vector.load %arg7[%c0_511, %c0_512] : memref<1x32xf32, #tpu.memory_space<vmem>>, vector<1x32xf32>
    %531 = arith.addf %529, %530 : vector<1x32xf32>
    %cst_513 = arith.constant 0.000000e+00 : f32
    %532 = vector.broadcast %cst_513 : f32 to vector<1x32xf32>
    %533 = arith.maximumf %531, %532 : vector<1x32xf32>
    %c0_514 = arith.constant 0 : index
    %c0_515 = arith.constant 0 : index
    %534 = vector.load %arg8[%c0_514, %c0_515] : memref<32x256xf32, #tpu.memory_space<vmem>>, vector<32x256xf32>
    %cst_516 = arith.constant dense<0.000000e+00> : vector<1x256xf32>
    %535 = tpu.matmul %533, %534, %cst_516 {dimension_numbers = #tpu.dot_dimension_numbers<[1], [0], [0], [1], [0, 0, 1, 1], [], []>} : vector<1x32xf32>, vector<32x256xf32>, vector<1x256xf32> -> vector<1x256xf32>
    %cst_517 = arith.constant 0.000000e+00 : f32
    %536 = vector.broadcast %cst_517 : f32 to vector<1x256xf32>
    %537 = arith.subf %536, %535 : vector<1x256xf32>
    %538 = math.exp %537 : vector<1x256xf32>
    %cst_518 = arith.constant 1.000000e+00 : f32
    %539 = vector.broadcast %cst_518 : f32 to vector<1x256xf32>
    %540 = arith.addf %539, %538 : vector<1x256xf32>
    %cst_519 = arith.constant 1.000000e+00 : f32
    %541 = vector.broadcast %cst_519 : f32 to vector<1x256xf32>
    %542 = arith.divf %541, %540 : vector<1x256xf32>
    %c0_520 = arith.constant 0 : index
    %c0_521 = arith.constant 0 : index
    %c0_522 = arith.constant 0 : index
    %543 = vector.load %arg11[%c0_520, %c0_521, %c0_522] : memref<8x8x256xf32, #tpu.memory_space<vmem>>, vector<8x8x256xf32>
    %544 = arith.subf %543, %521 : vector<8x8x256xf32>
    %545 = vector.shape_cast %542 : vector<1x256xf32> to vector<1x1x256xf32>
    %546 = vector.broadcast %545 : vector<1x1x256xf32> to vector<8x8x256xf32>
    %547 = arith.mulf %544, %546 : vector<8x8x256xf32>
    %548 = arith.addf %521, %547 : vector<8x8x256xf32>
    %c0_523 = arith.constant 0 : index
    %c0_524 = arith.constant 0 : index
    %c0_525 = arith.constant 0 : index
    %c0_526 = arith.constant 0 : index
    %549 = vector.load %arg9[%c0_523, %c0_524, %c0_525, %c0_526] : memref<1x8x8x256xf32, #tpu.memory_space<vmem>>, vector<1x8x8x256xf32>
    %550 = vector.shape_cast %549 : vector<1x8x8x256xf32> to vector<8x8x256xf32>
    %551 = vector.shape_cast %548 : vector<8x8x256xf32> to vector<1x8x8x256xf32>
    tpu.vector_store %arg9[%c0_523, %c0_524, %c0_525, %c0_526], %551 {strides = array<i32>} : memref<1x8x8x256xf32, #tpu.memory_space<vmem>>, vector<1x8x8x256xf32>,
    return
  }
  func.func @transform_0(%arg0: i32) -> (i32, i32, i32, i32) {
    %c0_i32 = arith.constant 0 : i32
    %c0_i32_0 = arith.constant 0 : i32
    %c0_i32_1 = arith.constant 0 : i32
    %c0_i32_2 = arith.constant 0 : i32
    return %arg0, %c0_i32, %c0_i32_0, %c0_i32_1 : i32, i32, i32, i32
  }
  func.func @transform_1(%arg0: i32) -> (i32, i32, i32, i32) {
    %c0_i32 = arith.constant 0 : i32
    %c0_i32_0 = arith.constant 0 : i32
    %c0_i32_1 = arith.constant 0 : i32
    %c0_i32_2 = arith.constant 0 : i32
    %c0_i32_3 = arith.constant 0 : i32
    return %c0_i32, %c0_i32_0, %c0_i32_1, %c0_i32_2 : i32, i32, i32, i32
  }
  func.func @transform_2(%arg0: i32) -> (i32, i32) {
    %c0_i32 = arith.constant 0 : i32
    %c0_i32_0 = arith.constant 0 : i32
    %c0_i32_1 = arith.constant 0 : i32
    return %c0_i32, %c0_i32_0 : i32, i32
  }
  func.func @transform_3(%arg0: i32) -> (i32, i32) {
    %c0_i32 = arith.constant 0 : i32
    %c0_i32_0 = arith.constant 0 : i32
    %c0_i32_1 = arith.constant 0 : i32
    return %c0_i32, %c0_i32_0 : i32, i32
  }
  func.func @transform_4(%arg0: i32) -> (i32, i32) {
    %c0_i32 = arith.constant 0 : i32
    %c0_i32_0 = arith.constant 0 : i32
    %c0_i32_1 = arith.constant 0 : i32
    return %c0_i32, %c0_i32_0 : i32, i32
  }
  func.func @transform_5(%arg0: i32) -> (i32, i32) {
    %c0_i32 = arith.constant 0 : i32
    %c0_i32_0 = arith.constant 0 : i32
    %c0_i32_1 = arith.constant 0 : i32
    return %c0_i32, %c0_i32_0 : i32, i32
  }
  func.func @transform_6(%arg0: i32) -> (i32, i32) {
    %c0_i32 = arith.constant 0 : i32
    %c0_i32_0 = arith.constant 0 : i32
    %c0_i32_1 = arith.constant 0 : i32
    return %c0_i32, %c0_i32_0 : i32, i32
  }
  func.func @transform_7(%arg0: i32) -> (i32, i32) {
    %c0_i32 = arith.constant 0 : i32
    %c0_i32_0 = arith.constant 0 : i32
    %c0_i32_1 = arith.constant 0 : i32
    return %c0_i32, %c0_i32_0 : i32, i32
  }
  func.func @transform_8(%arg0: i32) -> (i32, i32, i32, i32) {
    %c0_i32 = arith.constant 0 : i32
    %c0_i32_0 = arith.constant 0 : i32
    %c0_i32_1 = arith.constant 0 : i32
    %c0_i32_2 = arith.constant 0 : i32
    return %arg0, %c0_i32, %c0_i32_0, %c0_i32_1 : i32, i32, i32, i32
  }
}

</mosaic_0001>

<llo_original>
// kernel: sknet_forward.1
$region0: #{sknet_forward.1}
  #allocation0 [shape = 'u32[]', space=smem, size = 0x4, offset = 0x4, fixed_abs, tag = 'smem constant byte address 0x4 - core index']
  #allocation1 [shape = 'u32[144,128]{1,0:T(1,128)}', space=vmem, size = 0x12000, scoped, tag = 'internal scratch']
  #allocation2 [shape = 'f32[3,12,8,256]{3,2,1,0:T(8,128)}', space=vmem, size = 0x48000, scoped, tag = 'scratch operand']
  #allocation3 [shape = 'f32[8,8,256]{2,1,0:T(8,128)}', space=vmem, size = 0x10000, scoped, tag = 'scratch operand']
  %s0 = inlined_call_operand.vmem [shape: f32[2,8,8,256], index: 0, kind: input, shape index: {}]
  %s1 = inlined_call_operand.vmem [shape: f32[2,27,8,256], index: 1, kind: input, shape index: {}]
  %s2 = inlined_call_operand.vmem [shape: f32[2,256], index: 2, kind: input, shape index: {}]
  %s3 = inlined_call_operand.vmem [shape: f32[2,256], index: 3, kind: input, shape index: {}]
  %s4 = inlined_call_operand.vmem [shape: f32[256,32], index: 4, kind: input, shape index: {}]
  %s5 = inlined_call_operand.vmem [shape: f32[1,32], index: 5, kind: input, shape index: {}]
  %s6 = inlined_call_operand.vmem [shape: f32[1,32], index: 6, kind: input, shape index: {}]
  %s7 = inlined_call_operand.vmem [shape: f32[32,256], index: 7, kind: input, shape index: {}]
  %s8 = inlined_call_operand.vmem [shape: f32[2,8,8,256], index: 8, kind: output, shape index: {}]
  %s9 = sld [smem:[#allocation0]]
  $region65: #{sknet_forward.1} parent=0
    _
  %s11 = ssub.s32 1, %s9
  %s12 = scalar_select 0, %s11, %s9
  loop: start=0, step=1, limit=4
  $region2: #{sknet_forward.1} parent=0 // loop_pre_header
    _
  $region3: #{sknet_forward.1} parent=0 // loop_header
    %s14 = sphi 0, %s18
    %p15 = scmp.ge.s32.totalorder %s14, 4
    %s24 = sphi 0, %s26
    %s27 = sphi 0, %s24
    %s28 = sphi 0, %s27
    %s44 = sphi 0, %s28
    %s48 = sphi 0, %s48
    %s50 = sphi 0, %s48
    %s51 = sphi 0, %s50
    %s65 = sphi 0, %s51
    %s69 = sphi 0, %s69
    %s71 = sphi 0, %s69
    %s72 = sphi 0, %s71
    %s86 = sphi 0, %s72
    %s90 = sphi 0, %s90
    %s92 = sphi 0, %s90
    %s93 = sphi 0, %s92
    %s107 = sphi 0, %s93
    %s111 = sphi 0, %s111
    %s113 = sphi 0, %s111
    %s114 = sphi 0, %s113
    %s128 = sphi 0, %s114
    %s132 = sphi 0, %s132
    %s134 = sphi 0, %s132
    %s135 = sphi 0, %s134
    %s149 = sphi 0, %s135
    %s153 = sphi 0, %s153
    %s155 = sphi 0, %s153
    %s156 = sphi 0, %s155
    %s170 = sphi 0, %s156
    %s174 = sphi 0, %s174
    %s176 = sphi 0, %s174
    %s177 = sphi 0, %s176
    %s191 = sphi 0, %s177
    %s197 = sphi 0, %s199
    %s200 = sphi 0, %s197
    %s201 = sphi 0, %s200
    %s217 = sphi 0, %s201
  $region4: #{sknet_forward.1} parent=0 // loop_header_branch
    %17 = sbr.rel (%p15) target = $region8
  $region5: #{sknet_forward.1} parent=0 // loop_body
    %s19 = ssub.s32 %s14, 1
    %s20 = ssub.s32 %s14, 2
    %s21 = sadd.s32 %s14, 1
    %s22 = ssub.s32 %s14, %s21
    %p23 = scmp.eq.s32.totalorder %s22, 0
    %s25 = sadd.s32 %s24, 1
    %s26 = scalar_select %p23, %s24, %s25
    %p29 = pneg %p23
    %p30 = scmp.eq.s32.totalorder %s14, 1
    %p31 = por %p29, %p30
    %p32 = scmp.ne.s32.totalorder %s24, %s27
    %p33 = scmp.eq.s32.totalorder %s14, 0
    %p34 = por %p32, %p33
    %p35 = scmp.ne.s32.totalorder %s24, %s27
    %p36 = scmp.eq.s32.totalorder %s19, 1
    %p37 = por %p35, %p36
    %p38 = scmp.ne.s32.totalorder %s27, %s28
    %p39 = scmp.eq.s32.totalorder %s19, 0
    %p40 = por %p38, %p39
    %p41 = scmp.ne.s32.totalorder %s27, %s28
    %p42 = scmp.eq.s32.totalorder %s20, 1
    %p43 = por %p41, %p42
    %p45 = scmp.ne.s32.totalorder %s28, %s44
    %p46 = scmp.eq.s32.totalorder %s20, 0
    %p47 = por %p45, %p46
    %s49 = sadd.s32 %s48, 1
    %p52 = scmp.eq.s32.totalorder %s14, 1
    %p53 = scmp.ne.s32.totalorder %s48, %s50
    %p54 = scmp.eq.s32.totalorder %s14, 0
    %p55 = por %p53, %p54
    %p56 = scmp.ne.s32.totalorder %s48, %s50
    %p57 = scmp.eq.s32.totalorder %s19, 1
    %p58 = por %p56, %p57
    %p59 = scmp.ne.s32.totalorder %s50, %s51
    %p60 = scmp.eq.s32.totalorder %s19, 0
    %p61 = por %p59, %p60
    %p62 = scmp.ne.s32.totalorder %s50, %s51
    %p63 = scmp.eq.s32.totalorder %s20, 1
    %p64 = por %p62, %p63
    %p66 = scmp.ne.s32.totalorder %s51, %s65
    %p67 = scmp.eq.s32.totalorder %s20, 0
    %p68 = por %p66, %p67
    %s70 = sadd.s32 %s69, 1
    %p73 = scmp.eq.s32.totalorder %s14, 1
    %p74 = scmp.ne.s32.totalorder %s69, %s71
    %p75 = scmp.eq.s32.totalorder %s14, 0
    %p76 = por %p74, %p75
    %p77 = scmp.ne.s32.totalorder %s69, %s71
    %p78 = scmp.eq.s32.totalorder %s19, 1
    %p79 = por %p77, %p78
    %p80 = scmp.ne.s32.totalorder %s71, %s72
    %p81 = scmp.eq.s32.totalorder %s19, 0
    %p82 = por %p80, %p81
    %p83 = scmp.ne.s32.totalorder %s71, %s72
    %p84 = scmp.eq.s32.totalorder %s20, 1
    %p85 = por %p83, %p84
    %p87 = scmp.ne.s32.totalorder %s72, %s86
    %p88 = scmp.eq.s32.totalorder %s20, 0
    %p89 = por %p87, %p88
    %s91 = sadd.s32 %s90, 1
    %p94 = scmp.eq.s32.totalorder %s14, 1
    %p95 = scmp.ne.s32.totalorder %s90, %s92
    %p96 = scmp.eq.s32.totalorder %s14, 0
    %p97 = por %p95, %p96
    %p98 = scmp.ne.s32.totalorder %s90, %s92
    %p99 = scmp.eq.s32.totalorder %s19, 1
    %p100 = por %p98, %p99
    %p101 = scmp.ne.s32.totalorder %s92, %s93
    %p102 = scmp.eq.s32.totalorder %s19, 0
    %p103 = por %p101, %p102
    %p104 = scmp.ne.s32.totalorder %s92, %s93
    %p105 = scmp.eq.s32.totalorder %s20, 1
    %p106 = por %p104, %p105
    %p108 = scmp.ne.s32.totalorder %s93, %s107
    %p109 = scmp.eq.s32.totalorder %s20, 0
    %p110 = por %p108, %p109
    %s112 = sadd.s32 %s111, 1
    %p115 = scmp.eq.s32.totalorder %s14, 1
    %p116 = scmp.ne.s32.totalorder %s111, %s113
    %p117 = scmp.eq.s32.totalorder %s14, 0
    %p118 = por %p116, %p117
    %p119 = scmp.ne.s32.totalorder %s111, %s113
    %p120 = scmp.eq.s32.totalorder %s19, 1
    %p121 = por %p119, %p120
    %p122 = scmp.ne.s32.totalorder %s113, %s114
    %p123 = scmp.eq.s32.totalorder %s19, 0
    %p124 = por %p122, %p123
    %p125 = scmp.ne.s32.totalorder %s113, %s114
    %p126 = scmp.eq.s32.totalorder %s20, 1
    %p127 = por %p125, %p126
    %p129 = scmp.ne.s32.totalorder %s114, %s128
    %p130 = scmp.eq.s32.totalorder %s20, 0
    %p131 = por %p129, %p130
    %s133 = sadd.s32 %s132, 1
    %p136 = scmp.eq.s32.totalorder %s14, 1
    %p137 = scmp.ne.s32.totalorder %s132, %s134
    %p138 = scmp.eq.s32.totalorder %s14, 0
    %p139 = por %p137, %p138
    %p140 = scmp.ne.s32.totalorder %s132, %s134
    %p141 = scmp.eq.s32.totalorder %s19, 1
    %p142 = por %p140, %p141
    %p143 = scmp.ne.s32.totalorder %s134, %s135
    %p144 = scmp.eq.s32.totalorder %s19, 0
    %p145 = por %p143, %p144
    %p146 = scmp.ne.s32.totalorder %s134, %s135
    %p147 = scmp.eq.s32.totalorder %s20, 1
    %p148 = por %p146, %p147
    %p150 = scmp.ne.s32.totalorder %s135, %s149
    %p151 = scmp.eq.s32.totalorder %s20, 0
    %p152 = por %p150, %p151
    %s154 = sadd.s32 %s153, 1
    %p157 = scmp.eq.s32.totalorder %s14, 1
    %p158 = scmp.ne.s32.totalorder %s153, %s155
    %p159 = scmp.eq.s32.totalorder %s14, 0
    %p160 = por %p158, %p159
    %p161 = scmp.ne.s32.totalorder %s153, %s155
    %p162 = scmp.eq.s32.totalorder %s19, 1
    %p163 = por %p161, %p162
    %p164 = scmp.ne.s32.totalorder %s155, %s156
    %p165 = scmp.eq.s32.totalorder %s19, 0
    %p166 = por %p164, %p165
    %p167 = scmp.ne.s32.totalorder %s155, %s156
    %p168 = scmp.eq.s32.totalorder %s20, 1
    %p169 = por %p167, %p168
    %p171 = scmp.ne.s32.totalorder %s156, %s170
    %p172 = scmp.eq.s32.totalorder %s20, 0
    %p173 = por %p171, %p172
    %s175 = sadd.s32 %s174, 1
    %p178 = scmp.eq.s32.totalorder %s14, 1
    %p179 = scmp.ne.s32.totalorder %s174, %s176
    %p180 = scmp.eq.s32.totalorder %s14, 0
    %p181 = por %p179, %p180
    %p182 = scmp.ne.s32.totalorder %s174, %s176
    %p183 = scmp.eq.s32.totalorder %s19, 1
    %p184 = por %p182, %p183
    %p185 = scmp.ne.s32.totalorder %s176, %s177
    %p186 = scmp.eq.s32.totalorder %s19, 0
    %p187 = por %p185, %p186
    %p188 = scmp.ne.s32.totalorder %s176, %s177
    %p189 = scmp.eq.s32.totalorder %s20, 1
    %p190 = por %p188, %p189
    %p192 = scmp.ne.s32.totalorder %s177, %s191
    %p193 = scmp.eq.s32.totalorder %s20, 0
    %p194 = por %p192, %p193
    %s195 = ssub.s32 %s14, %s21
    %p196 = scmp.eq.s32.totalorder %s195, 0
    %s198 = sadd.s32 %s197, 1
    %s199 = scalar_select %p196, %s197, %s198
    %p202 = pneg %p196
    %p203 = scmp.eq.s32.totalorder %s14, 1
    %p204 = por %p202, %p203
    %p205 = scmp.ne.s32.totalorder %s197, %s200
    %p206 = scmp.eq.s32.totalorder %s14, 0
    %p207 = por %p205, %p206
    %p208 = scmp.ne.s32.totalorder %s197, %s200
    %p209 = scmp.eq.s32.totalorder %s19, 1
    %p210 = por %p208, %p209
    %p211 = scmp.ne.s32.totalorder %s200, %s201
    %p212 = scmp.eq.s32.totalorder %s19, 0
    %p213 = por %p211, %p212
    %p214 = scmp.ne.s32.totalorder %s200, %s201
    %p215 = scmp.eq.s32.totalorder %s20, 1
    %p216 = por %p214, %p215
    %p218 = scmp.ne.s32.totalorder %s201, %s217
    %p219 = scmp.eq.s32.totalorder %s20, 0
    %p220 = por %p218, %p219
    %p221 = scmp.le.s32.totalorder 1, %s14
    %p222 = scmp.lt.s32.totalorder %s14, 3
    %p223 = pnand %p221, %p222
    %p224 = pneg %p223
    // Predicated region
    $region9: #{sknet_forward.1} parent=5 // pred_check
      _
    $region10: #{sknet_forward.1} parent=5 // pred_check_branch
      %226 = sbr.rel (%p223) target = $region12
    $region11: #{sknet_forward.1} parent=5 // pred_region
      %s227 = ssub.s32 %s14, 1
      // Predicated region
      $region13: #{sknet_forward.1} parent=11 // pred_check
        %p228 = pneg %p61
      $region14: #{sknet_forward.1} parent=11 // pred_check_branch
        %230 = sbr.rel (%p228) target = $region16
      $region15: #{sknet_forward.1} parent=11 // pred_region
        _
      $region16: #{sknet_forward.1} parent=11 // pred_fallthru
        _
      // Predicated region
      $region17: #{sknet_forward.1} parent=11 // pred_check
        %p231 = pneg %p82
      $region18: #{sknet_forward.1} parent=11 // pred_check_branch
        %233 = sbr.rel (%p231) target = $region20
      $region19: #{sknet_forward.1} parent=11 // pred_region
        _
      $region20: #{sknet_forward.1} parent=11 // pred_fallthru
        _
      // Predicated region
      $region21: #{sknet_forward.1} parent=11 // pred_check
        %p234 = pneg %p103
      $region22: #{sknet_forward.1} parent=11 // pred_check_branch
        %236 = sbr.rel (%p234) target = $region24
      $region23: #{sknet_forward.1} parent=11 // pred_region
        _
      $region24: #{sknet_forward.1} parent=11 // pred_fallthru
        _
      // Predicated region
      $region25: #{sknet_forward.1} parent=11 // pred_check
        %p237 = pneg %p124
      $region26: #{sknet_forward.1} parent=11 // pred_check_branch
        %239 = sbr.rel (%p237) target = $region28
      $region27: #{sknet_forward.1} parent=11 // pred_region
        _
      $region28: #{sknet_forward.1} parent=11 // pred_fallthru
        _
      // Predicated region
      $region29: #{sknet_forward.1} parent=11 // pred_check
        %p240 = pneg %p145
      $region30: #{sknet_forward.1} parent=11 // pred_check_branch
        %242 = sbr.rel (%p240) target = $region32
      $region31: #{sknet_forward.1} parent=11 // pred_region
        _
      $region32: #{sknet_forward.1} parent=11 // pred_fallthru
        _
      // Predicated region
      $region33: #{sknet_forward.1} parent=11 // pred_check
        %p243 = pneg %p166
      $region34: #{sknet_forward.1} parent=11 // pred_check_branch
        %245 = sbr.rel (%p243) target = $region36
      $region35: #{sknet_forward.1} parent=11 // pred_region
        _
      $region36: #{sknet_forward.1} parent=11 // pred_fallthru
        _
      // Predicated region
      $region37: #{sknet_forward.1} parent=11 // pred_check
        %p246 = pneg %p187
      $region38: #{sknet_forward.1} parent=11 // pred_check_branch
        %248 = sbr.rel (%p246) target = $region40
      $region39: #{sknet_forward.1} parent=11 // pred_region
        _
      $region40: #{sknet_forward.1} parent=11 // pred_fallthru
        _
    $region12: #{sknet_forward.1} parent=5 // pred_fallthru
      _
    %p249 = scmp.lt.s32.totalorder %s14, 2
    // Predicated region
    $region41: #{sknet_forward.1} parent=5 // pred_check
      %p250 = pneg %p249
    $region42: #{sknet_forward.1} parent=5 // pred_check_branch
      %252 = sbr.rel (%p250) target = $region44
    $region43: #{sknet_forward.1} parent=5 // pred_region
      // Predicated region
      $region45: #{sknet_forward.1} parent=43 // pred_check
        %p253 = pneg %p34
      $region46: #{sknet_forward.1} parent=43 // pred_check_branch
        %255 = sbr.rel (%p253) target = $region48
      $region47: #{sknet_forward.1} parent=43 // pred_region
        %p256 = scmp.lt.s32.totalorder %s14, 1
        %s257 = scalar_select %p256, %s14, 1
        %s258 = smul.addr %s257, 16
        %s259 = smul.addr %s258, 8
        %s260 = scalar_lea.vmem %s0, %s259
      $region48: #{sknet_forward.1} parent=43 // pred_fallthru
        _
    $region44: #{sknet_forward.1} parent=5 // pred_fallthru
      _
    %p261 = scmp.le.s32.totalorder 1, %s14
    %p262 = scmp.lt.s32.totalorder %s14, 3
    %p263 = pnand %p261, %p262
    %p264 = pneg %p263
    // Predicated region
    $region49: #{sknet_forward.1} parent=5 // pred_check
      _
    $region50: #{sknet_forward.1} parent=5 // pred_check_branch
      %266 = sbr.rel (%p263) target = $region52
    $region51: #{sknet_forward.1} parent=5 // pred_region
      %s267 = ssub.s32 %s14, 1
      %p268 = scmp.lt.s32.totalorder %s19, 1
      %s269 = scalar_select %p268, %s19, 1
      %s270 = smul.addr %s269, 16
      %s271 = smul.addr %s270, 8
      %s272 = scalar_lea.vmem %s0, %s271
      %p273 = pneg %p40
      %p274 = pneg %p37
      %p275 = pneg %p61
      %p276 = pneg %p58
      %p277 = pneg %p82
      %p278 = pneg %p79
      %p279 = pneg %p103
      %p280 = pneg %p100
      %p281 = pneg %p124
      %p282 = pneg %p121
      %p283 = pneg %p145
      %p284 = pneg %p142
      %p285 = pneg %p166
      %p286 = pneg %p163
      %p287 = pneg %p187
      %p288 = pneg %p184
      %p289 = pneg %p213
      %p290 = pneg %p210
      %p291 = scmp.lt.s32.totalorder %s19, 1
      %s292 = scalar_select %p291, %s19, 1
      %s293 = smul.addr %s292, 16
      %s294 = smul.addr %s293, 8
      %s295 = scalar_lea.vmem %s8, %s294
      %p296 = scmp.lt.s32.totalorder %s19, 1
      %s297 = scalar_select %p296, %s19, 1
      %s298 = smul.addr %s297, 16
      %s299 = smul.addr %s298, 8
      %s300 = scalar_lea.vmem %s0, %s299
      %p301 = scmp.lt.s32.totalorder %s19, 1
      %s302 = scalar_select %p301, %s19, 1
      %s303 = smul.addr %s302, 16
      %s304 = smul.addr %s303, 8
      %s305 = scalar_lea.vmem %s8, %s304
      %306 = vst [vmem:[#allocation2] sm:$0xff] 0.0
      %307 = vst [vmem:[#allocation2 + $0x8] sm:$0xff] 0.0
      %308 = vst [vmem:[#allocation2 + $0x10] sm:$0xff] 0.0
      %309 = vst [vmem:[#allocation2 + $0x18] sm:$0xff] 0.0
      %s310 = scalar_lea.vmem [#allocation2], 160
      %311 = vst [vmem:[%s310] sm:$0xff] 0.0
      %312 = vst [vmem:[%s310 + $0x8] sm:$0xff] 0.0
      %313 = vst [vmem:[%s310 + $0x10] sm:$0xff] 0.0
      %314 = vst [vmem:[%s310 + $0x18] sm:$0xff] 0.0
      %s315 = scalar_lea.vmem [#allocation2], 192
      %316 = vst [vmem:[%s315] sm:$0xff] 0.0
      %317 = vst [vmem:[%s315 + $0x8] sm:$0xff] 0.0
      %318 = vst [vmem:[%s315 + $0x10] sm:$0xff] 0.0
      %319 = vst [vmem:[%s315 + $0x18] sm:$0xff] 0.0
      %s320 = scalar_lea.vmem [#allocation2], 352
      %321 = vst [vmem:[%s320] sm:$0xff] 0.0
      %322 = vst [vmem:[%s320 + $0x8] sm:$0xff] 0.0
      %323 = vst [vmem:[%s320 + $0x10] sm:$0xff] 0.0
      %324 = vst [vmem:[%s320 + $0x18] sm:$0xff] 0.0
      %s325 = scalar_lea.vmem [#allocation2], 384
      %326 = vst [vmem:[%s325] sm:$0xff] 0.0
      %327 = vst [vmem:[%s325 + $0x8] sm:$0xff] 0.0
      %328 = vst [vmem:[%s325 + $0x10] sm:$0xff] 0.0
      %329 = vst [vmem:[%s325 + $0x18] sm:$0xff] 0.0
      %s330 = scalar_lea.vmem [#allocation2], 544
      %331 = vst [vmem:[%s330] sm:$0xff] 0.0
      %332 = vst [vmem:[%s330 + $0x8] sm:$0xff] 0.0
      %333 = vst [vmem:[%s330 + $0x10] sm:$0xff] 0.0
      %334 = vst [vmem:[%s330 + $0x18] sm:$0xff] 0.0
      %v335 = vld [vmem:[%s300] sm:$0xff]
      %v336 = vld [vmem:[%s300 + $0x8] sm:$0xff]
      %v337 = vld [vmem:[%s300 + $0x10] sm:$0xff]
      %v338 = vld [vmem:[%s300 + $0x18] sm:$0xff]
      %v339 = vld [vmem:[%s300 + $0x20] sm:$0xff]
      %v340 = vld [vmem:[%s300 + $0x28] sm:$0xff]
      %v341 = vld [vmem:[%s300 + $0x30] sm:$0xff]
      %v342 = vld [vmem:[%s300 + $0x38] sm:$0xff]
      %v343 = vld [vmem:[%s300 + $0x40] sm:$0xff]
      %v344 = vld [vmem:[%s300 + $0x48] sm:$0xff]
      %v345 = vld [vmem:[%s300 + $0x50] sm:$0xff]
      %v346 = vld [vmem:[%s300 + $0x58] sm:$0xff]
      %v347 = vld [vmem:[%s300 + $0x60] sm:$0xff]
      %v348 = vld [vmem:[%s300 + $0x68] sm:$0xff]
      %v349 = vld [vmem:[%s300 + $0x70] sm:$0xff]
      %v350 = vld [vmem:[%s300 + $0x78] sm:$0xff]
      %s351 = scalar_lea.vmem [#allocation2], 224
      %352 = vst [vmem:[%s351] sm:$0xff] %v335
      %353 = vst [vmem:[%s351 + $0x8] sm:$0xff] %v336
      %354 = vst [vmem:[%s351 + $0x10] sm:$0xff] %v337
      %355 = vst [vmem:[%s351 + $0x18] sm:$0xff] %v338
      %356 = vst [vmem:[%s351 + $0x20] sm:$0xff] %v339
      %357 = vst [vmem:[%s351 + $0x28] sm:$0xff] %v340
      %358 = vst [vmem:[%s351 + $0x30] sm:$0xff] %v341
      %359 = vst [vmem:[%s351 + $0x38] sm:$0xff] %v342
      %360 = vst [vmem:[%s351 + $0x40] sm:$0xff] %v343
      %361 = vst [vmem:[%s351 + $0x48] sm:$0xff] %v344
      %362 = vst [vmem:[%s351 + $0x50] sm:$0xff] %v345
      %363 = vst [vmem:[%s351 + $0x58] sm:$0xff] %v346
      %364 = vst [vmem:[%s351 + $0x60] sm:$0xff] %v347
      %365 = vst [vmem:[%s351 + $0x68] sm:$0xff] %v348
      %366 = vst [vmem:[%s351 + $0x70] sm:$0xff] %v349
      %367 = vst [vmem:[%s351 + $0x78] sm:$0xff] %v350
      %v368 = vld [vmem:[%s300] sm:$0x7f]
      %v369 = vld [vmem:[%s300 + $0x8] sm:$0x7f]
      %v370 = vld [vmem:[%s300 + $0x10] sm:$0x7f]
      %v371 = vld [vmem:[%s300 + $0x18] sm:$0x7f]
      %v372 = vld [vmem:[%s300 + $0x20] sm:$0x7f]
      %v373 = vld [vmem:[%s300 + $0x28] sm:$0x7f]
      %v374 = vld [vmem:[%s300 + $0x30] sm:$0x7f]
      %v375 = vld [vmem:[%s300 + $0x38] sm:$0x7f]
      %v376 = vld [vmem:[%s300 + $0x40] sm:$0x7f]
      %v377 = vld [vmem:[%s300 + $0x48] sm:$0x7f]
      %v378 = vld [vmem:[%s300 + $0x50] sm:$0x7f]
      %v379 = vld [vmem:[%s300 + $0x58] sm:$0x7f]
      %v380 = vld [vmem:[%s300 + $0x60] sm:$0x7f]
      %v381 = vld [vmem:[%s300 + $0x68] sm:$0x7f]
      %v382 = vld [vmem:[%s300 + $0x70] sm:$0x7f]
      %v383 = vld [vmem:[%s300 + $0x78] sm:$0x7f]
      %v400 = vrot.slane %v368, 7
      %v401 = vrot.slane %v369, 7
      %v402 = vrot.slane %v370, 7
      %v403 = vrot.slane %v371, 7
      %v404 = vrot.slane %v372, 7
      %v405 = vrot.slane %v373, 7
      %v406 = vrot.slane %v374, 7
      %v407 = vrot.slane %v375, 7
      %v408 = vrot.slane %v376, 7
      %v409 = vrot.slane %v377, 7
      %v410 = vrot.slane %v378, 7
      %v411 = vrot.slane %v379, 7
      %v412 = vrot.slane %v380, 7
      %v413 = vrot.slane %v381, 7
      %v414 = vrot.slane %v382, 7
      %v415 = vrot.slane %v383, 7
      %s432 = scalar_lea.vmem [#allocation2], 32
      %433 = vst [vmem:[%s432] sm:$0xfe] %v400
      %434 = vst [vmem:[%s432 + $0x8] sm:$0xfe] %v401
      %435 = vst [vmem:[%s432 + $0x10] sm:$0xfe] %v402
      %436 = vst [vmem:[%s432 + $0x18] sm:$0xfe] %v403
      %437 = vst [vmem:[%s432 + $0x20] sm:$0xfe] %v404
      %438 = vst [vmem:[%s432 + $0x28] sm:$0xfe] %v405
      %439 = vst [vmem:[%s432 + $0x30] sm:$0xfe] %v406
      %440 = vst [vmem:[%s432 + $0x38] sm:$0xfe] %v407
      %441 = vst [vmem:[%s432 + $0x40] sm:$0xfe] %v408
      %442 = vst [vmem:[%s432 + $0x48] sm:$0xfe] %v409
      %443 = vst [vmem:[%s432 + $0x50] sm:$0xfe] %v410
      %444 = vst [vmem:[%s432 + $0x58] sm:$0xfe] %v411
      %445 = vst [vmem:[%s432 + $0x60] sm:$0xfe] %v412
      %446 = vst [vmem:[%s432 + $0x68] sm:$0xfe] %v413
      %447 = vst [vmem:[%s432 + $0x70] sm:$0xfe] %v414
      %448 = vst [vmem:[%s432 + $0x78] sm:$0xfe] %v415
      %v449 = vlaneseq
      %vm450 = vcmp.ge.s32.totalorder %v449, 0
      %vm451 = vcmp.lt.s32.totalorder %v449, 256
      %vm452 = vmand %vm450, %vm451
      %453 = vst.msk [vmem:[%s432] ss:$8 sm:$0x3] %vm452, 0.0
      %454 = vst.msk [vmem:[%s432] ss:$8 sm:$0x0] %vm452, 0.0
      %s455 = scalar_lea.vmem %s432, 16 [#allocation2]
      %456 = vst.msk [vmem:[%s455] ss:$8 sm:$0x3] %vm452, 0.0
      %457 = vst.msk [vmem:[%s455] ss:$8 sm:$0x0] %vm452, 0.0
      %s458 = scalar_lea.vmem %s432, 32 [#allocation2]
      %459 = vst.msk [vmem:[%s458] ss:$8 sm:$0x3] %vm452, 0.0
      %460 = vst.msk [vmem:[%s458] ss:$8 sm:$0x0] %vm452, 0.0
      %s461 = scalar_lea.vmem %s432, 48 [#allocation2]
      %462 = vst.msk [vmem:[%s461] ss:$8 sm:$0x3] %vm452, 0.0
      %463 = vst.msk [vmem:[%s461] ss:$8 sm:$0x0] %vm452, 0.0
      %s464 = scalar_lea.vmem %s432, 64 [#allocation2]
      %465 = vst.msk [vmem:[%s464] ss:$8 sm:$0x3] %vm452, 0.0
      %466 = vst.msk [vmem:[%s464] ss:$8 sm:$0x0] %vm452, 0.0
      %s467 = scalar_lea.vmem %s432, 80 [#allocation2]
      %468 = vst.msk [vmem:[%s467] ss:$8 sm:$0x3] %vm452, 0.0
      %469 = vst.msk [vmem:[%s467] ss:$8 sm:$0x0] %vm452, 0.0
      %s470 = scalar_lea.vmem %s432, 96 [#allocation2]
      %471 = vst.msk [vmem:[%s470] ss:$8 sm:$0x3] %vm452, 0.0
      %472 = vst.msk [vmem:[%s470] ss:$8 sm:$0x0] %vm452, 0.0
      %s473 = scalar_lea.vmem %s432, 112 [#allocation2]
      %474 = vst.msk [vmem:[%s473] ss:$8 sm:$0x3] %vm452, 0.0
      %475 = vst.msk [vmem:[%s473] ss:$8 sm:$0x0] %vm452, 0.0
      %v476 = vld [vmem:[%s300] sm:$0xfe]
      %v477 = vld [vmem:[%s300 + $0x8] sm:$0xfe]
      %v478 = vld [vmem:[%s300 + $0x10] sm:$0xfe]
      %v479 = vld [vmem:[%s300 + $0x18] sm:$0xfe]
      %v480 = vld [vmem:[%s300 + $0x20] sm:$0xfe]
      %v481 = vld [vmem:[%s300 + $0x28] sm:$0xfe]
      %v482 = vld [vmem:[%s300 + $0x30] sm:$0xfe]
      %v483 = vld [vmem:[%s300 + $0x38] sm:$0xfe]
      %v484 = vld [vmem:[%s300 + $0x40] sm:$0xfe]
      %v485 = vld [vmem:[%s300 + $0x48] sm:$0xfe]
      %v486 = vld [vmem:[%s300 + $0x50] sm:$0xfe]
      %v487 = vld [vmem:[%s300 + $0x58] sm:$0xfe]
      %v488 = vld [vmem:[%s300 + $0x60] sm:$0xfe]
      %v489 = vld [vmem:[%s300 + $0x68] sm:$0xfe]
      %v490 = vld [vmem:[%s300 + $0x70] sm:$0xfe]
      %v491 = vld [vmem:[%s300 + $0x78] sm:$0xfe]
      %v508 = vrot.slane %v476, 1
      %v509 = vrot.slane %v477, 1
      %v510 = vrot.slane %v478, 1
      %v511 = vrot.slane %v479, 1
      %v512 = vrot.slane %v480, 1
      %v513 = vrot.slane %v481, 1
      %v514 = vrot.slane %v482, 1
      %v515 = vrot.slane %v483, 1
      %v516 = vrot.slane %v484, 1
      %v517 = vrot.slane %v485, 1
      %v518 = vrot.slane %v486, 1
      %v519 = vrot.slane %v487, 1
      %v520 = vrot.slane %v488, 1
      %v521 = vrot.slane %v489, 1
      %v522 = vrot.slane %v490, 1
      %v523 = vrot.slane %v491, 1
      %s540 = scalar_lea.vmem [#allocation2], 416
      %541 = vst [vmem:[%s540] sm:$0x7f] %v508
      %542 = vst [vmem:[%s540 + $0x8] sm:$0x7f] %v509
      %543 = vst [vmem:[%s540 + $0x10] sm:$0x7f] %v510
      %544 = vst [vmem:[%s540 + $0x18] sm:$0x7f] %v511
      %545 = vst [vmem:[%s540 + $0x20] sm:$0x7f] %v512
      %546 = vst [vmem:[%s540 + $0x28] sm:$0x7f] %v513
      %547 = vst [vmem:[%s540 + $0x30] sm:$0x7f] %v514
      %548 = vst [vmem:[%s540 + $0x38] sm:$0x7f] %v515
      %549 = vst [vmem:[%s540 + $0x40] sm:$0x7f] %v516
      %550 = vst [vmem:[%s540 + $0x48] sm:$0x7f] %v517
      %551 = vst [vmem:[%s540 + $0x50] sm:$0x7f] %v518
      %552 = vst [vmem:[%s540 + $0x58] sm:$0x7f] %v519
      %553 = vst [vmem:[%s540 + $0x60] sm:$0x7f] %v520
      %554 = vst [vmem:[%s540 + $0x68] sm:$0x7f] %v521
      %555 = vst [vmem:[%s540 + $0x70] sm:$0x7f] %v522
      %556 = vst [vmem:[%s540 + $0x78] sm:$0x7f] %v523
      %s557 = scalar_lea.vmem %s540, 7 [#allocation2]
      %558 = vst.msk [vmem:[%s557] ss:$8 sm:$0x3] %vm452, 0.0
      %559 = vst.msk [vmem:[%s557] ss:$8 sm:$0x0] %vm452, 0.0
      %s560 = scalar_lea.vmem %s540, 23 [#allocation2]
      %561 = vst.msk [vmem:[%s560] ss:$8 sm:$0x3] %vm452, 0.0
      %562 = vst.msk [vmem:[%s560] ss:$8 sm:$0x0] %vm452, 0.0
      %s563 = scalar_lea.vmem %s540, 39 [#allocation2]
      %564 = vst.msk [vmem:[%s563] ss:$8 sm:$0x3] %vm452, 0.0
      %565 = vst.msk [vmem:[%s563] ss:$8 sm:$0x0] %vm452, 0.0
      %s566 = scalar_lea.vmem %s540, 55 [#allocation2]
      %567 = vst.msk [vmem:[%s566] ss:$8 sm:$0x3] %vm452, 0.0
      %568 = vst.msk [vmem:[%s566] ss:$8 sm:$0x0] %vm452, 0.0
      %s569 = scalar_lea.vmem %s540, 71 [#allocation2]
      %570 = vst.msk [vmem:[%s569] ss:$8 sm:$0x3] %vm452, 0.0
      %571 = vst.msk [vmem:[%s569] ss:$8 sm:$0x0] %vm452, 0.0
      %s572 = scalar_lea.vmem %s540, 87 [#allocation2]
      %573 = vst.msk [vmem:[%s572] ss:$8 sm:$0x3] %vm452, 0.0
      %574 = vst.msk [vmem:[%s572] ss:$8 sm:$0x0] %vm452, 0.0
      %s575 = scalar_lea.vmem %s540, 103 [#allocation2]
      %576 = vst.msk [vmem:[%s575] ss:$8 sm:$0x3] %vm452, 0.0
      %577 = vst.msk [vmem:[%s575] ss:$8 sm:$0x0] %vm452, 0.0
      %s578 = scalar_lea.vmem %s540, 119 [#allocation2]
      %579 = vst.msk [vmem:[%s578] ss:$8 sm:$0x3] %vm452, 0.0
      %580 = vst.msk [vmem:[%s578] ss:$8 sm:$0x0] %vm452, 0.0
      %s581 = scalar_lea.vmem [#allocation2], 16
      %v582 = vld [vmem:[%s581] sm:$0xff]
      %v583 = vld [vmem:[%s581 + $0x8] sm:$0xff]
      %v584 = vld [vmem:[%s581 + $0x10] sm:$0xff]
      %v585 = vld [vmem:[%s581 + $0x18] sm:$0xff]
      %v586 = vld [vmem:[%s581 + $0x20] sm:$0xff]
      %v587 = vld [vmem:[%s581 + $0x28] sm:$0xff]
      %v588 = vld [vmem:[%s581 + $0x30] sm:$0xff]
      %v589 = vld [vmem:[%s581 + $0x38] sm:$0xff]
      %v590 = vld [vmem:[%s581 + $0x40] sm:$0xff]
      %v591 = vld [vmem:[%s581 + $0x48] sm:$0xff]
      %v592 = vld [vmem:[%s581 + $0x50] sm:$0xff]
      %v593 = vld [vmem:[%s581 + $0x58] sm:$0xff]
      %v594 = vld [vmem:[%s581 + $0x60] sm:$0xff]
      %v595 = vld [vmem:[%s581 + $0x68] sm:$0xff]
      %v596 = vld [vmem:[%s581 + $0x70] sm:$0xff]
      %v597 = vld [vmem:[%s581 + $0x78] sm:$0xff]
      %v598 = vld [vmem:[%s1] sm:$0xff]
      %v599 = vld [vmem:[%s1 + $0x8] sm:$0xff]
      %v600 = vmul.f32 %v582, %v598
      %v601 = vmul.f32 %v583, %v599
      %v602 = vmul.f32 %v584, %v598
      %v603 = vmul.f32 %v585, %v599
      %v604 = vmul.f32 %v586, %v598
      %v605 = vmul.f32 %v587, %v599
      %v606 = vmul.f32 %v588, %v598
      %v607 = vmul.f32 %v589, %v599
      %v608 = vmul.f32 %v590, %v598
      %v609 = vmul.f32 %v591, %v599
      %v610 = vmul.f32 %v592, %v598
      %v611 = vmul.f32 %v593, %v599
      %v612 = vmul.f32 %v594, %v598
      %v613 = vmul.f32 %v595, %v599
      %v614 = vmul.f32 %v596, %v598
      %v615 = vmul.f32 %v597, %v599
      %v616 = vld [vmem:[%s432] sm:$0xff]
      %v617 = vld [vmem:[%s432 + $0x8] sm:$0xff]
      %v618 = vld [vmem:[%s432 + $0x10] sm:$0xff]
      %v619 = vld [vmem:[%s432 + $0x18] sm:$0xff]
      %v620 = vld [vmem:[%s432 + $0x20] sm:$0xff]
      %v621 = vld [vmem:[%s432 + $0x28] sm:$0xff]
      %v622 = vld [vmem:[%s432 + $0x30] sm:$0xff]
      %v623 = vld [vmem:[%s432 + $0x38] sm:$0xff]
      %v624 = vld [vmem:[%s432 + $0x40] sm:$0xff]
      %v625 = vld [vmem:[%s432 + $0x48] sm:$0xff]
      %v626 = vld [vmem:[%s432 + $0x50] sm:$0xff]
      %v627 = vld [vmem:[%s432 + $0x58] sm:$0xff]
      %v628 = vld [vmem:[%s432 + $0x60] sm:$0xff]
      %v629 = vld [vmem:[%s432 + $0x68] sm:$0xff]
      %v630 = vld [vmem:[%s432 + $0x70] sm:$0xff]
      %v631 = vld [vmem:[%s432 + $0x78] sm:$0xff]
      %s632 = scalar_lea.vmem %s1, 144
      %v633 = vld [vmem:[%s632] sm:$0xff]
      %v634 = vld [vmem:[%s632 + $0x8] sm:$0xff]
      %v635 = vmul.f32 %v616, %v633
      %v636 = vmul.f32 %v617, %v634
      %v637 = vmul.f32 %v618, %v633
      %v638 = vmul.f32 %v619, %v634
      %v639 = vmul.f32 %v620, %v633
      %v640 = vmul.f32 %v621, %v634
      %v641 = vmul.f32 %v622, %v633
      %v642 = vmul.f32 %v623, %v634
      %v643 = vmul.f32 %v624, %v633
      %v644 = vmul.f32 %v625, %v634
      %v645 = vmul.f32 %v626, %v633
      %v646 = vmul.f32 %v627, %v634
      %v647 = vmul.f32 %v628, %v633
      %v648 = vmul.f32 %v629, %v634
      %v649 = vmul.f32 %v630, %v633
      %v650 = vmul.f32 %v631, %v634
      %v651 = vadd.f32 %v600, %v635
      %v652 = vadd.f32 %v601, %v636
      %v653 = vadd.f32 %v602, %v637
      %v654 = vadd.f32 %v603, %v638
      %v655 = vadd.f32 %v604, %v639
      %v656 = vadd.f32 %v605, %v640
      %v657 = vadd.f32 %v606, %v641
      %v658 = vadd.f32 %v607, %v642
      %v659 = vadd.f32 %v608, %v643
      %v660 = vadd.f32 %v609, %v644
      %v661 = vadd.f32 %v610, %v645
      %v662 = vadd.f32 %v611, %v646
      %v663 = vadd.f32 %v612, %v647
      %v664 = vadd.f32 %v613, %v648
      %v665 = vadd.f32 %v614, %v649
      %v666 = vadd.f32 %v615, %v650
      %s667 = scalar_lea.vmem [#allocation2], 48
      %v668 = vld [vmem:[%s667] sm:$0xff]
      %v669 = vld [vmem:[%s667 + $0x8] sm:$0xff]
      %v670 = vld [vmem:[%s667 + $0x10] sm:$0xff]
      %v671 = vld [vmem:[%s667 + $0x18] sm:$0xff]
      %v672 = vld [vmem:[%s667 + $0x20] sm:$0xff]
      %v673 = vld [vmem:[%s667 + $0x28] sm:$0xff]
      %v674 = vld [vmem:[%s667 + $0x30] sm:$0xff]
      %v675 = vld [vmem:[%s667 + $0x38] sm:$0xff]
      %v676 = vld [vmem:[%s667 + $0x40] sm:$0xff]
      %v677 = vld [vmem:[%s667 + $0x48] sm:$0xff]
      %v678 = vld [vmem:[%s667 + $0x50] sm:$0xff]
      %v679 = vld [vmem:[%s667 + $0x58] sm:$0xff]
      %v680 = vld [vmem:[%s667 + $0x60] sm:$0xff]
      %v681 = vld [vmem:[%s667 + $0x68] sm:$0xff]
      %v682 = vld [vmem:[%s667 + $0x70] sm:$0xff]
      %v683 = vld [vmem:[%s667 + $0x78] sm:$0xff]
      %s684 = scalar_lea.vmem %s1, 288
      %v685 = vld [vmem:[%s684] sm:$0xff]
      %v686 = vld [vmem:[%s684 + $0x8] sm:$0xff]
      %v687 = vmul.f32 %v668, %v685
      %v688 = vmul.f32 %v669, %v686
      %v689 = vmul.f32 %v670, %v685
      %v690 = vmul.f32 %v671, %v686
      %v691 = vmul.f32 %v672, %v685
      %v692 = vmul.f32 %v673, %v686
      %v693 = vmul.f32 %v674, %v685
      %v694 = vmul.f32 %v675, %v686
      %v695 = vmul.f32 %v676, %v685
      %v696 = vmul.f32 %v677, %v686
      %v697 = vmul.f32 %v678, %v685
      %v698 = vmul.f32 %v679, %v686
      %v699 = vmul.f32 %v680, %v685
      %v700 = vmul.f32 %v681, %v686
      %v701 = vmul.f32 %v682, %v685
      %v702 = vmul.f32 %v683, %v686
      %v703 = vadd.f32 %v651, %v687
      %v704 = vadd.f32 %v652, %v688
      %v705 = vadd.f32 %v653, %v689
      %v706 = vadd.f32 %v654, %v690
      %v707 = vadd.f32 %v655, %v691
      %v708 = vadd.f32 %v656, %v692
      %v709 = vadd.f32 %v657, %v693
      %v710 = vadd.f32 %v658, %v694
      %v711 = vadd.f32 %v659, %v695
      %v712 = vadd.f32 %v660, %v696
      %v713 = vadd.f32 %v661, %v697
      %v714 = vadd.f32 %v662, %v698
      %v715 = vadd.f32 %v663, %v699
      %v716 = vadd.f32 %v664, %v700
      %v717 = vadd.f32 %v665, %v701
      %v718 = vadd.f32 %v666, %v702
      %s719 = scalar_lea.vmem [#allocation2], 208
      %v720 = vld [vmem:[%s719] sm:$0xff]
      %v721 = vld [vmem:[%s719 + $0x8] sm:$0xff]
      %v722 = vld [vmem:[%s719 + $0x10] sm:$0xff]
      %v723 = vld [vmem:[%s719 + $0x18] sm:$0xff]
      %v724 = vld [vmem:[%s719 + $0x20] sm:$0xff]
      %v725 = vld [vmem:[%s719 + $0x28] sm:$0xff]
      %v726 = vld [vmem:[%s719 + $0x30] sm:$0xff]
      %v727 = vld [vmem:[%s719 + $0x38] sm:$0xff]
      %v728 = vld [vmem:[%s719 + $0x40] sm:$0xff]
      %v729 = vld [vmem:[%s719 + $0x48] sm:$0xff]
      %v730 = vld [vmem:[%s719 + $0x50] sm:$0xff]
      %v731 = vld [vmem:[%s719 + $0x58] sm:$0xff]
      %v732 = vld [vmem:[%s719 + $0x60] sm:$0xff]
      %v733 = vld [vmem:[%s719 + $0x68] sm:$0xff]
      %v734 = vld [vmem:[%s719 + $0x70] sm:$0xff]
      %v735 = vld [vmem:[%s719 + $0x78] sm:$0xff]
      %s736 = scalar_lea.vmem %s1, 48
      %v737 = vld [vmem:[%s736] sm:$0xff]
      %v738 = vld [vmem:[%s736 + $0x8] sm:$0xff]
      %v739 = vmul.f32 %v720, %v737
      %v740 = vmul.f32 %v721, %v738
      %v741 = vmul.f32 %v722, %v737
      %v742 = vmul.f32 %v723, %v738
      %v743 = vmul.f32 %v724, %v737
      %v744 = vmul.f32 %v725, %v738
      %v745 = vmul.f32 %v726, %v737
      %v746 = vmul.f32 %v727, %v738
      %v747 = vmul.f32 %v728, %v737
      %v748 = vmul.f32 %v729, %v738
      %v749 = vmul.f32 %v730, %v737
      %v750 = vmul.f32 %v731, %v738
      %v751 = vmul.f32 %v732, %v737
      %v752 = vmul.f32 %v733, %v738
      %v753 = vmul.f32 %v734, %v737
      %v754 = vmul.f32 %v735, %v738
      %v755 = vadd.f32 %v703, %v739
      %v756 = vadd.f32 %v704, %v740
      %v757 = vadd.f32 %v705, %v741
      %v758 = vadd.f32 %v706, %v742
      %v759 = vadd.f32 %v707, %v743
      %v760 = vadd.f32 %v708, %v744
      %v761 = vadd.f32 %v709, %v745
      %v762 = vadd.f32 %v710, %v746
      %v763 = vadd.f32 %v711, %v747
      %v764 = vadd.f32 %v712, %v748
      %v765 = vadd.f32 %v713, %v749
      %v766 = vadd.f32 %v714, %v750
      %v767 = vadd.f32 %v715, %v751
      %v768 = vadd.f32 %v716, %v752
      %v769 = vadd.f32 %v717, %v753
      %v770 = vadd.f32 %v718, %v754
      %v771 = vld [vmem:[%s351] sm:$0xff]
      %v772 = vld [vmem:[%s351 + $0x8] sm:$0xff]
      %v773 = vld [vmem:[%s351 + $0x10] sm:$0xff]
      %v774 = vld [vmem:[%s351 + $0x18] sm:$0xff]
      %v775 = vld [vmem:[%s351 + $0x20] sm:$0xff]
      %v776 = vld [vmem:[%s351 + $0x28] sm:$0xff]
      %v777 = vld [vmem:[%s351 + $0x30] sm:$0xff]
      %v778 = vld [vmem:[%s351 + $0x38] sm:$0xff]
      %v779 = vld [vmem:[%s351 + $0x40] sm:$0xff]
      %v780 = vld [vmem:[%s351 + $0x48] sm:$0xff]
      %v781 = vld [vmem:[%s351 + $0x50] sm:$0xff]
      %v782 = vld [vmem:[%s351 + $0x58] sm:$0xff]
      %v783 = vld [vmem:[%s351 + $0x60] sm:$0xff]
      %v784 = vld [vmem:[%s351 + $0x68] sm:$0xff]
      %v785 = vld [vmem:[%s351 + $0x70] sm:$0xff]
      %v786 = vld [vmem:[%s351 + $0x78] sm:$0xff]
      %s787 = scalar_lea.vmem %s1, 192
      %v788 = vld [vmem:[%s787] sm:$0xff]
      %v789 = vld [vmem:[%s787 + $0x8] sm:$0xff]
      %v790 = vmul.f32 %v771, %v788
      %v791 = vmul.f32 %v772, %v789
      %v792 = vmul.f32 %v773, %v788
      %v793 = vmul.f32 %v774, %v789
      %v794 = vmul.f32 %v775, %v788
      %v795 = vmul.f32 %v776, %v789
      %v796 = vmul.f32 %v777, %v788
      %v797 = vmul.f32 %v778, %v789
      %v798 = vmul.f32 %v779, %v788
      %v799 = vmul.f32 %v780, %v789
      %v800 = vmul.f32 %v781, %v788
      %v801 = vmul.f32 %v782, %v789
      %v802 = vmul.f32 %v783, %v788
      %v803 = vmul.f32 %v784, %v789
      %v804 = vmul.f32 %v785, %v788
      %v805 = vmul.f32 %v786, %v789
      %v806 = vadd.f32 %v755, %v790
      %v807 = vadd.f32 %v756, %v791
      %v808 = vadd.f32 %v757, %v792
      %v809 = vadd.f32 %v758, %v793
      %v810 = vadd.f32 %v759, %v794
      %v811 = vadd.f32 %v760, %v795
      %v812 = vadd.f32 %v761, %v796
      %v813 = vadd.f32 %v762, %v797
      %v814 = vadd.f32 %v763, %v798
      %v815 = vadd.f32 %v764, %v799
      %v816 = vadd.f32 %v765, %v800
      %v817 = vadd.f32 %v766, %v801
      %v818 = vadd.f32 %v767, %v802
      %v819 = vadd.f32 %v768, %v803
      %v820 = vadd.f32 %v769, %v804
      %v821 = vadd.f32 %v770, %v805
      %s822 = scalar_lea.vmem [#allocation2], 240
      %v823 = vld [vmem:[%s822] sm:$0xff]
      %v824 = vld [vmem:[%s822 + $0x8] sm:$0xff]
      %v825 = vld [vmem:[%s822 + $0x10] sm:$0xff]
      %v826 = vld [vmem:[%s822 + $0x18] sm:$0xff]
      %v827 = vld [vmem:[%s822 + $0x20] sm:$0xff]
      %v828 = vld [vmem:[%s822 + $0x28] sm:$0xff]
      %v829 = vld [vmem:[%s822 + $0x30] sm:$0xff]
      %v830 = vld [vmem:[%s822 + $0x38] sm:$0xff]
      %v831 = vld [vmem:[%s822 + $0x40] sm:$0xff]
      %v832 = vld [vmem:[%s822 + $0x48] sm:$0xff]
      %v833 = vld [vmem:[%s822 + $0x50] sm:$0xff]
      %v834 = vld [vmem:[%s822 + $0x58] sm:$0xff]
      %v835 = vld [vmem:[%s822 + $0x60] sm:$0xff]
      %v836 = vld [vmem:[%s822 + $0x68] sm:$0xff]
      %v837 = vld [vmem:[%s822 + $0x70] sm:$0xff]
      %v838 = vld [vmem:[%s822 + $0x78] sm:$0xff]
      %s839 = scalar_lea.vmem %s1, 336
      %v840 = vld [vmem:[%s839] sm:$0xff]
      %v841 = vld [vmem:[%s839 + $0x8] sm:$0xff]
      %v842 = vmul.f32 %v823, %v840
      %v843 = vmul.f32 %v824, %v841
      %v844 = vmul.f32 %v825, %v840
      %v845 = vmul.f32 %v826, %v841
      %v846 = vmul.f32 %v827, %v840
      %v847 = vmul.f32 %v828, %v841
      %v848 = vmul.f32 %v829, %v840
      %v849 = vmul.f32 %v830, %v841
      %v850 = vmul.f32 %v831, %v840
      %v851 = vmul.f32 %v832, %v841
      %v852 = vmul.f32 %v833, %v840
      %v853 = vmul.f32 %v834, %v841
      %v854 = vmul.f32 %v835, %v840
      %v855 = vmul.f32 %v836, %v841
      %v856 = vmul.f32 %v837, %v840
      %v857 = vmul.f32 %v838, %v841
      %v858 = vadd.f32 %v806, %v842
      %v859 = vadd.f32 %v807, %v843
      %v860 = vadd.f32 %v808, %v844
      %v861 = vadd.f32 %v809, %v845
      %v862 = vadd.f32 %v810, %v846
      %v863 = vadd.f32 %v811, %v847
      %v864 = vadd.f32 %v812, %v848
      %v865 = vadd.f32 %v813, %v849
      %v866 = vadd.f32 %v814, %v850
      %v867 = vadd.f32 %v815, %v851
      %v868 = vadd.f32 %v816, %v852
      %v869 = vadd.f32 %v817, %v853
      %v870 = vadd.f32 %v818, %v854
      %v871 = vadd.f32 %v819, %v855
      %v872 = vadd.f32 %v820, %v856
      %v873 = vadd.f32 %v821, %v857
      %s874 = scalar_lea.vmem [#allocation2], 400
      %v875 = vld [vmem:[%s874] sm:$0xff]
      %v876 = vld [vmem:[%s874 + $0x8] sm:$0xff]
      %v877 = vld [vmem:[%s874 + $0x10] sm:$0xff]
      %v878 = vld [vmem:[%s874 + $0x18] sm:$0xff]
      %v879 = vld [vmem:[%s874 + $0x20] sm:$0xff]
      %v880 = vld [vmem:[%s874 + $0x28] sm:$0xff]
      %v881 = vld [vmem:[%s874 + $0x30] sm:$0xff]
      %v882 = vld [vmem:[%s874 + $0x38] sm:$0xff]
      %v883 = vld [vmem:[%s874 + $0x40] sm:$0xff]
      %v884 = vld [vmem:[%s874 + $0x48] sm:$0xff]
      %v885 = vld [vmem:[%s874 + $0x50] sm:$0xff]
      %v886 = vld [vmem:[%s874 + $0x58] sm:$0xff]
      %v887 = vld [vmem:[%s874 + $0x60] sm:$0xff]
      %v888 = vld [vmem:[%s874 + $0x68] sm:$0xff]
      %v889 = vld [vmem:[%s874 + $0x70] sm:$0xff]
      %v890 = vld [vmem:[%s874 + $0x78] sm:$0xff]
      %s891 = scalar_lea.vmem %s1, 96
      %v892 = vld [vmem:[%s891] sm:$0xff]
      %v893 = vld [vmem:[%s891 + $0x8] sm:$0xff]
      %v894 = vmul.f32 %v875, %v892
      %v895 = vmul.f32 %v876, %v893
      %v896 = vmul.f32 %v877, %v892
      %v897 = vmul.f32 %v878, %v893
      %v898 = vmul.f32 %v879, %v892
      %v899 = vmul.f32 %v880, %v893
      %v900 = vmul.f32 %v881, %v892
      %v901 = vmul.f32 %v882, %v893
      %v902 = vmul.f32 %v883, %v892
      %v903 = vmul.f32 %v884, %v893
      %v904 = vmul.f32 %v885, %v892
      %v905 = vmul.f32 %v886, %v893
      %v906 = vmul.f32 %v887, %v892
      %v907 = vmul.f32 %v888, %v893
      %v908 = vmul.f32 %v889, %v892
      %v909 = vmul.f32 %v890, %v893
      %v910 = vadd.f32 %v858, %v894
      %v911 = vadd.f32 %v859, %v895
      %v912 = vadd.f32 %v860, %v896
      %v913 = vadd.f32 %v861, %v897
      %v914 = vadd.f32 %v862, %v898
      %v915 = vadd.f32 %v863, %v899
      %v916 = vadd.f32 %v864, %v900
      %v917 = vadd.f32 %v865, %v901
      %v918 = vadd.f32 %v866, %v902
      %v919 = vadd.f32 %v867, %v903
      %v920 = vadd.f32 %v868, %v904
      %v921 = vadd.f32 %v869, %v905
      %v922 = vadd.f32 %v870, %v906
      %v923 = vadd.f32 %v871, %v907
      %v924 = vadd.f32 %v872, %v908
      %v925 = vadd.f32 %v873, %v909
      %v926 = vld [vmem:[%s540] sm:$0xff]
      %v927 = vld [vmem:[%s540 + $0x8] sm:$0xff]
      %v928 = vld [vmem:[%s540 + $0x10] sm:$0xff]
      %v929 = vld [vmem:[%s540 + $0x18] sm:$0xff]
      %v930 = vld [vmem:[%s540 + $0x20] sm:$0xff]
      %v931 = vld [vmem:[%s540 + $0x28] sm:$0xff]
      %v932 = vld [vmem:[%s540 + $0x30] sm:$0xff]
      %v933 = vld [vmem:[%s540 + $0x38] sm:$0xff]
      %v934 = vld [vmem:[%s540 + $0x40] sm:$0xff]
      %v935 = vld [vmem:[%s540 + $0x48] sm:$0xff]
      %v936 = vld [vmem:[%s540 + $0x50] sm:$0xff]
      %v937 = vld [vmem:[%s540 + $0x58] sm:$0xff]
      %v938 = vld [vmem:[%s540 + $0x60] sm:$0xff]
      %v939 = vld [vmem:[%s540 + $0x68] sm:$0xff]
      %v940 = vld [vmem:[%s540 + $0x70] sm:$0xff]
      %v941 = vld [vmem:[%s540 + $0x78] sm:$0xff]
      %s942 = scalar_lea.vmem %s1, 240
      %v943 = vld [vmem:[%s942] sm:$0xff]
      %v944 = vld [vmem:[%s942 + $0x8] sm:$0xff]
      %v945 = vmul.f32 %v926, %v943
      %v946 = vmul.f32 %v927, %v944
      %v947 = vmul.f32 %v928, %v943
      %v948 = vmul.f32 %v929, %v944
      %v949 = vmul.f32 %v930, %v943
      %v950 = vmul.f32 %v931, %v944
      %v951 = vmul.f32 %v932, %v943
      %v952 = vmul.f32 %v933, %v944
      %v953 = vmul.f32 %v934, %v943
      %v954 = vmul.f32 %v935, %v944
      %v955 = vmul.f32 %v936, %v943
      %v956 = vmul.f32 %v937, %v944
      %v957 = vmul.f32 %v938, %v943
      %v958 = vmul.f32 %v939, %v944
      %v959 = vmul.f32 %v940, %v943
      %v960 = vmul.f32 %v941, %v944
      %v961 = vadd.f32 %v910, %v945
      %v962 = vadd.f32 %v911, %v946
      %v963 = vadd.f32 %v912, %v947
      %v964 = vadd.f32 %v913, %v948
      %v965 = vadd.f32 %v914, %v949
      %v966 = vadd.f32 %v915, %v950
      %v967 = vadd.f32 %v916, %v951
      %v968 = vadd.f32 %v917, %v952
      %v969 = vadd.f32 %v918, %v953
      %v970 = vadd.f32 %v919, %v954
      %v971 = vadd.f32 %v920, %v955
      %v972 = vadd.f32 %v921, %v956
      %v973 = vadd.f32 %v922, %v957
      %v974 = vadd.f32 %v923, %v958
      %v975 = vadd.f32 %v924, %v959
      %v976 = vadd.f32 %v925, %v960
      %s977 = scalar_lea.vmem [#allocation2], 432
      %v978 = vld [vmem:[%s977] sm:$0xff]
      %v979 = vld [vmem:[%s977 + $0x8] sm:$0xff]
      %v980 = vld [vmem:[%s977 + $0x10] sm:$0xff]
      %v981 = vld [vmem:[%s977 + $0x18] sm:$0xff]
      %v982 = vld [vmem:[%s977 + $0x20] sm:$0xff]
      %v983 = vld [vmem:[%s977 + $0x28] sm:$0xff]
      %v984 = vld [vmem:[%s977 + $0x30] sm:$0xff]
      %v985 = vld [vmem:[%s977 + $0x38] sm:$0xff]
      %v986 = vld [vmem:[%s977 + $0x40] sm:$0xff]
      %v987 = vld [vmem:[%s977 + $0x48] sm:$0xff]
      %v988 = vld [vmem:[%s977 + $0x50] sm:$0xff]
      %v989 = vld [vmem:[%s977 + $0x58] sm:$0xff]
      %v990 = vld [vmem:[%s977 + $0x60] sm:$0xff]
      %v991 = vld [vmem:[%s977 + $0x68] sm:$0xff]
      %v992 = vld [vmem:[%s977 + $0x70] sm:$0xff]
      %v993 = vld [vmem:[%s977 + $0x78] sm:$0xff]
      %s994 = scalar_lea.vmem %s1, 384
      %v995 = vld [vmem:[%s994] sm:$0xff]
      %v996 = vld [vmem:[%s994 + $0x8] sm:$0xff]
      %v997 = vmul.f32 %v978, %v995
      %v998 = vmul.f32 %v979, %v996
      %v999 = vmul.f32 %v980, %v995
      %v1000 = vmul.f32 %v981, %v996
      %v1001 = vmul.f32 %v982, %v995
      %v1002 = vmul.f32 %v983, %v996
      %v1003 = vmul.f32 %v984, %v995
      %v1004 = vmul.f32 %v985, %v996
      %v1005 = vmul.f32 %v986, %v995
      %v1006 = vmul.f32 %v987, %v996
      %v1007 = vmul.f32 %v988, %v995
      %v1008 = vmul.f32 %v989, %v996
      %v1009 = vmul.f32 %v990, %v995
      %v1010 = vmul.f32 %v991, %v996
      %v1011 = vmul.f32 %v992, %v995
      %v1012 = vmul.f32 %v993, %v996
      %v1013 = vadd.f32 %v961, %v997
      %v1014 = vadd.f32 %v962, %v998
      %v1015 = vadd.f32 %v963, %v999
      %v1016 = vadd.f32 %v964, %v1000
      %v1017 = vadd.f32 %v965, %v1001
      %v1018 = vadd.f32 %v966, %v1002
      %v1019 = vadd.f32 %v967, %v1003
      %v1020 = vadd.f32 %v968, %v1004
      %v1021 = vadd.f32 %v969, %v1005
      %v1022 = vadd.f32 %v970, %v1006
      %v1023 = vadd.f32 %v971, %v1007
      %v1024 = vadd.f32 %v972, %v1008
      %v1025 = vadd.f32 %v973, %v1009
      %v1026 = vadd.f32 %v974, %v1010
      %v1027 = vadd.f32 %v975, %v1011
      %v1028 = vadd.f32 %v976, %v1012
      %1029 = vrot.lane.b32.xlu0 %v1013, 32
      %v1030 = vpop.permute.xlu0 %1029
      %1031 = vrot.lane.b32.xlu0 %v1015, 32
      %v1032 = vpop.permute.xlu0 %1031
      %1033 = vrot.lane.b32.xlu0 %v1017, 32
      %v1034 = vpop.permute.xlu0 %1033
      %1035 = vrot.lane.b32.xlu0 %v1019, 32
      %v1036 = vpop.permute.xlu0 %1035
      %1037 = vrot.lane.b32.xlu0 %v1021, 32
      %v1038 = vpop.permute.xlu0 %1037
      %1039 = vrot.lane.b32.xlu0 %v1023, 32
      %v1040 = vpop.permute.xlu0 %1039
      %1041 = vrot.lane.b32.xlu0 %v1025, 32
      %v1042 = vpop.permute.xlu0 %1041
      %1043 = vrot.lane.b32.xlu0 %v1027, 32
      %v1044 = vpop.permute.xlu0 %1043
      %1045 = vrot.lane.b32.xlu0 %v1014, 32
      %v1046 = vpop.permute.xlu0 %1045
      %1047 = vrot.lane.b32.xlu0 %v1016, 32
      %v1048 = vpop.permute.xlu0 %1047
      %1049 = vrot.lane.b32.xlu0 %v1018, 32
      %v1050 = vpop.permute.xlu0 %1049
      %1051 = vrot.lane.b32.xlu0 %v1020, 32
      %v1052 = vpop.permute.xlu0 %1051
      %1053 = vrot.lane.b32.xlu0 %v1022, 32
      %v1054 = vpop.permute.xlu0 %1053
      %1055 = vrot.lane.b32.xlu0 %v1024, 32
      %v1056 = vpop.permute.xlu0 %1055
      %1057 = vrot.lane.b32.xlu0 %v1026, 32
      %v1058 = vpop.permute.xlu0 %1057
      %1059 = vrot.lane.b32.xlu0 %v1028, 32
      %v1060 = vpop.permute.xlu0 %1059
      %v1061 = vlaneseq
      %v1062 = vand.u32 %v1061, 127
      %vm1063 = vcmp.lt.s32.totalorder %v1062, 32
      %v1064 = vsel %vm1063, %v1030, %v1046
      %v1065 = vsel %vm1063, %v1032, %v1048
      %v1066 = vsel %vm1063, %v1034, %v1050
      %v1067 = vsel %vm1063, %v1036, %v1052
      %v1068 = vsel %vm1063, %v1038, %v1054
      %v1069 = vsel %vm1063, %v1040, %v1056
      %v1070 = vsel %vm1063, %v1042, %v1058
      %v1071 = vsel %vm1063, %v1044, %v1060
      %v1072 = vsel %vm1063, %v1046, %v1030
      %v1073 = vsel %vm1063, %v1048, %v1032
      %v1074 = vsel %vm1063, %v1050, %v1034
      %v1075 = vsel %vm1063, %v1052, %v1036
      %v1076 = vsel %vm1063, %v1054, %v1038
      %v1077 = vsel %vm1063, %v1056, %v1040
      %v1078 = vsel %vm1063, %v1058, %v1042
      %v1079 = vsel %vm1063, %v1060, %v1044
      %s1080 = scalar_lea.vmem %s1, 32
      %v1081 = vld [vmem:[%s1080] sm:$0xff]
      %v1082 = vld [vmem:[%s1080 + $0x8] sm:$0xff]
      %v1083 = vmul.f32 %v582, %v1081
      %v1084 = vmul.f32 %v583, %v1082
      %v1085 = vmul.f32 %v584, %v1081
      %v1086 = vmul.f32 %v585, %v1082
      %v1087 = vmul.f32 %v586, %v1081
      %v1088 = vmul.f32 %v587, %v1082
      %v1089 = vmul.f32 %v588, %v1081
      %v1090 = vmul.f32 %v589, %v1082
      %v1091 = vmul.f32 %v590, %v1081
      %v1092 = vmul.f32 %v591, %v1082
      %v1093 = vmul.f32 %v592, %v1081
      %v1094 = vmul.f32 %v593, %v1082
      %v1095 = vmul.f32 %v594, %v1081
      %v1096 = vmul.f32 %v595, %v1082
      %v1097 = vmul.f32 %v596, %v1081
      %v1098 = vmul.f32 %v597, %v1082
      %s1099 = scalar_lea.vmem %s1, 176
      %v1100 = vld [vmem:[%s1099] sm:$0xff]
      %v1101 = vld [vmem:[%s1099 + $0x8] sm:$0xff]
      %v1102 = vmul.f32 %v616, %v1100
      %v1103 = vmul.f32 %v617, %v1101
      %v1104 = vmul.f32 %v618, %v1100
      %v1105 = vmul.f32 %v619, %v1101
      %v1106 = vmul.f32 %v620, %v1100
      %v1107 = vmul.f32 %v621, %v1101
      %v1108 = vmul.f32 %v622, %v1100
      %v1109 = vmul.f32 %v623, %v1101
      %v1110 = vmul.f32 %v624, %v1100
      %v1111 = vmul.f32 %v625, %v1101
      %v1112 = vmul.f32 %v626, %v1100
      %v1113 = vmul.f32 %v627, %v1101
      %v1114 = vmul.f32 %v628, %v1100
      %v1115 = vmul.f32 %v629, %v1101
      %v1116 = vmul.f32 %v630, %v1100
      %v1117 = vmul.f32 %v631, %v1101
      %v1118 = vadd.f32 %v1083, %v1102
      %v1119 = vadd.f32 %v1084, %v1103
      %v1120 = vadd.f32 %v1085, %v1104
      %v1121 = vadd.f32 %v1086, %v1105
      %v1122 = vadd.f32 %v1087, %v1106
      %v1123 = vadd.f32 %v1088, %v1107
      %v1124 = vadd.f32 %v1089, %v1108
      %v1125 = vadd.f32 %v1090, %v1109
      %v1126 = vadd.f32 %v1091, %v1110
      %v1127 = vadd.f32 %v1092, %v1111
      %v1128 = vadd.f32 %v1093, %v1112
      %v1129 = vadd.f32 %v1094, %v1113
      %v1130 = vadd.f32 %v1095, %v1114
      %v1131 = vadd.f32 %v1096, %v1115
      %v1132 = vadd.f32 %v1097, %v1116
      %v1133 = vadd.f32 %v1098, %v1117
      %s1134 = scalar_lea.vmem %s1, 320
      %v1135 = vld [vmem:[%s1134] sm:$0xff]
      %v1136 = vld [vmem:[%s1134 + $0x8] sm:$0xff]
      %v1137 = vmul.f32 %v668, %v1135
      %v1138 = vmul.f32 %v669, %v1136
      %v1139 = vmul.f32 %v670, %v1135
      %v1140 = vmul.f32 %v671, %v1136
      %v1141 = vmul.f32 %v672, %v1135
      %v1142 = vmul.f32 %v673, %v1136
      %v1143 = vmul.f32 %v674, %v1135
      %v1144 = vmul.f32 %v675, %v1136
      %v1145 = vmul.f32 %v676, %v1135
      %v1146 = vmul.f32 %v677, %v1136
      %v1147 = vmul.f32 %v678, %v1135
      %v1148 = vmul.f32 %v679, %v1136
      %v1149 = vmul.f32 %v680, %v1135
      %v1150 = vmul.f32 %v681, %v1136
      %v1151 = vmul.f32 %v682, %v1135
      %v1152 = vmul.f32 %v683, %v1136
      %v1153 = vadd.f32 %v1118, %v1137
      %v1154 = vadd.f32 %v1119, %v1138
      %v1155 = vadd.f32 %v1120, %v1139
      %v1156 = vadd.f32 %v1121, %v1140
      %v1157 = vadd.f32 %v1122, %v1141
      %v1158 = vadd.f32 %v1123, %v1142
      %v1159 = vadd.f32 %v1124, %v1143
      %v1160 = vadd.f32 %v1125, %v1144
      %v1161 = vadd.f32 %v1126, %v1145
      %v1162 = vadd.f32 %v1127, %v1146
      %v1163 = vadd.f32 %v1128, %v1147
      %v1164 = vadd.f32 %v1129, %v1148
      %v1165 = vadd.f32 %v1130, %v1149
      %v1166 = vadd.f32 %v1131, %v1150
      %v1167 = vadd.f32 %v1132, %v1151
      %v1168 = vadd.f32 %v1133, %v1152
      %s1169 = scalar_lea.vmem %s1, 80
      %v1170 = vld [vmem:[%s1169] sm:$0xff]
      %v1171 = vld [vmem:[%s1169 + $0x8] sm:$0xff]
      %v1172 = vmul.f32 %v720, %v1170
      %v1173 = vmul.f32 %v721, %v1171
      %v1174 = vmul.f32 %v722, %v1170
      %v1175 = vmul.f32 %v723, %v1171
      %v1176 = vmul.f32 %v724, %v1170
      %v1177 = vmul.f32 %v725, %v1171
      %v1178 = vmul.f32 %v726, %v1170
      %v1179 = vmul.f32 %v727, %v1171
      %v1180 = vmul.f32 %v728, %v1170
      %v1181 = vmul.f32 %v729, %v1171
      %v1182 = vmul.f32 %v730, %v1170
      %v1183 = vmul.f32 %v731, %v1171
      %v1184 = vmul.f32 %v732, %v1170
      %v1185 = vmul.f32 %v733, %v1171
      %v1186 = vmul.f32 %v734, %v1170
      %v1187 = vmul.f32 %v735, %v1171
      %v1188 = vadd.f32 %v1153, %v1172
      %v1189 = vadd.f32 %v1154, %v1173
      %v1190 = vadd.f32 %v1155, %v1174
      %v1191 = vadd.f32 %v1156, %v1175
      %v1192 = vadd.f32 %v1157, %v1176
      %v1193 = vadd.f32 %v1158, %v1177
      %v1194 = vadd.f32 %v1159, %v1178
      %v1195 = vadd.f32 %v1160, %v1179
      %v1196 = vadd.f32 %v1161, %v1180
      %v1197 = vadd.f32 %v1162, %v1181
      %v1198 = vadd.f32 %v1163, %v1182
      %v1199 = vadd.f32 %v1164, %v1183
      %v1200 = vadd.f32 %v1165, %v1184
      %v1201 = vadd.f32 %v1166, %v1185
      %v1202 = vadd.f32 %v1167, %v1186
      %v1203 = vadd.f32 %v1168, %v1187
      %s1204 = scalar_lea.vmem %s1, 224
      %v1205 = vld [vmem:[%s1204] sm:$0xff]
      %v1206 = vld [vmem:[%s1204 + $0x8] sm:$0xff]
      %v1207 = vmul.f32 %v771, %v1205
      %v1208 = vmul.f32 %v772, %v1206
      %v1209 = vmul.f32 %v773, %v1205
      %v1210 = vmul.f32 %v774, %v1206
      %v1211 = vmul.f32 %v775, %v1205
      %v1212 = vmul.f32 %v776, %v1206
      %v1213 = vmul.f32 %v777, %v1205
      %v1214 = vmul.f32 %v778, %v1206
      %v1215 = vmul.f32 %v779, %v1205
      %v1216 = vmul.f32 %v780, %v1206
      %v1217 = vmul.f32 %v781, %v1205
      %v1218 = vmul.f32 %v782, %v1206
      %v1219 = vmul.f32 %v783, %v1205
      %v1220 = vmul.f32 %v784, %v1206
      %v1221 = vmul.f32 %v785, %v1205
      %v1222 = vmul.f32 %v786, %v1206
      %v1223 = vadd.f32 %v1188, %v1207
      %v1224 = vadd.f32 %v1189, %v1208
      %v1225 = vadd.f32 %v1190, %v1209
      %v1226 = vadd.f32 %v1191, %v1210
      %v1227 = vadd.f32 %v1192, %v1211
      %v1228 = vadd.f32 %v1193, %v1212
      %v1229 = vadd.f32 %v1194, %v1213
      %v1230 = vadd.f32 %v1195, %v1214
      %v1231 = vadd.f32 %v1196, %v1215
      %v1232 = vadd.f32 %v1197, %v1216
      %v1233 = vadd.f32 %v1198, %v1217
      %v1234 = vadd.f32 %v1199, %v1218
      %v1235 = vadd.f32 %v1200, %v1219
      %v1236 = vadd.f32 %v1201, %v1220
      %v1237 = vadd.f32 %v1202, %v1221
      %v1238 = vadd.f32 %v1203, %v1222
      %s1239 = scalar_lea.vmem %s1, 368
      %v1240 = vld [vmem:[%s1239] sm:$0xff]
      %v1241 = vld [vmem:[%s1239 + $0x8] sm:$0xff]
      %v1242 = vmul.f32 %v823, %v1240
      %v1243 = vmul.f32 %v824, %v1241
      %v1244 = vmul.f32 %v825, %v1240
      %v1245 = vmul.f32 %v826, %v1241
      %v1246 = vmul.f32 %v827, %v1240
      %v1247 = vmul.f32 %v828, %v1241
      %v1248 = vmul.f32 %v829, %v1240
      %v1249 = vmul.f32 %v830, %v1241
      %v1250 = vmul.f32 %v831, %v1240
      %v1251 = vmul.f32 %v832, %v1241
      %v1252 = vmul.f32 %v833, %v1240
      %v1253 = vmul.f32 %v834, %v1241
      %v1254 = vmul.f32 %v835, %v1240
      %v1255 = vmul.f32 %v836, %v1241
      %v1256 = vmul.f32 %v837, %v1240
      %v1257 = vmul.f32 %v838, %v1241
      %v1258 = vadd.f32 %v1223, %v1242
      %v1259 = vadd.f32 %v1224, %v1243
      %v1260 = vadd.f32 %v1225, %v1244
      %v1261 = vadd.f32 %v1226, %v1245
      %v1262 = vadd.f32 %v1227, %v1246
      %v1263 = vadd.f32 %v1228, %v1247
      %v1264 = vadd.f32 %v1229, %v1248
      %v1265 = vadd.f32 %v1230, %v1249
      %v1266 = vadd.f32 %v1231, %v1250
      %v1267 = vadd.f32 %v1232, %v1251
      %v1268 = vadd.f32 %v1233, %v1252
      %v1269 = vadd.f32 %v1234, %v1253
      %v1270 = vadd.f32 %v1235, %v1254
      %v1271 = vadd.f32 %v1236, %v1255
      %v1272 = vadd.f32 %v1237, %v1256
      %v1273 = vadd.f32 %v1238, %v1257
      %s1274 = scalar_lea.vmem %s1, 128
      %v1275 = vld [vmem:[%s1274] sm:$0xff]
      %v1276 = vld [vmem:[%s1274 + $0x8] sm:$0xff]
      %v1277 = vmul.f32 %v875, %v1275
      %v1278 = vmul.f32 %v876, %v1276
      %v1279 = vmul.f32 %v877, %v1275
      %v1280 = vmul.f32 %v878, %v1276
      %v1281 = vmul.f32 %v879, %v1275
      %v1282 = vmul.f32 %v880, %v1276
      %v1283 = vmul.f32 %v881, %v1275
      %v1284 = vmul.f32 %v882, %v1276
      %v1285 = vmul.f32 %v883, %v1275
      %v1286 = vmul.f32 %v884, %v1276
      %v1287 = vmul.f32 %v885, %v1275
      %v1288 = vmul.f32 %v886, %v1276
      %v1289 = vmul.f32 %v887, %v1275
      %v1290 = vmul.f32 %v888, %v1276
      %v1291 = vmul.f32 %v889, %v1275
      %v1292 = vmul.f32 %v890, %v1276
      %v1293 = vadd.f32 %v1258, %v1277
      %v1294 = vadd.f32 %v1259, %v1278
      %v1295 = vadd.f32 %v1260, %v1279
      %v1296 = vadd.f32 %v1261, %v1280
      %v1297 = vadd.f32 %v1262, %v1281
      %v1298 = vadd.f32 %v1263, %v1282
      %v1299 = vadd.f32 %v1264, %v1283
      %v1300 = vadd.f32 %v1265, %v1284
      %v1301 = vadd.f32 %v1266, %v1285
      %v1302 = vadd.f32 %v1267, %v1286
      %v1303 = vadd.f32 %v1268, %v1287
      %v1304 = vadd.f32 %v1269, %v1288
      %v1305 = vadd.f32 %v1270, %v1289
      %v1306 = vadd.f32 %v1271, %v1290
      %v1307 = vadd.f32 %v1272, %v1291
      %v1308 = vadd.f32 %v1273, %v1292
      %s1309 = scalar_lea.vmem %s1, 272
      %v1310 = vld [vmem:[%s1309] sm:$0xff]
      %v1311 = vld [vmem:[%s1309 + $0x8] sm:$0xff]
      %v1312 = vmul.f32 %v926, %v1310
      %v1313 = vmul.f32 %v927, %v1311
      %v1314 = vmul.f32 %v928, %v1310
      %v1315 = vmul.f32 %v929, %v1311
      %v1316 = vmul.f32 %v930, %v1310
      %v1317 = vmul.f32 %v931, %v1311
      %v1318 = vmul.f32 %v932, %v1310
      %v1319 = vmul.f32 %v933, %v1311
      %v1320 = vmul.f32 %v934, %v1310
      %v1321 = vmul.f32 %v935, %v1311
      %v1322 = vmul.f32 %v936, %v1310
      %v1323 = vmul.f32 %v937, %v1311
      %v1324 = vmul.f32 %v938, %v1310
      %v1325 = vmul.f32 %v939, %v1311
      %v1326 = vmul.f32 %v940, %v1310
      %v1327 = vmul.f32 %v941, %v1311
      %v1328 = vadd.f32 %v1293, %v1312
      %v1329 = vadd.f32 %v1294, %v1313
      %v1330 = vadd.f32 %v1295, %v1314
      %v1331 = vadd.f32 %v1296, %v1315
      %v1332 = vadd.f32 %v1297, %v1316
      %v1333 = vadd.f32 %v1298, %v1317
      %v1334 = vadd.f32 %v1299, %v1318
      %v1335 = vadd.f32 %v1300, %v1319
      %v1336 = vadd.f32 %v1301, %v1320
      %v1337 = vadd.f32 %v1302, %v1321
      %v1338 = vadd.f32 %v1303, %v1322
      %v1339 = vadd.f32 %v1304, %v1323
      %v1340 = vadd.f32 %v1305, %v1324
      %v1341 = vadd.f32 %v1306, %v1325
      %v1342 = vadd.f32 %v1307, %v1326
      %v1343 = vadd.f32 %v1308, %v1327
      %s1344 = scalar_lea.vmem %s1, 416
      %v1345 = vld [vmem:[%s1344] sm:$0xff]
      %v1346 = vld [vmem:[%s1344 + $0x8] sm:$0xff]
      %v1347 = vmul.f32 %v978, %v1345
      %v1348 = vmul.f32 %v979, %v1346
      %v1349 = vmul.f32 %v980, %v1345
      %v1350 = vmul.f32 %v981, %v1346
      %v1351 = vmul.f32 %v982, %v1345
      %v1352 = vmul.f32 %v983, %v1346
      %v1353 = vmul.f32 %v984, %v1345
      %v1354 = vmul.f32 %v985, %v1346
      %v1355 = vmul.f32 %v986, %v1345
      %v1356 = vmul.f32 %v987, %v1346
      %v1357 = vmul.f32 %v988, %v1345
      %v1358 = vmul.f32 %v989, %v1346
      %v1359 = vmul.f32 %v990, %v1345
      %v1360 = vmul.f32 %v991, %v1346
      %v1361 = vmul.f32 %v992, %v1345
      %v1362 = vmul.f32 %v993, %v1346
      %v1363 = vadd.f32 %v1328, %v1347
      %v1364 = vadd.f32 %v1329, %v1348
      %v1365 = vadd.f32 %v1330, %v1349
      %v1366 = vadd.f32 %v1331, %v1350
      %v1367 = vadd.f32 %v1332, %v1351
      %v1368 = vadd.f32 %v1333, %v1352
      %v1369 = vadd.f32 %v1334, %v1353
      %v1370 = vadd.f32 %v1335, %v1354
      %v1371 = vadd.f32 %v1336, %v1355
      %v1372 = vadd.f32 %v1337, %v1356
      %v1373 = vadd.f32 %v1338, %v1357
      %v1374 = vadd.f32 %v1339, %v1358
      %v1375 = vadd.f32 %v1340, %v1359
      %v1376 = vadd.f32 %v1341, %v1360
      %v1377 = vadd.f32 %v1342, %v1361
      %v1378 = vadd.f32 %v1343, %v1362
      %1379 = vrot.lane.b32.xlu0 %v1363, 96
      %v1380 = vpop.permute.xlu0 %1379
      %1381 = vrot.lane.b32.xlu0 %v1365, 96
      %v1382 = vpop.permute.xlu0 %1381
      %1383 = vrot.lane.b32.xlu0 %v1367, 96
      %v1384 = vpop.permute.xlu0 %1383
      %1385 = vrot.lane.b32.xlu0 %v1369, 96
      %v1386 = vpop.permute.xlu0 %1385
      %1387 = vrot.lane.b32.xlu0 %v1371, 96
      %v1388 = vpop.permute.xlu0 %1387
      %1389 = vrot.lane.b32.xlu0 %v1373, 96
      %v1390 = vpop.permute.xlu0 %1389
      %1391 = vrot.lane.b32.xlu0 %v1375, 96
      %v1392 = vpop.permute.xlu0 %1391
      %1393 = vrot.lane.b32.xlu0 %v1377, 96
      %v1394 = vpop.permute.xlu0 %1393
      %1395 = vrot.lane.b32.xlu0 %v1364, 96
      %v1396 = vpop.permute.xlu0 %1395
      %1397 = vrot.lane.b32.xlu0 %v1366, 96
      %v1398 = vpop.permute.xlu0 %1397
      %1399 = vrot.lane.b32.xlu0 %v1368, 96
      %v1400 = vpop.permute.xlu0 %1399
      %1401 = vrot.lane.b32.xlu0 %v1370, 96
      %v1402 = vpop.permute.xlu0 %1401
      %1403 = vrot.lane.b32.xlu0 %v1372, 96
      %v1404 = vpop.permute.xlu0 %1403
      %1405 = vrot.lane.b32.xlu0 %v1374, 96
      %v1406 = vpop.permute.xlu0 %1405
      %1407 = vrot.lane.b32.xlu0 %v1376, 96
      %v1408 = vpop.permute.xlu0 %1407
      %1409 = vrot.lane.b32.xlu0 %v1378, 96
      %v1410 = vpop.permute.xlu0 %1409
      %vm1411 = vcmp.lt.s32.totalorder %v1062, 96
      %v1412 = vsel %vm1411, %v1380, %v1396
      %v1413 = vsel %vm1411, %v1382, %v1398
      %v1414 = vsel %vm1411, %v1384, %v1400
      %v1415 = vsel %vm1411, %v1386, %v1402
      %v1416 = vsel %vm1411, %v1388, %v1404
      %v1417 = vsel %vm1411, %v1390, %v1406
      %v1418 = vsel %vm1411, %v1392, %v1408
      %v1419 = vsel %vm1411, %v1394, %v1410
      %v1420 = vsel %vm1411, %v1396, %v1380
      %v1421 = vsel %vm1411, %v1398, %v1382
      %v1422 = vsel %vm1411, %v1400, %v1384
      %v1423 = vsel %vm1411, %v1402, %v1386
      %v1424 = vsel %vm1411, %v1404, %v1388
      %v1425 = vsel %vm1411, %v1406, %v1390
      %v1426 = vsel %vm1411, %v1408, %v1392
      %v1427 = vsel %vm1411, %v1410, %v1394
      %v1428 = vadd.f32 %v1072, %v1412
      %v1429 = vadd.f32 %v1064, %v1420
      %v1430 = vadd.f32 %v1073, %v1413
      %v1431 = vadd.f32 %v1065, %v1421
      %v1432 = vadd.f32 %v1074, %v1414
      %v1433 = vadd.f32 %v1066, %v1422
      %v1434 = vadd.f32 %v1075, %v1415
      %v1435 = vadd.f32 %v1067, %v1423
      %v1436 = vadd.f32 %v1076, %v1416
      %v1437 = vadd.f32 %v1068, %v1424
      %v1438 = vadd.f32 %v1077, %v1417
      %v1439 = vadd.f32 %v1069, %v1425
      %v1440 = vadd.f32 %v1078, %v1418
      %v1441 = vadd.f32 %v1070, %v1426
      %v1442 = vadd.f32 %v1079, %v1419
      %v1443 = vadd.f32 %v1071, %v1427
      %s1444 = scalar_lea.vmem %s1, 16
      %v1445 = vld [vmem:[%s1444] sm:$0xff]
      %v1446 = vld [vmem:[%s1444 + $0x8] sm:$0xff]
      %v1447 = vmul.f32 %v582, %v1445
      %v1448 = vmul.f32 %v583, %v1446
      %v1449 = vmul.f32 %v584, %v1445
      %v1450 = vmul.f32 %v585, %v1446
      %v1451 = vmul.f32 %v586, %v1445
      %v1452 = vmul.f32 %v587, %v1446
      %v1453 = vmul.f32 %v588, %v1445
      %v1454 = vmul.f32 %v589, %v1446
      %v1455 = vmul.f32 %v590, %v1445
      %v1456 = vmul.f32 %v591, %v1446
      %v1457 = vmul.f32 %v592, %v1445
      %v1458 = vmul.f32 %v593, %v1446
      %v1459 = vmul.f32 %v594, %v1445
      %v1460 = vmul.f32 %v595, %v1446
      %v1461 = vmul.f32 %v596, %v1445
      %v1462 = vmul.f32 %v597, %v1446
      %v1463 = vadd.f32 %v1428, %v1447
      %v1464 = vadd.f32 %v1429, %v1448
      %v1465 = vadd.f32 %v1430, %v1449
      %v1466 = vadd.f32 %v1431, %v1450
      %v1467 = vadd.f32 %v1432, %v1451
      %v1468 = vadd.f32 %v1433, %v1452
      %v1469 = vadd.f32 %v1434, %v1453
      %v1470 = vadd.f32 %v1435, %v1454
      %v1471 = vadd.f32 %v1436, %v1455
      %v1472 = vadd.f32 %v1437, %v1456
      %v1473 = vadd.f32 %v1438, %v1457
      %v1474 = vadd.f32 %v1439, %v1458
      %v1475 = vadd.f32 %v1440, %v1459
      %v1476 = vadd.f32 %v1441, %v1460
      %v1477 = vadd.f32 %v1442, %v1461
      %v1478 = vadd.f32 %v1443, %v1462
      %s1479 = scalar_lea.vmem %s1, 160
      %v1480 = vld [vmem:[%s1479] sm:$0xff]
      %v1481 = vld [vmem:[%s1479 + $0x8] sm:$0xff]
      %v1482 = vmul.f32 %v616, %v1480
      %v1483 = vmul.f32 %v617, %v1481
      %v1484 = vmul.f32 %v618, %v1480
      %v1485 = vmul.f32 %v619, %v1481
      %v1486 = vmul.f32 %v620, %v1480
      %v1487 = vmul.f32 %v621, %v1481
      %v1488 = vmul.f32 %v622, %v1480
      %v1489 = vmul.f32 %v623, %v1481
      %v1490 = vmul.f32 %v624, %v1480
      %v1491 = vmul.f32 %v625, %v1481
      %v1492 = vmul.f32 %v626, %v1480
      %v1493 = vmul.f32 %v627, %v1481
      %v1494 = vmul.f32 %v628, %v1480
      %v1495 = vmul.f32 %v629, %v1481
      %v1496 = vmul.f32 %v630, %v1480
      %v1497 = vmul.f32 %v631, %v1481
      %v1498 = vadd.f32 %v1463, %v1482
      %v1499 = vadd.f32 %v1464, %v1483
      %v1500 = vadd.f32 %v1465, %v1484
      %v1501 = vadd.f32 %v1466, %v1485
      %v1502 = vadd.f32 %v1467, %v1486
      %v1503 = vadd.f32 %v1468, %v1487
      %v1504 = vadd.f32 %v1469, %v1488
      %v1505 = vadd.f32 %v1470, %v1489
      %v1506 = vadd.f32 %v1471, %v1490
      %v1507 = vadd.f32 %v1472, %v1491
      %v1508 = vadd.f32 %v1473, %v1492
      %v1509 = vadd.f32 %v1474, %v1493
      %v1510 = vadd.f32 %v1475, %v1494
      %v1511 = vadd.f32 %v1476, %v1495
      %v1512 = vadd.f32 %v1477, %v1496
      %v1513 = vadd.f32 %v1478, %v1497
      %s1514 = scalar_lea.vmem %s1, 304
      %v1515 = vld [vmem:[%s1514] sm:$0xff]
      %v1516 = vld [vmem:[%s1514 + $0x8] sm:$0xff]
      %v1517 = vmul.f32 %v668, %v1515
      %v1518 = vmul.f32 %v669, %v1516
      %v1519 = vmul.f32 %v670, %v1515
      %v1520 = vmul.f32 %v671, %v1516
      %v1521 = vmul.f32 %v672, %v1515
      %v1522 = vmul.f32 %v673, %v1516
      %v1523 = vmul.f32 %v674, %v1515
      %v1524 = vmul.f32 %v675, %v1516
      %v1525 = vmul.f32 %v676, %v1515
      %v1526 = vmul.f32 %v677, %v1516
      %v1527 = vmul.f32 %v678, %v1515
      %v1528 = vmul.f32 %v679, %v1516
      %v1529 = vmul.f32 %v680, %v1515
      %v1530 = vmul.f32 %v681, %v1516
      %v1531 = vmul.f32 %v682, %v1515
      %v1532 = vmul.f32 %v683, %v1516
      %v1533 = vadd.f32 %v1498, %v1517
      %v1534 = vadd.f32 %v1499, %v1518
      %v1535 = vadd.f32 %v1500, %v1519
      %v1536 = vadd.f32 %v1501, %v1520
      %v1537 = vadd.f32 %v1502, %v1521
      %v1538 = vadd.f32 %v1503, %v1522
      %v1539 = vadd.f32 %v1504, %v1523
      %v1540 = vadd.f32 %v1505, %v1524
      %v1541 = vadd.f32 %v1506, %v1525
      %v1542 = vadd.f32 %v1507, %v1526
      %v1543 = vadd.f32 %v1508, %v1527
      %v1544 = vadd.f32 %v1509, %v1528
      %v1545 = vadd.f32 %v1510, %v1529
      %v1546 = vadd.f32 %v1511, %v1530
      %v1547 = vadd.f32 %v1512, %v1531
      %v1548 = vadd.f32 %v1513, %v1532
      %s1549 = scalar_lea.vmem %s1, 64
      %v1550 = vld [vmem:[%s1549] sm:$0xff]
      %v1551 = vld [vmem:[%s1549 + $0x8] sm:$0xff]
      %v1552 = vmul.f32 %v720, %v1550
      %v1553 = vmul.f32 %v721, %v1551
      %v1554 = vmul.f32 %v722, %v1550
      %v1555 = vmul.f32 %v723, %v1551
      %v1556 = vmul.f32 %v724, %v1550
      %v1557 = vmul.f32 %v725, %v1551
      %v1558 = vmul.f32 %v726, %v1550
      %v1559 = vmul.f32 %v727, %v1551
      %v1560 = vmul.f32 %v728, %v1550
      %v1561 = vmul.f32 %v729, %v1551
      %v1562 = vmul.f32 %v730, %v1550
      %v1563 = vmul.f32 %v731, %v1551
      %v1564 = vmul.f32 %v732, %v1550
      %v1565 = vmul.f32 %v733, %v1551
      %v1566 = vmul.f32 %v734, %v1550
      %v1567 = vmul.f32 %v735, %v1551
      %v1568 = vadd.f32 %v1533, %v1552
      %v1569 = vadd.f32 %v1534, %v1553
      %v1570 = vadd.f32 %v1535, %v1554
      %v1571 = vadd.f32 %v1536, %v1555
      %v1572 = vadd.f32 %v1537, %v1556
      %v1573 = vadd.f32 %v1538, %v1557
      %v1574 = vadd.f32 %v1539, %v1558
      %v1575 = vadd.f32 %v1540, %v1559
      %v1576 = vadd.f32 %v1541, %v1560
      %v1577 = vadd.f32 %v1542, %v1561
      %v1578 = vadd.f32 %v1543, %v1562
      %v1579 = vadd.f32 %v1544, %v1563
      %v1580 = vadd.f32 %v1545, %v1564
      %v1581 = vadd.f32 %v1546, %v1565
      %v1582 = vadd.f32 %v1547, %v1566
      %v1583 = vadd.f32 %v1548, %v1567
      %s1584 = scalar_lea.vmem %s1, 208
      %v1585 = vld [vmem:[%s1584] sm:$0xff]
      %v1586 = vld [vmem:[%s1584 + $0x8] sm:$0xff]
      %v1587 = vmul.f32 %v771, %v1585
      %v1588 = vmul.f32 %v772, %v1586
      %v1589 = vmul.f32 %v773, %v1585
      %v1590 = vmul.f32 %v774, %v1586
      %v1591 = vmul.f32 %v775, %v1585
      %v1592 = vmul.f32 %v776, %v1586
      %v1593 = vmul.f32 %v777, %v1585
      %v1594 = vmul.f32 %v778, %v1586
      %v1595 = vmul.f32 %v779, %v1585
      %v1596 = vmul.f32 %v780, %v1586
      %v1597 = vmul.f32 %v781, %v1585
      %v1598 = vmul.f32 %v782, %v1586
      %v1599 = vmul.f32 %v783, %v1585
      %v1600 = vmul.f32 %v784, %v1586
      %v1601 = vmul.f32 %v785, %v1585
      %v1602 = vmul.f32 %v786, %v1586
      %v1603 = vadd.f32 %v1568, %v1587
      %v1604 = vadd.f32 %v1569, %v1588
      %v1605 = vadd.f32 %v1570, %v1589
      %v1606 = vadd.f32 %v1571, %v1590
      %v1607 = vadd.f32 %v1572, %v1591
      %v1608 = vadd.f32 %v1573, %v1592
      %v1609 = vadd.f32 %v1574, %v1593
      %v1610 = vadd.f32 %v1575, %v1594
      %v1611 = vadd.f32 %v1576, %v1595
      %v1612 = vadd.f32 %v1577, %v1596
      %v1613 = vadd.f32 %v1578, %v1597
      %v1614 = vadd.f32 %v1579, %v1598
      %v1615 = vadd.f32 %v1580, %v1599
      %v1616 = vadd.f32 %v1581, %v1600
      %v1617 = vadd.f32 %v1582, %v1601
      %v1618 = vadd.f32 %v1583, %v1602
      %s1619 = scalar_lea.vmem %s1, 352
      %v1620 = vld [vmem:[%s1619] sm:$0xff]
      %v1621 = vld [vmem:[%s1619 + $0x8] sm:$0xff]
      %v1622 = vmul.f32 %v823, %v1620
      %v1623 = vmul.f32 %v824, %v1621
      %v1624 = vmul.f32 %v825, %v1620
      %v1625 = vmul.f32 %v826, %v1621
      %v1626 = vmul.f32 %v827, %v1620
      %v1627 = vmul.f32 %v828, %v1621
      %v1628 = vmul.f32 %v829, %v1620
      %v1629 = vmul.f32 %v830, %v1621
      %v1630 = vmul.f32 %v831, %v1620
      %v1631 = vmul.f32 %v832, %v1621
      %v1632 = vmul.f32 %v833, %v1620
      %v1633 = vmul.f32 %v834, %v1621
      %v1634 = vmul.f32 %v835, %v1620
      %v1635 = vmul.f32 %v836, %v1621
      %v1636 = vmul.f32 %v837, %v1620
      %v1637 = vmul.f32 %v838, %v1621
      %v1638 = vadd.f32 %v1603, %v1622
      %v1639 = vadd.f32 %v1604, %v1623
      %v1640 = vadd.f32 %v1605, %v1624
      %v1641 = vadd.f32 %v1606, %v1625
      %v1642 = vadd.f32 %v1607, %v1626
      %v1643 = vadd.f32 %v1608, %v1627
      %v1644 = vadd.f32 %v1609, %v1628
      %v1645 = vadd.f32 %v1610, %v1629
      %v1646 = vadd.f32 %v1611, %v1630
      %v1647 = vadd.f32 %v1612, %v1631
      %v1648 = vadd.f32 %v1613, %v1632
      %v1649 = vadd.f32 %v1614, %v1633
      %v1650 = vadd.f32 %v1615, %v1634
      %v1651 = vadd.f32 %v1616, %v1635
      %v1652 = vadd.f32 %v1617, %v1636
      %v1653 = vadd.f32 %v1618, %v1637
      %s1654 = scalar_lea.vmem %s1, 112
      %v1655 = vld [vmem:[%s1654] sm:$0xff]
      %v1656 = vld [vmem:[%s1654 + $0x8] sm:$0xff]
      %v1657 = vmul.f32 %v875, %v1655
      %v1658 = vmul.f32 %v876, %v1656
      %v1659 = vmul.f32 %v877, %v1655
      %v1660 = vmul.f32 %v878, %v1656
      %v1661 = vmul.f32 %v879, %v1655
      %v1662 = vmul.f32 %v880, %v1656
      %v1663 = vmul.f32 %v881, %v1655
      %v1664 = vmul.f32 %v882, %v1656
      %v1665 = vmul.f32 %v883, %v1655
      %v1666 = vmul.f32 %v884, %v1656
      %v1667 = vmul.f32 %v885, %v1655
      %v1668 = vmul.f32 %v886, %v1656
      %v1669 = vmul.f32 %v887, %v1655
      %v1670 = vmul.f32 %v888, %v1656
      %v1671 = vmul.f32 %v889, %v1655
      %v1672 = vmul.f32 %v890, %v1656
      %v1673 = vadd.f32 %v1638, %v1657
      %v1674 = vadd.f32 %v1639, %v1658
      %v1675 = vadd.f32 %v1640, %v1659
      %v1676 = vadd.f32 %v1641, %v1660
      %v1677 = vadd.f32 %v1642, %v1661
      %v1678 = vadd.f32 %v1643, %v1662
      %v1679 = vadd.f32 %v1644, %v1663
      %v1680 = vadd.f32 %v1645, %v1664
      %v1681 = vadd.f32 %v1646, %v1665
      %v1682 = vadd.f32 %v1647, %v1666
      %v1683 = vadd.f32 %v1648, %v1667
      %v1684 = vadd.f32 %v1649, %v1668
      %v1685 = vadd.f32 %v1650, %v1669
      %v1686 = vadd.f32 %v1651, %v1670
      %v1687 = vadd.f32 %v1652, %v1671
      %v1688 = vadd.f32 %v1653, %v1672
      %s1689 = scalar_lea.vmem %s1, 256
      %v1690 = vld [vmem:[%s1689] sm:$0xff]
      %v1691 = vld [vmem:[%s1689 + $0x8] sm:$0xff]
      %v1692 = vmul.f32 %v926, %v1690
      %v1693 = vmul.f32 %v927, %v1691
      %v1694 = vmul.f32 %v928, %v1690
      %v1695 = vmul.f32 %v929, %v1691
      %v1696 = vmul.f32 %v930, %v1690
      %v1697 = vmul.f32 %v931, %v1691
      %v1698 = vmul.f32 %v932, %v1690
      %v1699 = vmul.f32 %v933, %v1691
      %v1700 = vmul.f32 %v934, %v1690
      %v1701 = vmul.f32 %v935, %v1691
      %v1702 = vmul.f32 %v936, %v1690
      %v1703 = vmul.f32 %v937, %v1691
      %v1704 = vmul.f32 %v938, %v1690
      %v1705 = vmul.f32 %v939, %v1691
      %v1706 = vmul.f32 %v940, %v1690
      %v1707 = vmul.f32 %v941, %v1691
      %v1708 = vadd.f32 %v1673, %v1692
      %v1709 = vadd.f32 %v1674, %v1693
      %v1710 = vadd.f32 %v1675, %v1694
      %v1711 = vadd.f32 %v1676, %v1695
      %v1712 = vadd.f32 %v1677, %v1696
      %v1713 = vadd.f32 %v1678, %v1697
      %v1714 = vadd.f32 %v1679, %v1698
      %v1715 = vadd.f32 %v1680, %v1699
      %v1716 = vadd.f32 %v1681, %v1700
      %v1717 = vadd.f32 %v1682, %v1701
      %v1718 = vadd.f32 %v1683, %v1702
      %v1719 = vadd.f32 %v1684, %v1703
      %v1720 = vadd.f32 %v1685, %v1704
      %v1721 = vadd.f32 %v1686, %v1705
      %v1722 = vadd.f32 %v1687, %v1706
      %v1723 = vadd.f32 %v1688, %v1707
      %s1724 = scalar_lea.vmem %s1, 400
      %v1725 = vld [vmem:[%s1724] sm:$0xff]
      %v1726 = vld [vmem:[%s1724 + $0x8] sm:$0xff]
      %v1727 = vmul.f32 %v978, %v1725
      %v1728 = vmul.f32 %v979, %v1726
      %v1729 = vmul.f32 %v980, %v1725
      %v1730 = vmul.f32 %v981, %v1726
      %v1731 = vmul.f32 %v982, %v1725
      %v1732 = vmul.f32 %v983, %v1726
      %v1733 = vmul.f32 %v984, %v1725
      %v1734 = vmul.f32 %v985, %v1726
      %v1735 = vmul.f32 %v986, %v1725
      %v1736 = vmul.f32 %v987, %v1726
      %v1737 = vmul.f32 %v988, %v1725
      %v1738 = vmul.f32 %v989, %v1726
      %v1739 = vmul.f32 %v990, %v1725
      %v1740 = vmul.f32 %v991, %v1726
      %v1741 = vmul.f32 %v992, %v1725
      %v1742 = vmul.f32 %v993, %v1726
      %v1743 = vadd.f32 %v1708, %v1727
      %v1744 = vadd.f32 %v1709, %v1728
      %v1745 = vadd.f32 %v1710, %v1729
      %v1746 = vadd.f32 %v1711, %v1730
      %v1747 = vadd.f32 %v1712, %v1731
      %v1748 = vadd.f32 %v1713, %v1732
      %v1749 = vadd.f32 %v1714, %v1733
      %v1750 = vadd.f32 %v1715, %v1734
      %v1751 = vadd.f32 %v1716, %v1735
      %v1752 = vadd.f32 %v1717, %v1736
      %v1753 = vadd.f32 %v1718, %v1737
      %v1754 = vadd.f32 %v1719, %v1738
      %v1755 = vadd.f32 %v1720, %v1739
      %v1756 = vadd.f32 %v1721, %v1740
      %v1757 = vadd.f32 %v1722, %v1741
      %v1758 = vadd.f32 %v1723, %v1742
      %v1759 = vld [vmem:[%s2] ss:$2 sm:$0x3]
      %v1761 = vlaneseq
      %v1762 = vshrl.u32 %v1761, 7
      %v1763 = vsub.s32 0, %v1762
      %v1764 = vrot.slane %v1759, %v1763
      %v1765 = vlaneseq
      %v1766 = vshrl.u32 %v1765, 7
      %v1767 = vsub.s32 1, %v1766
      %v1768 = vrot.slane %v1759, %v1767
      %v1771 = vmul.f32 %v1743, %v1764
      %v1772 = vmul.f32 %v1744, %v1768
      %v1773 = vmul.f32 %v1745, %v1764
      %v1774 = vmul.f32 %v1746, %v1768
      %v1775 = vmul.f32 %v1747, %v1764
      %v1776 = vmul.f32 %v1748, %v1768
      %v1777 = vmul.f32 %v1749, %v1764
      %v1778 = vmul.f32 %v1750, %v1768
      %v1779 = vmul.f32 %v1751, %v1764
      %v1780 = vmul.f32 %v1752, %v1768
      %v1781 = vmul.f32 %v1753, %v1764
      %v1782 = vmul.f32 %v1754, %v1768
      %v1783 = vmul.f32 %v1755, %v1764
      %v1784 = vmul.f32 %v1756, %v1768
      %v1785 = vmul.f32 %v1757, %v1764
      %v1786 = vmul.f32 %v1758, %v1768
      %v1787 = vld [vmem:[%s3] ss:$2 sm:$0x3]
      %v1789 = vlaneseq
      %v1790 = vshrl.u32 %v1789, 7
      %v1791 = vsub.s32 0, %v1790
      %v1792 = vrot.slane %v1787, %v1791
      %v1793 = vlaneseq
      %v1794 = vshrl.u32 %v1793, 7
      %v1795 = vsub.s32 1, %v1794
      %v1796 = vrot.slane %v1787, %v1795
      %v1799 = vadd.f32 %v1771, %v1792
      %v1800 = vadd.f32 %v1772, %v1796
      %v1801 = vadd.f32 %v1773, %v1792
      %v1802 = vadd.f32 %v1774, %v1796
      %v1803 = vadd.f32 %v1775, %v1792
      %v1804 = vadd.f32 %v1776, %v1796
      %v1805 = vadd.f32 %v1777, %v1792
      %v1806 = vadd.f32 %v1778, %v1796
      %v1807 = vadd.f32 %v1779, %v1792
      %v1808 = vadd.f32 %v1780, %v1796
      %v1809 = vadd.f32 %v1781, %v1792
      %v1810 = vadd.f32 %v1782, %v1796
      %v1811 = vadd.f32 %v1783, %v1792
      %v1812 = vadd.f32 %v1784, %v1796
      %v1813 = vadd.f32 %v1785, %v1792
      %v1814 = vadd.f32 %v1786, %v1796
      %v1815 = vmax.f32 %v1799, 0.0
      %v1816 = vmax.f32 %v1800, 0.0
      %v1817 = vmax.f32 %v1801, 0.0
      %v1818 = vmax.f32 %v1802, 0.0
      %v1819 = vmax.f32 %v1803, 0.0
      %v1820 = vmax.f32 %v1804, 0.0
      %v1821 = vmax.f32 %v1805, 0.0
      %v1822 = vmax.f32 %v1806, 0.0
      %v1823 = vmax.f32 %v1807, 0.0
      %v1824 = vmax.f32 %v1808, 0.0
      %v1825 = vmax.f32 %v1809, 0.0
      %v1826 = vmax.f32 %v1810, 0.0
      %v1827 = vmax.f32 %v1811, 0.0
      %v1828 = vmax.f32 %v1812, 0.0
      %v1829 = vmax.f32 %v1813, 0.0
      %v1830 = vmax.f32 %v1814, 0.0
      %v1831 = vadd.f32 %v1815, %v1817
      %v1832 = vadd.f32 %v1831, %v1819
      %v1833 = vadd.f32 %v1832, %v1821
      %v1834 = vadd.f32 %v1833, %v1823
      %v1835 = vadd.f32 %v1834, %v1825
      %v1836 = vadd.f32 %v1835, %v1827
      %v1837 = vadd.f32 %v1836, %v1829
      %v1838 = vadd.f32 %v1816, %v1818
      %v1839 = vadd.f32 %v1838, %v1820
      %v1840 = vadd.f32 %v1839, %v1822
      %v1841 = vadd.f32 %v1840, %v1824
      %v1842 = vadd.f32 %v1841, %v1826
      %v1843 = vadd.f32 %v1842, %v1828
      %v1844 = vadd.f32 %v1843, %v1830
      %v1845 = vadd.f32 %v1837, 0.0
      %v1846 = vadd.f32 %v1844, 0.0
      %1847 = vst [vmem:[#allocation3] sm:$0xff] %v1815
      %1848 = vst [vmem:[#allocation3 + $0x8] sm:$0xff] %v1816
      %1849 = vst [vmem:[#allocation3 + $0x10] sm:$0xff] %v1817
      %1850 = vst [vmem:[#allocation3 + $0x18] sm:$0xff] %v1818
      %1851 = vst [vmem:[#allocation3 + $0x20] sm:$0xff] %v1819
      %1852 = vst [vmem:[#allocation3 + $0x28] sm:$0xff] %v1820
      %1853 = vst [vmem:[#allocation3 + $0x30] sm:$0xff] %v1821
      %1854 = vst [vmem:[#allocation3 + $0x38] sm:$0xff] %v1822
      %1855 = vst [vmem:[#allocation3 + $0x40] sm:$0xff] %v1823
      %1856 = vst [vmem:[#allocation3 + $0x48] sm:$0xff] %v1824
      %1857 = vst [vmem:[#allocation3 + $0x50] sm:$0xff] %v1825
      %1858 = vst [vmem:[#allocation3 + $0x58] sm:$0xff] %v1826
      %1859 = vst [vmem:[#allocation3 + $0x60] sm:$0xff] %v1827
      %1860 = vst [vmem:[#allocation3 + $0x68] sm:$0xff] %v1828
      %1861 = vst [vmem:[#allocation3 + $0x70] sm:$0xff] %v1829
      %1862 = vst [vmem:[#allocation3 + $0x78] sm:$0xff] %v1830
      %v1863 = vld [vmem:[%s300] sm:$0x3f]
      %v1864 = vld [vmem:[%s300 + $0x8] sm:$0x3f]
      %v1865 = vld [vmem:[%s300 + $0x10] sm:$0x3f]
      %v1866 = vld [vmem:[%s300 + $0x18] sm:$0x3f]
      %v1867 = vld [vmem:[%s300 + $0x20] sm:$0x3f]
      %v1868 = vld [vmem:[%s300 + $0x28] sm:$0x3f]
      %v1869 = vld [vmem:[%s300 + $0x30] sm:$0x3f]
      %v1870 = vld [vmem:[%s300 + $0x38] sm:$0x3f]
      %v1871 = vld [vmem:[%s300 + $0x40] sm:$0x3f]
      %v1872 = vld [vmem:[%s300 + $0x48] sm:$0x3f]
      %v1873 = vld [vmem:[%s300 + $0x50] sm:$0x3f]
      %v1874 = vld [vmem:[%s300 + $0x58] sm:$0x3f]
      %v1875 = vld [vmem:[%s300 + $0x60] sm:$0x3f]
      %v1876 = vld [vmem:[%s300 + $0x68] sm:$0x3f]
      %v1877 = vld [vmem:[%s300 + $0x70] sm:$0x3f]
      %v1878 = vld [vmem:[%s300 + $0x78] sm:$0x3f]
      %v1895 = vrot.slane %v1863, 6
      %v1896 = vrot.slane %v1864, 6
      %v1897 = vrot.slane %v1865, 6
      %v1898 = vrot.slane %v1866, 6
      %v1899 = vrot.slane %v1867, 6
      %v1900 = vrot.slane %v1868, 6
      %v1901 = vrot.slane %v1869, 6
      %v1902 = vrot.slane %v1870, 6
      %v1903 = vrot.slane %v1871, 6
      %v1904 = vrot.slane %v1872, 6
      %v1905 = vrot.slane %v1873, 6
      %v1906 = vrot.slane %v1874, 6
      %v1907 = vrot.slane %v1875, 6
      %v1908 = vrot.slane %v1876, 6
      %v1909 = vrot.slane %v1877, 6
      %v1910 = vrot.slane %v1878, 6
      %1927 = vst [vmem:[%s432] sm:$0xfc] %v1895
      %1928 = vst [vmem:[%s432 + $0x8] sm:$0xfc] %v1896
      %1929 = vst [vmem:[%s432 + $0x10] sm:$0xfc] %v1897
      %1930 = vst [vmem:[%s432 + $0x18] sm:$0xfc] %v1898
      %1931 = vst [vmem:[%s432 + $0x20] sm:$0xfc] %v1899
      %1932 = vst [vmem:[%s432 + $0x28] sm:$0xfc] %v1900
      %1933 = vst [vmem:[%s432 + $0x30] sm:$0xfc] %v1901
      %1934 = vst [vmem:[%s432 + $0x38] sm:$0xfc] %v1902
      %1935 = vst [vmem:[%s432 + $0x40] sm:$0xfc] %v1903
      %1936 = vst [vmem:[%s432 + $0x48] sm:$0xfc] %v1904
      %1937 = vst [vmem:[%s432 + $0x50] sm:$0xfc] %v1905
      %1938 = vst [vmem:[%s432 + $0x58] sm:$0xfc] %v1906
      %1939 = vst [vmem:[%s432 + $0x60] sm:$0xfc] %v1907
      %1940 = vst [vmem:[%s432 + $0x68] sm:$0xfc] %v1908
      %1941 = vst [vmem:[%s432 + $0x70] sm:$0xfc] %v1909
      %1942 = vst [vmem:[%s432 + $0x78] sm:$0xfc] %v1910
      %1943 = vst [vmem:[%s432] sm:$0x3] 0.0
      %1944 = vst [vmem:[%s432 + $0x8] sm:$0x3] 0.0
      %1945 = vst [vmem:[%s432 + $0x10] sm:$0x3] 0.0
      %1946 = vst [vmem:[%s432 + $0x18] sm:$0x3] 0.0
      %1947 = vst [vmem:[%s432 + $0x20] sm:$0x3] 0.0
      %1948 = vst [vmem:[%s432 + $0x28] sm:$0x3] 0.0
      %1949 = vst [vmem:[%s432 + $0x30] sm:$0x3] 0.0
      %1950 = vst [vmem:[%s432 + $0x38] sm:$0x3] 0.0
      %1951 = vst [vmem:[%s432 + $0x40] sm:$0x3] 0.0
      %1952 = vst [vmem:[%s432 + $0x48] sm:$0x3] 0.0
      %1953 = vst [vmem:[%s432 + $0x50] sm:$0x3] 0.0
      %1954 = vst [vmem:[%s432 + $0x58] sm:$0x3] 0.0
      %1955 = vst [vmem:[%s432 + $0x60] sm:$0x3] 0.0
      %1956 = vst [vmem:[%s432 + $0x68] sm:$0x3] 0.0
      %1957 = vst [vmem:[%s432 + $0x70] sm:$0x3] 0.0
      %1958 = vst [vmem:[%s432 + $0x78] sm:$0x3] 0.0
      %v1959 = vld [vmem:[%s300] sm:$0xfc]
      %v1960 = vld [vmem:[%s300 + $0x8] sm:$0xfc]
      %v1961 = vld [vmem:[%s300 + $0x10] sm:$0xfc]
      %v1962 = vld [vmem:[%s300 + $0x18] sm:$0xfc]
      %v1963 = vld [vmem:[%s300 + $0x20] sm:$0xfc]
      %v1964 = vld [vmem:[%s300 + $0x28] sm:$0xfc]
      %v1965 = vld [vmem:[%s300 + $0x30] sm:$0xfc]
      %v1966 = vld [vmem:[%s300 + $0x38] sm:$0xfc]
      %v1967 = vld [vmem:[%s300 + $0x40] sm:$0xfc]
      %v1968 = vld [vmem:[%s300 + $0x48] sm:$0xfc]
      %v1969 = vld [vmem:[%s300 + $0x50] sm:$0xfc]
      %v1970 = vld [vmem:[%s300 + $0x58] sm:$0xfc]
      %v1971 = vld [vmem:[%s300 + $0x60] sm:$0xfc]
      %v1972 = vld [vmem:[%s300 + $0x68] sm:$0xfc]
      %v1973 = vld [vmem:[%s300 + $0x70] sm:$0xfc]
      %v1974 = vld [vmem:[%s300 + $0x78] sm:$0xfc]
      %v1991 = vrot.slane %v1959, 2
      %v1992 = vrot.slane %v1960, 2
      %v1993 = vrot.slane %v1961, 2
      %v1994 = vrot.slane %v1962, 2
      %v1995 = vrot.slane %v1963, 2
      %v1996 = vrot.slane %v1964, 2
      %v1997 = vrot.slane %v1965, 2
      %v1998 = vrot.slane %v1966, 2
      %v1999 = vrot.slane %v1967, 2
      %v2000 = vrot.slane %v1968, 2
      %v2001 = vrot.slane %v1969, 2
      %v2002 = vrot.slane %v1970, 2
      %v2003 = vrot.slane %v1971, 2
      %v2004 = vrot.slane %v1972, 2
      %v2005 = vrot.slane %v1973, 2
      %v2006 = vrot.slane %v1974, 2
      %2023 = vst [vmem:[%s540] sm:$0x3f] %v1991
      %2024 = vst [vmem:[%s540 + $0x8] sm:$0x3f] %v1992
      %2025 = vst [vmem:[%s540 + $0x10] sm:$0x3f] %v1993
      %2026 = vst [vmem:[%s540 + $0x18] sm:$0x3f] %v1994
      %2027 = vst [vmem:[%s540 + $0x20] sm:$0x3f] %v1995
      %2028 = vst [vmem:[%s540 + $0x28] sm:$0x3f] %v1996
      %2029 = vst [vmem:[%s540 + $0x30] sm:$0x3f] %v1997
      %2030 = vst [vmem:[%s540 + $0x38] sm:$0x3f] %v1998
      %2031 = vst [vmem:[%s540 + $0x40] sm:$0x3f] %v1999
      %2032 = vst [vmem:[%s540 + $0x48] sm:$0x3f] %v2000
      %2033 = vst [vmem:[%s540 + $0x50] sm:$0x3f] %v2001
      %2034 = vst [vmem:[%s540 + $0x58] sm:$0x3f] %v2002
      %2035 = vst [vmem:[%s540 + $0x60] sm:$0x3f] %v2003
      %2036 = vst [vmem:[%s540 + $0x68] sm:$0x3f] %v2004
      %2037 = vst [vmem:[%s540 + $0x70] sm:$0x3f] %v2005
      %2038 = vst [vmem:[%s540 + $0x78] sm:$0x3f] %v2006
      %2039 = vst [vmem:[%s540] sm:$0xc0] 0.0
      %2040 = vst [vmem:[%s540 + $0x8] sm:$0xc0] 0.0
      %2041 = vst [vmem:[%s540 + $0x10] sm:$0xc0] 0.0
      %2042 = vst [vmem:[%s540 + $0x18] sm:$0xc0] 0.0
      %2043 = vst [vmem:[%s540 + $0x20] sm:$0xc0] 0.0
      %2044 = vst [vmem:[%s540 + $0x28] sm:$0xc0] 0.0
      %2045 = vst [vmem:[%s540 + $0x30] sm:$0xc0] 0.0
      %2046 = vst [vmem:[%s540 + $0x38] sm:$0xc0] 0.0
      %2047 = vst [vmem:[%s540 + $0x40] sm:$0xc0] 0.0
      %2048 = vst [vmem:[%s540 + $0x48] sm:$0xc0] 0.0
      %2049 = vst [vmem:[%s540 + $0x50] sm:$0xc0] 0.0
      %2050 = vst [vmem:[%s540 + $0x58] sm:$0xc0] 0.0
      %2051 = vst [vmem:[%s540 + $0x60] sm:$0xc0] 0.0
      %2052 = vst [vmem:[%s540 + $0x68] sm:$0xc0] 0.0
      %2053 = vst [vmem:[%s540 + $0x70] sm:$0xc0] 0.0
      %2054 = vst [vmem:[%s540 + $0x78] sm:$0xc0] 0.0
      %v2055 = vld [vmem:[#allocation2] sm:$0xff]
      %v2056 = vld [vmem:[#allocation2 + $0x8] sm:$0xff]
      %v2057 = vld [vmem:[#allocation2 + $0x10] sm:$0xff]
      %v2058 = vld [vmem:[#allocation2 + $0x18] sm:$0xff]
      %v2059 = vld [vmem:[#allocation2 + $0x20] sm:$0xff]
      %v2060 = vld [vmem:[#allocation2 + $0x28] sm:$0xff]
      %v2061 = vld [vmem:[#allocation2 + $0x30] sm:$0xff]
      %v2062 = vld [vmem:[#allocation2 + $0x38] sm:$0xff]
      %v2063 = vld [vmem:[#allocation2 + $0x40] sm:$0xff]
      %v2064 = vld [vmem:[#allocation2 + $0x48] sm:$0xff]
      %v2065 = vld [vmem:[#allocation2 + $0x50] sm:$0xff]
      %v2066 = vld [vmem:[#allocation2 + $0x58] sm:$0xff]
      %v2067 = vld [vmem:[#allocation2 + $0x60] sm:$0xff]
      %v2068 = vld [vmem:[#allocation2 + $0x68] sm:$0xff]
      %v2069 = vld [vmem:[#allocation2 + $0x70] sm:$0xff]
      %v2070 = vld [vmem:[#allocation2 + $0x78] sm:$0xff]
      %s2071 = scalar_lea.vmem %s1, 432
      %v2072 = vld [vmem:[%s2071] sm:$0xff]
      %v2073 = vld [vmem:[%s2071 + $0x8] sm:$0xff]
      %v2074 = vmul.f32 %v2055, %v2072
      %v2075 = vmul.f32 %v2056, %v2073
      %v2076 = vmul.f32 %v2057, %v2072
      %v2077 = vmul.f32 %v2058, %v2073
      %v2078 = vmul.f32 %v2059, %v2072
      %v2079 = vmul.f32 %v2060, %v2073
      %v2080 = vmul.f32 %v2061, %v2072
      %v2081 = vmul.f32 %v2062, %v2073
      %v2082 = vmul.f32 %v2063, %v2072
      %v2083 = vmul.f32 %v2064, %v2073
      %v2084 = vmul.f32 %v2065, %v2072
      %v2085 = vmul.f32 %v2066, %v2073
      %v2086 = vmul.f32 %v2067, %v2072
      %v2087 = vmul.f32 %v2068, %v2073
      %v2088 = vmul.f32 %v2069, %v2072
      %v2089 = vmul.f32 %v2070, %v2073
      %v2090 = vld [vmem:[%s432] sm:$0xff]
      %v2091 = vld [vmem:[%s432 + $0x8] sm:$0xff]
      %v2092 = vld [vmem:[%s432 + $0x10] sm:$0xff]
      %v2093 = vld [vmem:[%s432 + $0x18] sm:$0xff]
      %v2094 = vld [vmem:[%s432 + $0x20] sm:$0xff]
      %v2095 = vld [vmem:[%s432 + $0x28] sm:$0xff]
      %v2096 = vld [vmem:[%s432 + $0x30] sm:$0xff]
      %v2097 = vld [vmem:[%s432 + $0x38] sm:$0xff]
      %v2098 = vld [vmem:[%s432 + $0x40] sm:$0xff]
      %v2099 = vld [vmem:[%s432 + $0x48] sm:$0xff]
      %v2100 = vld [vmem:[%s432 + $0x50] sm:$0xff]
      %v2101 = vld [vmem:[%s432 + $0x58] sm:$0xff]
      %v2102 = vld [vmem:[%s432 + $0x60] sm:$0xff]
      %v2103 = vld [vmem:[%s432 + $0x68] sm:$0xff]
      %v2104 = vld [vmem:[%s432 + $0x70] sm:$0xff]
      %v2105 = vld [vmem:[%s432 + $0x78] sm:$0xff]
      %s2106 = scalar_lea.vmem %s1, 576
      %v2107 = vld [vmem:[%s2106] sm:$0xff]
      %v2108 = vld [vmem:[%s2106 + $0x8] sm:$0xff]
      %v2109 = vmul.f32 %v2090, %v2107
      %v2110 = vmul.f32 %v2091, %v2108
      %v2111 = vmul.f32 %v2092, %v2107
      %v2112 = vmul.f32 %v2093, %v2108
      %v2113 = vmul.f32 %v2094, %v2107
      %v2114 = vmul.f32 %v2095, %v2108
      %v2115 = vmul.f32 %v2096, %v2107
      %v2116 = vmul.f32 %v2097, %v2108
      %v2117 = vmul.f32 %v2098, %v2107
      %v2118 = vmul.f32 %v2099, %v2108
      %v2119 = vmul.f32 %v2100, %v2107
      %v2120 = vmul.f32 %v2101, %v2108
      %v2121 = vmul.f32 %v2102, %v2107
      %v2122 = vmul.f32 %v2103, %v2108
      %v2123 = vmul.f32 %v2104, %v2107
      %v2124 = vmul.f32 %v2105, %v2108
      %v2125 = vadd.f32 %v2074, %v2109
      %v2126 = vadd.f32 %v2075, %v2110
      %v2127 = vadd.f32 %v2076, %v2111
      %v2128 = vadd.f32 %v2077, %v2112
      %v2129 = vadd.f32 %v2078, %v2113
      %v2130 = vadd.f32 %v2079, %v2114
      %v2131 = vadd.f32 %v2080, %v2115
      %v2132 = vadd.f32 %v2081, %v2116
      %v2133 = vadd.f32 %v2082, %v2117
      %v2134 = vadd.f32 %v2083, %v2118
      %v2135 = vadd.f32 %v2084, %v2119
      %v2136 = vadd.f32 %v2085, %v2120
      %v2137 = vadd.f32 %v2086, %v2121
      %v2138 = vadd.f32 %v2087, %v2122
      %v2139 = vadd.f32 %v2088, %v2123
      %v2140 = vadd.f32 %v2089, %v2124
      %s2141 = scalar_lea.vmem [#allocation2], 64
      %v2142 = vld [vmem:[%s2141] sm:$0xff]
      %v2143 = vld [vmem:[%s2141 + $0x8] sm:$0xff]
      %v2144 = vld [vmem:[%s2141 + $0x10] sm:$0xff]
      %v2145 = vld [vmem:[%s2141 + $0x18] sm:$0xff]
      %v2146 = vld [vmem:[%s2141 + $0x20] sm:$0xff]
      %v2147 = vld [vmem:[%s2141 + $0x28] sm:$0xff]
      %v2148 = vld [vmem:[%s2141 + $0x30] sm:$0xff]
      %v2149 = vld [vmem:[%s2141 + $0x38] sm:$0xff]
      %v2150 = vld [vmem:[%s2141 + $0x40] sm:$0xff]
      %v2151 = vld [vmem:[%s2141 + $0x48] sm:$0xff]
      %v2152 = vld [vmem:[%s2141 + $0x50] sm:$0xff]
      %v2153 = vld [vmem:[%s2141 + $0x58] sm:$0xff]
      %v2154 = vld [vmem:[%s2141 + $0x60] sm:$0xff]
      %v2155 = vld [vmem:[%s2141 + $0x68] sm:$0xff]
      %v2156 = vld [vmem:[%s2141 + $0x70] sm:$0xff]
      %v2157 = vld [vmem:[%s2141 + $0x78] sm:$0xff]
      %s2158 = scalar_lea.vmem %s1, 720
      %v2159 = vld [vmem:[%s2158] sm:$0xff]
      %v2160 = vld [vmem:[%s2158 + $0x8] sm:$0xff]
      %v2161 = vmul.f32 %v2142, %v2159
      %v2162 = vmul.f32 %v2143, %v2160
      %v2163 = vmul.f32 %v2144, %v2159
      %v2164 = vmul.f32 %v2145, %v2160
      %v2165 = vmul.f32 %v2146, %v2159
      %v2166 = vmul.f32 %v2147, %v2160
      %v2167 = vmul.f32 %v2148, %v2159
      %v2168 = vmul.f32 %v2149, %v2160
      %v2169 = vmul.f32 %v2150, %v2159
      %v2170 = vmul.f32 %v2151, %v2160
      %v2171 = vmul.f32 %v2152, %v2159
      %v2172 = vmul.f32 %v2153, %v2160
      %v2173 = vmul.f32 %v2154, %v2159
      %v2174 = vmul.f32 %v2155, %v2160
      %v2175 = vmul.f32 %v2156, %v2159
      %v2176 = vmul.f32 %v2157, %v2160
      %v2177 = vadd.f32 %v2125, %v2161
      %v2178 = vadd.f32 %v2126, %v2162
      %v2179 = vadd.f32 %v2127, %v2163
      %v2180 = vadd.f32 %v2128, %v2164
      %v2181 = vadd.f32 %v2129, %v2165
      %v2182 = vadd.f32 %v2130, %v2166
      %v2183 = vadd.f32 %v2131, %v2167
      %v2184 = vadd.f32 %v2132, %v2168
      %v2185 = vadd.f32 %v2133, %v2169
      %v2186 = vadd.f32 %v2134, %v2170
      %v2187 = vadd.f32 %v2135, %v2171
      %v2188 = vadd.f32 %v2136, %v2172
      %v2189 = vadd.f32 %v2137, %v2173
      %v2190 = vadd.f32 %v2138, %v2174
      %v2191 = vadd.f32 %v2139, %v2175
      %v2192 = vadd.f32 %v2140, %v2176
      %v2193 = vld [vmem:[%s315] sm:$0xff]
      %v2194 = vld [vmem:[%s315 + $0x8] sm:$0xff]
      %v2195 = vld [vmem:[%s315 + $0x10] sm:$0xff]
      %v2196 = vld [vmem:[%s315 + $0x18] sm:$0xff]
      %v2197 = vld [vmem:[%s315 + $0x20] sm:$0xff]
      %v2198 = vld [vmem:[%s315 + $0x28] sm:$0xff]
      %v2199 = vld [vmem:[%s315 + $0x30] sm:$0xff]
      %v2200 = vld [vmem:[%s315 + $0x38] sm:$0xff]
      %v2201 = vld [vmem:[%s315 + $0x40] sm:$0xff]
      %v2202 = vld [vmem:[%s315 + $0x48] sm:$0xff]
      %v2203 = vld [vmem:[%s315 + $0x50] sm:$0xff]
      %v2204 = vld [vmem:[%s315 + $0x58] sm:$0xff]
      %v2205 = vld [vmem:[%s315 + $0x60] sm:$0xff]
      %v2206 = vld [vmem:[%s315 + $0x68] sm:$0xff]
      %v2207 = vld [vmem:[%s315 + $0x70] sm:$0xff]
      %v2208 = vld [vmem:[%s315 + $0x78] sm:$0xff]
      %s2209 = scalar_lea.vmem %s1, 480
      %v2210 = vld [vmem:[%s2209] sm:$0xff]
      %v2211 = vld [vmem:[%s2209 + $0x8] sm:$0xff]
      %v2212 = vmul.f32 %v2193, %v2210
      %v2213 = vmul.f32 %v2194, %v2211
      %v2214 = vmul.f32 %v2195, %v2210
      %v2215 = vmul.f32 %v2196, %v2211
      %v2216 = vmul.f32 %v2197, %v2210
      %v2217 = vmul.f32 %v2198, %v2211
      %v2218 = vmul.f32 %v2199, %v2210
      %v2219 = vmul.f32 %v2200, %v2211
      %v2220 = vmul.f32 %v2201, %v2210
      %v2221 = vmul.f32 %v2202, %v2211
      %v2222 = vmul.f32 %v2203, %v2210
      %v2223 = vmul.f32 %v2204, %v2211
      %v2224 = vmul.f32 %v2205, %v2210
      %v2225 = vmul.f32 %v2206, %v2211
      %v2226 = vmul.f32 %v2207, %v2210
      %v2227 = vmul.f32 %v2208, %v2211
      %v2228 = vadd.f32 %v2177, %v2212
      %v2229 = vadd.f32 %v2178, %v2213
      %v2230 = vadd.f32 %v2179, %v2214
      %v2231 = vadd.f32 %v2180, %v2215
      %v2232 = vadd.f32 %v2181, %v2216
      %v2233 = vadd.f32 %v2182, %v2217
      %v2234 = vadd.f32 %v2183, %v2218
      %v2235 = vadd.f32 %v2184, %v2219
      %v2236 = vadd.f32 %v2185, %v2220
      %v2237 = vadd.f32 %v2186, %v2221
      %v2238 = vadd.f32 %v2187, %v2222
      %v2239 = vadd.f32 %v2188, %v2223
      %v2240 = vadd.f32 %v2189, %v2224
      %v2241 = vadd.f32 %v2190, %v2225
      %v2242 = vadd.f32 %v2191, %v2226
      %v2243 = vadd.f32 %v2192, %v2227
      %v2244 = vld [vmem:[%s351] sm:$0xff]
      %v2245 = vld [vmem:[%s351 + $0x8] sm:$0xff]
      %v2246 = vld [vmem:[%s351 + $0x10] sm:$0xff]
      %v2247 = vld [vmem:[%s351 + $0x18] sm:$0xff]
      %v2248 = vld [vmem:[%s351 + $0x20] sm:$0xff]
      %v2249 = vld [vmem:[%s351 + $0x28] sm:$0xff]
      %v2250 = vld [vmem:[%s351 + $0x30] sm:$0xff]
      %v2251 = vld [vmem:[%s351 + $0x38] sm:$0xff]
      %v2252 = vld [vmem:[%s351 + $0x40] sm:$0xff]
      %v2253 = vld [vmem:[%s351 + $0x48] sm:$0xff]
      %v2254 = vld [vmem:[%s351 + $0x50] sm:$0xff]
      %v2255 = vld [vmem:[%s351 + $0x58] sm:$0xff]
      %v2256 = vld [vmem:[%s351 + $0x60] sm:$0xff]
      %v2257 = vld [vmem:[%s351 + $0x68] sm:$0xff]
      %v2258 = vld [vmem:[%s351 + $0x70] sm:$0xff]
      %v2259 = vld [vmem:[%s351 + $0x78] sm:$0xff]
      %s2260 = scalar_lea.vmem %s1, 624
      %v2261 = vld [vmem:[%s2260] sm:$0xff]
      %v2262 = vld [vmem:[%s2260 + $0x8] sm:$0xff]
      %v2263 = vmul.f32 %v2244, %v2261
      %v2264 = vmul.f32 %v2245, %v2262
      %v2265 = vmul.f32 %v2246, %v2261
      %v2266 = vmul.f32 %v2247, %v2262
      %v2267 = vmul.f32 %v2248, %v2261
      %v2268 = vmul.f32 %v2249, %v2262
      %v2269 = vmul.f32 %v2250, %v2261
      %v2270 = vmul.f32 %v2251, %v2262
      %v2271 = vmul.f32 %v2252, %v2261
      %v2272 = vmul.f32 %v2253, %v2262
      %v2273 = vmul.f32 %v2254, %v2261
      %v2274 = vmul.f32 %v2255, %v2262
      %v2275 = vmul.f32 %v2256, %v2261
      %v2276 = vmul.f32 %v2257, %v2262
      %v2277 = vmul.f32 %v2258, %v2261
      %v2278 = vmul.f32 %v2259, %v2262
      %v2279 = vadd.f32 %v2228, %v2263
      %v2280 = vadd.f32 %v2229, %v2264
      %v2281 = vadd.f32 %v2230, %v2265
      %v2282 = vadd.f32 %v2231, %v2266
      %v2283 = vadd.f32 %v2232, %v2267
      %v2284 = vadd.f32 %v2233, %v2268
      %v2285 = vadd.f32 %v2234, %v2269
      %v2286 = vadd.f32 %v2235, %v2270
      %v2287 = vadd.f32 %v2236, %v2271
      %v2288 = vadd.f32 %v2237, %v2272
      %v2289 = vadd.f32 %v2238, %v2273
      %v2290 = vadd.f32 %v2239, %v2274
      %v2291 = vadd.f32 %v2240, %v2275
      %v2292 = vadd.f32 %v2241, %v2276
      %v2293 = vadd.f32 %v2242, %v2277
      %v2294 = vadd.f32 %v2243, %v2278
      %s2295 = scalar_lea.vmem [#allocation2], 256
      %v2296 = vld [vmem:[%s2295] sm:$0xff]
      %v2297 = vld [vmem:[%s2295 + $0x8] sm:$0xff]
      %v2298 = vld [vmem:[%s2295 + $0x10] sm:$0xff]
      %v2299 = vld [vmem:[%s2295 + $0x18] sm:$0xff]
      %v2300 = vld [vmem:[%s2295 + $0x20] sm:$0xff]
      %v2301 = vld [vmem:[%s2295 + $0x28] sm:$0xff]
      %v2302 = vld [vmem:[%s2295 + $0x30] sm:$0xff]
      %v2303 = vld [vmem:[%s2295 + $0x38] sm:$0xff]
      %v2304 = vld [vmem:[%s2295 + $0x40] sm:$0xff]
      %v2305 = vld [vmem:[%s2295 + $0x48] sm:$0xff]
      %v2306 = vld [vmem:[%s2295 + $0x50] sm:$0xff]
      %v2307 = vld [vmem:[%s2295 + $0x58] sm:$0xff]
      %v2308 = vld [vmem:[%s2295 + $0x60] sm:$0xff]
      %v2309 = vld [vmem:[%s2295 + $0x68] sm:$0xff]
      %v2310 = vld [vmem:[%s2295 + $0x70] sm:$0xff]
      %v2311 = vld [vmem:[%s2295 + $0x78] sm:$0xff]
      %s2312 = scalar_lea.vmem %s1, 768
      %v2313 = vld [vmem:[%s2312] sm:$0xff]
      %v2314 = vld [vmem:[%s2312 + $0x8] sm:$0xff]
      %v2315 = vmul.f32 %v2296, %v2313
      %v2316 = vmul.f32 %v2297, %v2314
      %v2317 = vmul.f32 %v2298, %v2313
      %v2318 = vmul.f32 %v2299, %v2314
      %v2319 = vmul.f32 %v2300, %v2313
      %v2320 = vmul.f32 %v2301, %v2314
      %v2321 = vmul.f32 %v2302, %v2313
      %v2322 = vmul.f32 %v2303, %v2314
      %v2323 = vmul.f32 %v2304, %v2313
      %v2324 = vmul.f32 %v2305, %v2314
      %v2325 = vmul.f32 %v2306, %v2313
      %v2326 = vmul.f32 %v2307, %v2314
      %v2327 = vmul.f32 %v2308, %v2313
      %v2328 = vmul.f32 %v2309, %v2314
      %v2329 = vmul.f32 %v2310, %v2313
      %v2330 = vmul.f32 %v2311, %v2314
      %v2331 = vadd.f32 %v2279, %v2315
      %v2332 = vadd.f32 %v2280, %v2316
      %v2333 = vadd.f32 %v2281, %v2317
      %v2334 = vadd.f32 %v2282, %v2318
      %v2335 = vadd.f32 %v2283, %v2319
      %v2336 = vadd.f32 %v2284, %v2320
      %v2337 = vadd.f32 %v2285, %v2321
      %v2338 = vadd.f32 %v2286, %v2322
      %v2339 = vadd.f32 %v2287, %v2323
      %v2340 = vadd.f32 %v2288, %v2324
      %v2341 = vadd.f32 %v2289, %v2325
      %v2342 = vadd.f32 %v2290, %v2326
      %v2343 = vadd.f32 %v2291, %v2327
      %v2344 = vadd.f32 %v2292, %v2328
      %v2345 = vadd.f32 %v2293, %v2329
      %v2346 = vadd.f32 %v2294, %v2330
      %v2347 = vld [vmem:[%s325] sm:$0xff]
      %v2348 = vld [vmem:[%s325 + $0x8] sm:$0xff]
      %v2349 = vld [vmem:[%s325 + $0x10] sm:$0xff]
      %v2350 = vld [vmem:[%s325 + $0x18] sm:$0xff]
      %v2351 = vld [vmem:[%s325 + $0x20] sm:$0xff]
      %v2352 = vld [vmem:[%s325 + $0x28] sm:$0xff]
      %v2353 = vld [vmem:[%s325 + $0x30] sm:$0xff]
      %v2354 = vld [vmem:[%s325 + $0x38] sm:$0xff]
      %v2355 = vld [vmem:[%s325 + $0x40] sm:$0xff]
      %v2356 = vld [vmem:[%s325 + $0x48] sm:$0xff]
      %v2357 = vld [vmem:[%s325 + $0x50] sm:$0xff]
      %v2358 = vld [vmem:[%s325 + $0x58] sm:$0xff]
      %v2359 = vld [vmem:[%s325 + $0x60] sm:$0xff]
      %v2360 = vld [vmem:[%s325 + $0x68] sm:$0xff]
      %v2361 = vld [vmem:[%s325 + $0x70] sm:$0xff]
      %v2362 = vld [vmem:[%s325 + $0x78] sm:$0xff]
      %s2363 = scalar_lea.vmem %s1, 528
      %v2364 = vld [vmem:[%s2363] sm:$0xff]
      %v2365 = vld [vmem:[%s2363 + $0x8] sm:$0xff]
      %v2366 = vmul.f32 %v2347, %v2364
      %v2367 = vmul.f32 %v2348, %v2365
      %v2368 = vmul.f32 %v2349, %v2364
      %v2369 = vmul.f32 %v2350, %v2365
      %v2370 = vmul.f32 %v2351, %v2364
      %v2371 = vmul.f32 %v2352, %v2365
      %v2372 = vmul.f32 %v2353, %v2364
      %v2373 = vmul.f32 %v2354, %v2365
      %v2374 = vmul.f32 %v2355, %v2364
      %v2375 = vmul.f32 %v2356, %v2365
      %v2376 = vmul.f32 %v2357, %v2364
      %v2377 = vmul.f32 %v2358, %v2365
      %v2378 = vmul.f32 %v2359, %v2364
      %v2379 = vmul.f32 %v2360, %v2365
      %v2380 = vmul.f32 %v2361, %v2364
      %v2381 = vmul.f32 %v2362, %v2365
      %v2382 = vadd.f32 %v2331, %v2366
      %v2383 = vadd.f32 %v2332, %v2367
      %v2384 = vadd.f32 %v2333, %v2368
      %v2385 = vadd.f32 %v2334, %v2369
      %v2386 = vadd.f32 %v2335, %v2370
      %v2387 = vadd.f32 %v2336, %v2371
      %v2388 = vadd.f32 %v2337, %v2372
      %v2389 = vadd.f32 %v2338, %v2373
      %v2390 = vadd.f32 %v2339, %v2374
      %v2391 = vadd.f32 %v2340, %v2375
      %v2392 = vadd.f32 %v2341, %v2376
      %v2393 = vadd.f32 %v2342, %v2377
      %v2394 = vadd.f32 %v2343, %v2378
      %v2395 = vadd.f32 %v2344, %v2379
      %v2396 = vadd.f32 %v2345, %v2380
      %v2397 = vadd.f32 %v2346, %v2381
      %v2398 = vld [vmem:[%s540] sm:$0xff]
      %v2399 = vld [vmem:[%s540 + $0x8] sm:$0xff]
      %v2400 = vld [vmem:[%s540 + $0x10] sm:$0xff]
      %v2401 = vld [vmem:[%s540 + $0x18] sm:$0xff]
      %v2402 = vld [vmem:[%s540 + $0x20] sm:$0xff]
      %v2403 = vld [vmem:[%s540 + $0x28] sm:$0xff]
      %v2404 = vld [vmem:[%s540 + $0x30] sm:$0xff]
      %v2405 = vld [vmem:[%s540 + $0x38] sm:$0xff]
      %v2406 = vld [vmem:[%s540 + $0x40] sm:$0xff]
      %v2407 = vld [vmem:[%s540 + $0x48] sm:$0xff]
      %v2408 = vld [vmem:[%s540 + $0x50] sm:$0xff]
      %v2409 = vld [vmem:[%s540 + $0x58] sm:$0xff]
      %v2410 = vld [vmem:[%s540 + $0x60] sm:$0xff]
      %v2411 = vld [vmem:[%s540 + $0x68] sm:$0xff]
      %v2412 = vld [vmem:[%s540 + $0x70] sm:$0xff]
      %v2413 = vld [vmem:[%s540 + $0x78] sm:$0xff]
      %s2414 = scalar_lea.vmem %s1, 672
      %v2415 = vld [vmem:[%s2414] sm:$0xff]
      %v2416 = vld [vmem:[%s2414 + $0x8] sm:$0xff]
      %v2417 = vmul.f32 %v2398, %v2415
      %v2418 = vmul.f32 %v2399, %v2416
      %v2419 = vmul.f32 %v2400, %v2415
      %v2420 = vmul.f32 %v2401, %v2416
      %v2421 = vmul.f32 %v2402, %v2415
      %v2422 = vmul.f32 %v2403, %v2416
      %v2423 = vmul.f32 %v2404, %v2415
      %v2424 = vmul.f32 %v2405, %v2416
      %v2425 = vmul.f32 %v2406, %v2415
      %v2426 = vmul.f32 %v2407, %v2416
      %v2427 = vmul.f32 %v2408, %v2415
      %v2428 = vmul.f32 %v2409, %v2416
      %v2429 = vmul.f32 %v2410, %v2415
      %v2430 = vmul.f32 %v2411, %v2416
      %v2431 = vmul.f32 %v2412, %v2415
      %v2432 = vmul.f32 %v2413, %v2416
      %v2433 = vadd.f32 %v2382, %v2417
      %v2434 = vadd.f32 %v2383, %v2418
      %v2435 = vadd.f32 %v2384, %v2419
      %v2436 = vadd.f32 %v2385, %v2420
      %v2437 = vadd.f32 %v2386, %v2421
      %v2438 = vadd.f32 %v2387, %v2422
      %v2439 = vadd.f32 %v2388, %v2423
      %v2440 = vadd.f32 %v2389, %v2424
      %v2441 = vadd.f32 %v2390, %v2425
      %v2442 = vadd.f32 %v2391, %v2426
      %v2443 = vadd.f32 %v2392, %v2427
      %v2444 = vadd.f32 %v2393, %v2428
      %v2445 = vadd.f32 %v2394, %v2429
      %v2446 = vadd.f32 %v2395, %v2430
      %v2447 = vadd.f32 %v2396, %v2431
      %v2448 = vadd.f32 %v2397, %v2432
      %s2449 = scalar_lea.vmem [#allocation2], 448
      %v2450 = vld [vmem:[%s2449] sm:$0xff]
      %v2451 = vld [vmem:[%s2449 + $0x8] sm:$0xff]
      %v2452 = vld [vmem:[%s2449 + $0x10] sm:$0xff]
      %v2453 = vld [vmem:[%s2449 + $0x18] sm:$0xff]
      %v2454 = vld [vmem:[%s2449 + $0x20] sm:$0xff]
      %v2455 = vld [vmem:[%s2449 + $0x28] sm:$0xff]
      %v2456 = vld [vmem:[%s2449 + $0x30] sm:$0xff]
      %v2457 = vld [vmem:[%s2449 + $0x38] sm:$0xff]
      %v2458 = vld [vmem:[%s2449 + $0x40] sm:$0xff]
      %v2459 = vld [vmem:[%s2449 + $0x48] sm:$0xff]
      %v2460 = vld [vmem:[%s2449 + $0x50] sm:$0xff]
      %v2461 = vld [vmem:[%s2449 + $0x58] sm:$0xff]
      %v2462 = vld [vmem:[%s2449 + $0x60] sm:$0xff]
      %v2463 = vld [vmem:[%s2449 + $0x68] sm:$0xff]
      %v2464 = vld [vmem:[%s2449 + $0x70] sm:$0xff]
      %v2465 = vld [vmem:[%s2449 + $0x78] sm:$0xff]
      %s2466 = scalar_lea.vmem %s1, 816
      %v2467 = vld [vmem:[%s2466] sm:$0xff]
      %v2468 = vld [vmem:[%s2466 + $0x8] sm:$0xff]
      %v2469 = vmul.f32 %v2450, %v2467
      %v2470 = vmul.f32 %v2451, %v2468
      %v2471 = vmul.f32 %v2452, %v2467
      %v2472 = vmul.f32 %v2453, %v2468
      %v2473 = vmul.f32 %v2454, %v2467
      %v2474 = vmul.f32 %v2455, %v2468
      %v2475 = vmul.f32 %v2456, %v2467
      %v2476 = vmul.f32 %v2457, %v2468
      %v2477 = vmul.f32 %v2458, %v2467
      %v2478 = vmul.f32 %v2459, %v2468
      %v2479 = vmul.f32 %v2460, %v2467
      %v2480 = vmul.f32 %v2461, %v2468
      %v2481 = vmul.f32 %v2462, %v2467
      %v2482 = vmul.f32 %v2463, %v2468
      %v2483 = vmul.f32 %v2464, %v2467
      %v2484 = vmul.f32 %v2465, %v2468
      %v2485 = vadd.f32 %v2433, %v2469
      %v2486 = vadd.f32 %v2434, %v2470
      %v2487 = vadd.f32 %v2435, %v2471
      %v2488 = vadd.f32 %v2436, %v2472
      %v2489 = vadd.f32 %v2437, %v2473
      %v2490 = vadd.f32 %v2438, %v2474
      %v2491 = vadd.f32 %v2439, %v2475
      %v2492 = vadd.f32 %v2440, %v2476
      %v2493 = vadd.f32 %v2441, %v2477
      %v2494 = vadd.f32 %v2442, %v2478
      %v2495 = vadd.f32 %v2443, %v2479
      %v2496 = vadd.f32 %v2444, %v2480
      %v2497 = vadd.f32 %v2445, %v2481
      %v2498 = vadd.f32 %v2446, %v2482
      %v2499 = vadd.f32 %v2447, %v2483
      %v2500 = vadd.f32 %v2448, %v2484
      %2501 = vrot.lane.b32.xlu0 %v2485, 64
      %v2502 = vpop.permute.xlu0 %2501
      %2503 = vrot.lane.b32.xlu0 %v2487, 64
      %v2504 = vpop.permute.xlu0 %2503
      %2505 = vrot.lane.b32.xlu0 %v2489, 64
      %v2506 = vpop.permute.xlu0 %2505
      %2507 = vrot.lane.b32.xlu0 %v2491, 64
      %v2508 = vpop.permute.xlu0 %2507
      %2509 = vrot.lane.b32.xlu0 %v2493, 64
      %v2510 = vpop.permute.xlu0 %2509
      %2511 = vrot.lane.b32.xlu0 %v2495, 64
      %v2512 = vpop.permute.xlu0 %2511
      %2513 = vrot.lane.b32.xlu0 %v2497, 64
      %v2514 = vpop.permute.xlu0 %2513
      %2515 = vrot.lane.b32.xlu0 %v2499, 64
      %v2516 = vpop.permute.xlu0 %2515
      %2517 = vrot.lane.b32.xlu0 %v2486, 64
      %v2518 = vpop.permute.xlu0 %2517
      %2519 = vrot.lane.b32.xlu0 %v2488, 64
      %v2520 = vpop.permute.xlu0 %2519
      %2521 = vrot.lane.b32.xlu0 %v2490, 64
      %v2522 = vpop.permute.xlu0 %2521
      %2523 = vrot.lane.b32.xlu0 %v2492, 64
      %v2524 = vpop.permute.xlu0 %2523
      %2525 = vrot.lane.b32.xlu0 %v2494, 64
      %v2526 = vpop.permute.xlu0 %2525
      %2527 = vrot.lane.b32.xlu0 %v2496, 64
      %v2528 = vpop.permute.xlu0 %2527
      %2529 = vrot.lane.b32.xlu0 %v2498, 64
      %v2530 = vpop.permute.xlu0 %2529
      %2531 = vrot.lane.b32.xlu0 %v2500, 64
      %v2532 = vpop.permute.xlu0 %2531
      %vm2533 = vcmp.lt.s32.totalorder %v1062, 64
      %v2534 = vsel %vm2533, %v2502, %v2518
      %v2535 = vsel %vm2533, %v2504, %v2520
      %v2536 = vsel %vm2533, %v2506, %v2522
      %v2537 = vsel %vm2533, %v2508, %v2524
      %v2538 = vsel %vm2533, %v2510, %v2526
      %v2539 = vsel %vm2533, %v2512, %v2528
      %v2540 = vsel %vm2533, %v2514, %v2530
      %v2541 = vsel %vm2533, %v2516, %v2532
      %v2542 = vsel %vm2533, %v2518, %v2502
      %v2543 = vsel %vm2533, %v2520, %v2504
      %v2544 = vsel %vm2533, %v2522, %v2506
      %v2545 = vsel %vm2533, %v2524, %v2508
      %v2546 = vsel %vm2533, %v2526, %v2510
      %v2547 = vsel %vm2533, %v2528, %v2512
      %v2548 = vsel %vm2533, %v2530, %v2514
      %v2549 = vsel %vm2533, %v2532, %v2516
      %s2550 = scalar_lea.vmem %s1, 464
      %v2551 = vld [vmem:[%s2550] sm:$0xff]
      %v2552 = vld [vmem:[%s2550 + $0x8] sm:$0xff]
      %v2553 = vmul.f32 %v2055, %v2551
      %v2554 = vmul.f32 %v2056, %v2552
      %v2555 = vmul.f32 %v2057, %v2551
      %v2556 = vmul.f32 %v2058, %v2552
      %v2557 = vmul.f32 %v2059, %v2551
      %v2558 = vmul.f32 %v2060, %v2552
      %v2559 = vmul.f32 %v2061, %v2551
      %v2560 = vmul.f32 %v2062, %v2552
      %v2561 = vmul.f32 %v2063, %v2551
      %v2562 = vmul.f32 %v2064, %v2552
      %v2563 = vmul.f32 %v2065, %v2551
      %v2564 = vmul.f32 %v2066, %v2552
      %v2565 = vmul.f32 %v2067, %v2551
      %v2566 = vmul.f32 %v2068, %v2552
      %v2567 = vmul.f32 %v2069, %v2551
      %v2568 = vmul.f32 %v2070, %v2552
      %s2569 = scalar_lea.vmem %s1, 608
      %v2570 = vld [vmem:[%s2569] sm:$0xff]
      %v2571 = vld [vmem:[%s2569 + $0x8] sm:$0xff]
      %v2572 = vmul.f32 %v2090, %v2570
      %v2573 = vmul.f32 %v2091, %v2571
      %v2574 = vmul.f32 %v2092, %v2570
      %v2575 = vmul.f32 %v2093, %v2571
      %v2576 = vmul.f32 %v2094, %v2570
      %v2577 = vmul.f32 %v2095, %v2571
      %v2578 = vmul.f32 %v2096, %v2570
      %v2579 = vmul.f32 %v2097, %v2571
      %v2580 = vmul.f32 %v2098, %v2570
      %v2581 = vmul.f32 %v2099, %v2571
      %v2582 = vmul.f32 %v2100, %v2570
      %v2583 = vmul.f32 %v2101, %v2571
      %v2584 = vmul.f32 %v2102, %v2570
      %v2585 = vmul.f32 %v2103, %v2571
      %v2586 = vmul.f32 %v2104, %v2570
      %v2587 = vmul.f32 %v2105, %v2571
      %v2588 = vadd.f32 %v2553, %v2572
      %v2589 = vadd.f32 %v2554, %v2573
      %v2590 = vadd.f32 %v2555, %v2574
      %v2591 = vadd.f32 %v2556, %v2575
      %v2592 = vadd.f32 %v2557, %v2576
      %v2593 = vadd.f32 %v2558, %v2577
      %v2594 = vadd.f32 %v2559, %v2578
      %v2595 = vadd.f32 %v2560, %v2579
      %v2596 = vadd.f32 %v2561, %v2580
      %v2597 = vadd.f32 %v2562, %v2581
      %v2598 = vadd.f32 %v2563, %v2582
      %v2599 = vadd.f32 %v2564, %v2583
      %v2600 = vadd.f32 %v2565, %v2584
      %v2601 = vadd.f32 %v2566, %v2585
      %v2602 = vadd.f32 %v2567, %v2586
      %v2603 = vadd.f32 %v2568, %v2587
      %s2604 = scalar_lea.vmem %s1, 752
      %v2605 = vld [vmem:[%s2604] sm:$0xff]
      %v2606 = vld [vmem:[%s2604 + $0x8] sm:$0xff]
      %v2607 = vmul.f32 %v2142, %v2605
      %v2608 = vmul.f32 %v2143, %v2606
      %v2609 = vmul.f32 %v2144, %v2605
      %v2610 = vmul.f32 %v2145, %v2606
      %v2611 = vmul.f32 %v2146, %v2605
      %v2612 = vmul.f32 %v2147, %v2606
      %v2613 = vmul.f32 %v2148, %v2605
      %v2614 = vmul.f32 %v2149, %v2606
      %v2615 = vmul.f32 %v2150, %v2605
      %v2616 = vmul.f32 %v2151, %v2606
      %v2617 = vmul.f32 %v2152, %v2605
      %v2618 = vmul.f32 %v2153, %v2606
      %v2619 = vmul.f32 %v2154, %v2605
      %v2620 = vmul.f32 %v2155, %v2606
      %v2621 = vmul.f32 %v2156, %v2605
      %v2622 = vmul.f32 %v2157, %v2606
      %v2623 = vadd.f32 %v2588, %v2607
      %v2624 = vadd.f32 %v2589, %v2608
      %v2625 = vadd.f32 %v2590, %v2609
      %v2626 = vadd.f32 %v2591, %v2610
      %v2627 = vadd.f32 %v2592, %v2611
      %v2628 = vadd.f32 %v2593, %v2612
      %v2629 = vadd.f32 %v2594, %v2613
      %v2630 = vadd.f32 %v2595, %v2614
      %v2631 = vadd.f32 %v2596, %v2615
      %v2632 = vadd.f32 %v2597, %v2616
      %v2633 = vadd.f32 %v2598, %v2617
      %v2634 = vadd.f32 %v2599, %v2618
      %v2635 = vadd.f32 %v2600, %v2619
      %v2636 = vadd.f32 %v2601, %v2620
      %v2637 = vadd.f32 %v2602, %v2621
      %v2638 = vadd.f32 %v2603, %v2622
      %s2639 = scalar_lea.vmem %s1, 512
      %v2640 = vld [vmem:[%s2639] sm:$0xff]
      %v2641 = vld [vmem:[%s2639 + $0x8] sm:$0xff]
      %v2642 = vmul.f32 %v2193, %v2640
      %v2643 = vmul.f32 %v2194, %v2641
      %v2644 = vmul.f32 %v2195, %v2640
      %v2645 = vmul.f32 %v2196, %v2641
      %v2646 = vmul.f32 %v2197, %v2640
      %v2647 = vmul.f32 %v2198, %v2641
      %v2648 = vmul.f32 %v2199, %v2640
      %v2649 = vmul.f32 %v2200, %v2641
      %v2650 = vmul.f32 %v2201, %v2640
      %v2651 = vmul.f32 %v2202, %v2641
      %v2652 = vmul.f32 %v2203, %v2640
      %v2653 = vmul.f32 %v2204, %v2641
      %v2654 = vmul.f32 %v2205, %v2640
      %v2655 = vmul.f32 %v2206, %v2641
      %v2656 = vmul.f32 %v2207, %v2640
      %v2657 = vmul.f32 %v2208, %v2641
      %v2658 = vadd.f32 %v2623, %v2642
      %v2659 = vadd.f32 %v2624, %v2643
      %v2660 = vadd.f32 %v2625, %v2644
      %v2661 = vadd.f32 %v2626, %v2645
      %v2662 = vadd.f32 %v2627, %v2646
      %v2663 = vadd.f32 %v2628, %v2647
      %v2664 = vadd.f32 %v2629, %v2648
      %v2665 = vadd.f32 %v2630, %v2649
      %v2666 = vadd.f32 %v2631, %v2650
      %v2667 = vadd.f32 %v2632, %v2651
      %v2668 = vadd.f32 %v2633, %v2652
      %v2669 = vadd.f32 %v2634, %v2653
      %v2670 = vadd.f32 %v2635, %v2654
      %v2671 = vadd.f32 %v2636, %v2655
      %v2672 = vadd.f32 %v2637, %v2656
      %v2673 = vadd.f32 %v2638, %v2657
      %s2674 = scalar_lea.vmem %s1, 656
      %v2675 = vld [vmem:[%s2674] sm:$0xff]
      %v2676 = vld [vmem:[%s2674 + $0x8] sm:$0xff]
      %v2677 = vmul.f32 %v2244, %v2675
      %v2678 = vmul.f32 %v2245, %v2676
      %v2679 = vmul.f32 %v2246, %v2675
      %v2680 = vmul.f32 %v2247, %v2676
      %v2681 = vmul.f32 %v2248, %v2675
      %v2682 = vmul.f32 %v2249, %v2676
      %v2683 = vmul.f32 %v2250, %v2675
      %v2684 = vmul.f32 %v2251, %v2676
      %v2685 = vmul.f32 %v2252, %v2675
      %v2686 = vmul.f32 %v2253, %v2676
      %v2687 = vmul.f32 %v2254, %v2675
      %v2688 = vmul.f32 %v2255, %v2676
      %v2689 = vmul.f32 %v2256, %v2675
      %v2690 = vmul.f32 %v2257, %v2676
      %v2691 = vmul.f32 %v2258, %v2675
      %v2692 = vmul.f32 %v2259, %v2676
      %v2693 = vadd.f32 %v2658, %v2677
      %v2694 = vadd.f32 %v2659, %v2678
      %v2695 = vadd.f32 %v2660, %v2679
      %v2696 = vadd.f32 %v2661, %v2680
      %v2697 = vadd.f32 %v2662, %v2681
      %v2698 = vadd.f32 %v2663, %v2682
      %v2699 = vadd.f32 %v2664, %v2683
      %v2700 = vadd.f32 %v2665, %v2684
      %v2701 = vadd.f32 %v2666, %v2685
      %v2702 = vadd.f32 %v2667, %v2686
      %v2703 = vadd.f32 %v2668, %v2687
      %v2704 = vadd.f32 %v2669, %v2688
      %v2705 = vadd.f32 %v2670, %v2689
      %v2706 = vadd.f32 %v2671, %v2690
      %v2707 = vadd.f32 %v2672, %v2691
      %v2708 = vadd.f32 %v2673, %v2692
      %s2709 = scalar_lea.vmem %s1, 800
      %v2710 = vld [vmem:[%s2709] sm:$0xff]
      %v2711 = vld [vmem:[%s2709 + $0x8] sm:$0xff]
      %v2712 = vmul.f32 %v2296, %v2710
      %v2713 = vmul.f32 %v2297, %v2711
      %v2714 = vmul.f32 %v2298, %v2710
      %v2715 = vmul.f32 %v2299, %v2711
      %v2716 = vmul.f32 %v2300, %v2710
      %v2717 = vmul.f32 %v2301, %v2711
      %v2718 = vmul.f32 %v2302, %v2710
      %v2719 = vmul.f32 %v2303, %v2711
      %v2720 = vmul.f32 %v2304, %v2710
      %v2721 = vmul.f32 %v2305, %v2711
      %v2722 = vmul.f32 %v2306, %v2710
      %v2723 = vmul.f32 %v2307, %v2711
      %v2724 = vmul.f32 %v2308, %v2710
      %v2725 = vmul.f32 %v2309, %v2711
      %v2726 = vmul.f32 %v2310, %v2710
      %v2727 = vmul.f32 %v2311, %v2711
      %v2728 = vadd.f32 %v2693, %v2712
      %v2729 = vadd.f32 %v2694, %v2713
      %v2730 = vadd.f32 %v2695, %v2714
      %v2731 = vadd.f32 %v2696, %v2715
      %v2732 = vadd.f32 %v2697, %v2716
      %v2733 = vadd.f32 %v2698, %v2717
      %v2734 = vadd.f32 %v2699, %v2718
      %v2735 = vadd.f32 %v2700, %v2719
      %v2736 = vadd.f32 %v2701, %v2720
      %v2737 = vadd.f32 %v2702, %v2721
      %v2738 = vadd.f32 %v2703, %v2722
      %v2739 = vadd.f32 %v2704, %v2723
      %v2740 = vadd.f32 %v2705, %v2724
      %v2741 = vadd.f32 %v2706, %v2725
      %v2742 = vadd.f32 %v2707, %v2726
      %v2743 = vadd.f32 %v2708, %v2727
      %s2744 = scalar_lea.vmem %s1, 560
      %v2745 = vld [vmem:[%s2744] sm:$0xff]
      %v2746 = vld [vmem:[%s2744 + $0x8] sm:$0xff]
      %v2747 = vmul.f32 %v2347, %v2745
      %v2748 = vmul.f32 %v2348, %v2746
      %v2749 = vmul.f32 %v2349, %v2745
      %v2750 = vmul.f32 %v2350, %v2746
      %v2751 = vmul.f32 %v2351, %v2745
      %v2752 = vmul.f32 %v2352, %v2746
      %v2753 = vmul.f32 %v2353, %v2745
      %v2754 = vmul.f32 %v2354, %v2746
      %v2755 = vmul.f32 %v2355, %v2745
      %v2756 = vmul.f32 %v2356, %v2746
      %v2757 = vmul.f32 %v2357, %v2745
      %v2758 = vmul.f32 %v2358, %v2746
      %v2759 = vmul.f32 %v2359, %v2745
      %v2760 = vmul.f32 %v2360, %v2746
      %v2761 = vmul.f32 %v2361, %v2745
      %v2762 = vmul.f32 %v2362, %v2746
      %v2763 = vadd.f32 %v2728, %v2747
      %v2764 = vadd.f32 %v2729, %v2748
      %v2765 = vadd.f32 %v2730, %v2749
      %v2766 = vadd.f32 %v2731, %v2750
      %v2767 = vadd.f32 %v2732, %v2751
      %v2768 = vadd.f32 %v2733, %v2752
      %v2769 = vadd.f32 %v2734, %v2753
      %v2770 = vadd.f32 %v2735, %v2754
      %v2771 = vadd.f32 %v2736, %v2755
      %v2772 = vadd.f32 %v2737, %v2756
      %v2773 = vadd.f32 %v2738, %v2757
      %v2774 = vadd.f32 %v2739, %v2758
      %v2775 = vadd.f32 %v2740, %v2759
      %v2776 = vadd.f32 %v2741, %v2760
      %v2777 = vadd.f32 %v2742, %v2761
      %v2778 = vadd.f32 %v2743, %v2762
      %s2779 = scalar_lea.vmem %s1, 704
      %v2780 = vld [vmem:[%s2779] sm:$0xff]
      %v2781 = vld [vmem:[%s2779 + $0x8] sm:$0xff]
      %v2782 = vmul.f32 %v2398, %v2780
      %v2783 = vmul.f32 %v2399, %v2781
      %v2784 = vmul.f32 %v2400, %v2780
      %v2785 = vmul.f32 %v2401, %v2781
      %v2786 = vmul.f32 %v2402, %v2780
      %v2787 = vmul.f32 %v2403, %v2781
      %v2788 = vmul.f32 %v2404, %v2780
      %v2789 = vmul.f32 %v2405, %v2781
      %v2790 = vmul.f32 %v2406, %v2780
      %v2791 = vmul.f32 %v2407, %v2781
      %v2792 = vmul.f32 %v2408, %v2780
      %v2793 = vmul.f32 %v2409, %v2781
      %v2794 = vmul.f32 %v2410, %v2780
      %v2795 = vmul.f32 %v2411, %v2781
      %v2796 = vmul.f32 %v2412, %v2780
      %v2797 = vmul.f32 %v2413, %v2781
      %v2798 = vadd.f32 %v2763, %v2782
      %v2799 = vadd.f32 %v2764, %v2783
      %v2800 = vadd.f32 %v2765, %v2784
      %v2801 = vadd.f32 %v2766, %v2785
      %v2802 = vadd.f32 %v2767, %v2786
      %v2803 = vadd.f32 %v2768, %v2787
      %v2804 = vadd.f32 %v2769, %v2788
      %v2805 = vadd.f32 %v2770, %v2789
      %v2806 = vadd.f32 %v2771, %v2790
      %v2807 = vadd.f32 %v2772, %v2791
      %v2808 = vadd.f32 %v2773, %v2792
      %v2809 = vadd.f32 %v2774, %v2793
      %v2810 = vadd.f32 %v2775, %v2794
      %v2811 = vadd.f32 %v2776, %v2795
      %v2812 = vadd.f32 %v2777, %v2796
      %v2813 = vadd.f32 %v2778, %v2797
      %s2814 = scalar_lea.vmem %s1, 848
      %v2815 = vld [vmem:[%s2814] sm:$0xff]
      %v2816 = vld [vmem:[%s2814 + $0x8] sm:$0xff]
      %v2817 = vmul.f32 %v2450, %v2815
      %v2818 = vmul.f32 %v2451, %v2816
      %v2819 = vmul.f32 %v2452, %v2815
      %v2820 = vmul.f32 %v2453, %v2816
      %v2821 = vmul.f32 %v2454, %v2815
      %v2822 = vmul.f32 %v2455, %v2816
      %v2823 = vmul.f32 %v2456, %v2815
      %v2824 = vmul.f32 %v2457, %v2816
      %v2825 = vmul.f32 %v2458, %v2815
      %v2826 = vmul.f32 %v2459, %v2816
      %v2827 = vmul.f32 %v2460, %v2815
      %v2828 = vmul.f32 %v2461, %v2816
      %v2829 = vmul.f32 %v2462, %v2815
      %v2830 = vmul.f32 %v2463, %v2816
      %v2831 = vmul.f32 %v2464, %v2815
      %v2832 = vmul.f32 %v2465, %v2816
      %v2833 = vadd.f32 %v2798, %v2817
      %v2834 = vadd.f32 %v2799, %v2818
      %v2835 = vadd.f32 %v2800, %v2819
      %v2836 = vadd.f32 %v2801, %v2820
      %v2837 = vadd.f32 %v2802, %v2821
      %v2838 = vadd.f32 %v2803, %v2822
      %v2839 = vadd.f32 %v2804, %v2823
      %v2840 = vadd.f32 %v2805, %v2824
      %v2841 = vadd.f32 %v2806, %v2825
      %v2842 = vadd.f32 %v2807, %v2826
      %v2843 = vadd.f32 %v2808, %v2827
      %v2844 = vadd.f32 %v2809, %v2828
      %v2845 = vadd.f32 %v2810, %v2829
      %v2846 = vadd.f32 %v2811, %v2830
      %v2847 = vadd.f32 %v2812, %v2831
      %v2848 = vadd.f32 %v2813, %v2832
      %2849 = vrot.lane.b32.xlu0 %v2833, 64
      %v2850 = vpop.permute.xlu0 %2849
      %2851 = vrot.lane.b32.xlu0 %v2835, 64
      %v2852 = vpop.permute.xlu0 %2851
      %2853 = vrot.lane.b32.xlu0 %v2837, 64
      %v2854 = vpop.permute.xlu0 %2853
      %2855 = vrot.lane.b32.xlu0 %v2839, 64
      %v2856 = vpop.permute.xlu0 %2855
      %2857 = vrot.lane.b32.xlu0 %v2841, 64
      %v2858 = vpop.permute.xlu0 %2857
      %2859 = vrot.lane.b32.xlu0 %v2843, 64
      %v2860 = vpop.permute.xlu0 %2859
      %2861 = vrot.lane.b32.xlu0 %v2845, 64
      %v2862 = vpop.permute.xlu0 %2861
      %2863 = vrot.lane.b32.xlu0 %v2847, 64
      %v2864 = vpop.permute.xlu0 %2863
      %2865 = vrot.lane.b32.xlu0 %v2834, 64
      %v2866 = vpop.permute.xlu0 %2865
      %2867 = vrot.lane.b32.xlu0 %v2836, 64
      %v2868 = vpop.permute.xlu0 %2867
      %2869 = vrot.lane.b32.xlu0 %v2838, 64
      %v2870 = vpop.permute.xlu0 %2869
      %2871 = vrot.lane.b32.xlu0 %v2840, 64
      %v2872 = vpop.permute.xlu0 %2871
      %2873 = vrot.lane.b32.xlu0 %v2842, 64
      %v2874 = vpop.permute.xlu0 %2873
      %2875 = vrot.lane.b32.xlu0 %v2844, 64
      %v2876 = vpop.permute.xlu0 %2875
      %2877 = vrot.lane.b32.xlu0 %v2846, 64
      %v2878 = vpop.permute.xlu0 %2877
      %2879 = vrot.lane.b32.xlu0 %v2848, 64
      %v2880 = vpop.permute.xlu0 %2879
      %v2881 = vsel %vm2533, %v2850, %v2866
      %v2882 = vsel %vm2533, %v2852, %v2868
      %v2883 = vsel %vm2533, %v2854, %v2870
      %v2884 = vsel %vm2533, %v2856, %v2872
      %v2885 = vsel %vm2533, %v2858, %v2874
      %v2886 = vsel %vm2533, %v2860, %v2876
      %v2887 = vsel %vm2533, %v2862, %v2878
      %v2888 = vsel %vm2533, %v2864, %v2880
      %v2889 = vsel %vm2533, %v2866, %v2850
      %v2890 = vsel %vm2533, %v2868, %v2852
      %v2891 = vsel %vm2533, %v2870, %v2854
      %v2892 = vsel %vm2533, %v2872, %v2856
      %v2893 = vsel %vm2533, %v2874, %v2858
      %v2894 = vsel %vm2533, %v2876, %v2860
      %v2895 = vsel %vm2533, %v2878, %v2862
      %v2896 = vsel %vm2533, %v2880, %v2864
      %v2897 = vadd.f32 %v2542, %v2881
      %v2898 = vadd.f32 %v2534, %v2889
      %v2899 = vadd.f32 %v2543, %v2882
      %v2900 = vadd.f32 %v2535, %v2890
      %v2901 = vadd.f32 %v2544, %v2883
      %v2902 = vadd.f32 %v2536, %v2891
      %v2903 = vadd.f32 %v2545, %v2884
      %v2904 = vadd.f32 %v2537, %v2892
      %v2905 = vadd.f32 %v2546, %v2885
      %v2906 = vadd.f32 %v2538, %v2893
      %v2907 = vadd.f32 %v2547, %v2886
      %v2908 = vadd.f32 %v2539, %v2894
      %v2909 = vadd.f32 %v2548, %v2887
      %v2910 = vadd.f32 %v2540, %v2895
      %v2911 = vadd.f32 %v2549, %v2888
      %v2912 = vadd.f32 %v2541, %v2896
      %s2913 = scalar_lea.vmem %s1, 448
      %v2914 = vld [vmem:[%s2913] sm:$0xff]
      %v2915 = vld [vmem:[%s2913 + $0x8] sm:$0xff]
      %v2916 = vmul.f32 %v2055, %v2914
      %v2917 = vmul.f32 %v2056, %v2915
      %v2918 = vmul.f32 %v2057, %v2914
      %v2919 = vmul.f32 %v2058, %v2915
      %v2920 = vmul.f32 %v2059, %v2914
      %v2921 = vmul.f32 %v2060, %v2915
      %v2922 = vmul.f32 %v2061, %v2914
      %v2923 = vmul.f32 %v2062, %v2915
      %v2924 = vmul.f32 %v2063, %v2914
      %v2925 = vmul.f32 %v2064, %v2915
      %v2926 = vmul.f32 %v2065, %v2914
      %v2927 = vmul.f32 %v2066, %v2915
      %v2928 = vmul.f32 %v2067, %v2914
      %v2929 = vmul.f32 %v2068, %v2915
      %v2930 = vmul.f32 %v2069, %v2914
      %v2931 = vmul.f32 %v2070, %v2915
      %v2932 = vadd.f32 %v2897, %v2916
      %v2933 = vadd.f32 %v2898, %v2917
      %v2934 = vadd.f32 %v2899, %v2918
      %v2935 = vadd.f32 %v2900, %v2919
      %v2936 = vadd.f32 %v2901, %v2920
      %v2937 = vadd.f32 %v2902, %v2921
      %v2938 = vadd.f32 %v2903, %v2922
      %v2939 = vadd.f32 %v2904, %v2923
      %v2940 = vadd.f32 %v2905, %v2924
      %v2941 = vadd.f32 %v2906, %v2925
      %v2942 = vadd.f32 %v2907, %v2926
      %v2943 = vadd.f32 %v2908, %v2927
      %v2944 = vadd.f32 %v2909, %v2928
      %v2945 = vadd.f32 %v2910, %v2929
      %v2946 = vadd.f32 %v2911, %v2930
      %v2947 = vadd.f32 %v2912, %v2931
      %s2948 = scalar_lea.vmem %s1, 592
      %v2949 = vld [vmem:[%s2948] sm:$0xff]
      %v2950 = vld [vmem:[%s2948 + $0x8] sm:$0xff]
      %v2951 = vmul.f32 %v2090, %v2949
      %v2952 = vmul.f32 %v2091, %v2950
      %v2953 = vmul.f32 %v2092, %v2949
      %v2954 = vmul.f32 %v2093, %v2950
      %v2955 = vmul.f32 %v2094, %v2949
      %v2956 = vmul.f32 %v2095, %v2950
      %v2957 = vmul.f32 %v2096, %v2949
      %v2958 = vmul.f32 %v2097, %v2950
      %v2959 = vmul.f32 %v2098, %v2949
      %v2960 = vmul.f32 %v2099, %v2950
      %v2961 = vmul.f32 %v2100, %v2949
      %v2962 = vmul.f32 %v2101, %v2950
      %v2963 = vmul.f32 %v2102, %v2949
      %v2964 = vmul.f32 %v2103, %v2950
      %v2965 = vmul.f32 %v2104, %v2949
      %v2966 = vmul.f32 %v2105, %v2950
      %v2967 = vadd.f32 %v2932, %v2951
      %v2968 = vadd.f32 %v2933, %v2952
      %v2969 = vadd.f32 %v2934, %v2953
      %v2970 = vadd.f32 %v2935, %v2954
      %v2971 = vadd.f32 %v2936, %v2955
      %v2972 = vadd.f32 %v2937, %v2956
      %v2973 = vadd.f32 %v2938, %v2957
      %v2974 = vadd.f32 %v2939, %v2958
      %v2975 = vadd.f32 %v2940, %v2959
      %v2976 = vadd.f32 %v2941, %v2960
      %v2977 = vadd.f32 %v2942, %v2961
      %v2978 = vadd.f32 %v2943, %v2962
      %v2979 = vadd.f32 %v2944, %v2963
      %v2980 = vadd.f32 %v2945, %v2964
      %v2981 = vadd.f32 %v2946, %v2965
      %v2982 = vadd.f32 %v2947, %v2966
      %s2983 = scalar_lea.vmem %s1, 736
      %v2984 = vld [vmem:[%s2983] sm:$0xff]
      %v2985 = vld [vmem:[%s2983 + $0x8] sm:$0xff]
      %v2986 = vmul.f32 %v2142, %v2984
      %v2987 = vmul.f32 %v2143, %v2985
      %v2988 = vmul.f32 %v2144, %v2984
      %v2989 = vmul.f32 %v2145, %v2985
      %v2990 = vmul.f32 %v2146, %v2984
      %v2991 = vmul.f32 %v2147, %v2985
      %v2992 = vmul.f32 %v2148, %v2984
      %v2993 = vmul.f32 %v2149, %v2985
      %v2994 = vmul.f32 %v2150, %v2984
      %v2995 = vmul.f32 %v2151, %v2985
      %v2996 = vmul.f32 %v2152, %v2984
      %v2997 = vmul.f32 %v2153, %v2985
      %v2998 = vmul.f32 %v2154, %v2984
      %v2999 = vmul.f32 %v2155, %v2985
      %v3000 = vmul.f32 %v2156, %v2984
      %v3001 = vmul.f32 %v2157, %v2985
      %v3002 = vadd.f32 %v2967, %v2986
      %v3003 = vadd.f32 %v2968, %v2987
      %v3004 = vadd.f32 %v2969, %v2988
      %v3005 = vadd.f32 %v2970, %v2989
      %v3006 = vadd.f32 %v2971, %v2990
      %v3007 = vadd.f32 %v2972, %v2991
      %v3008 = vadd.f32 %v2973, %v2992
      %v3009 = vadd.f32 %v2974, %v2993
      %v3010 = vadd.f32 %v2975, %v2994
      %v3011 = vadd.f32 %v2976, %v2995
      %v3012 = vadd.f32 %v2977, %v2996
      %v3013 = vadd.f32 %v2978, %v2997
      %v3014 = vadd.f32 %v2979, %v2998
      %v3015 = vadd.f32 %v2980, %v2999
      %v3016 = vadd.f32 %v2981, %v3000
      %v3017 = vadd.f32 %v2982, %v3001
      %s3018 = scalar_lea.vmem %s1, 496
      %v3019 = vld [vmem:[%s3018] sm:$0xff]
      %v3020 = vld [vmem:[%s3018 + $0x8] sm:$0xff]
      %v3021 = vmul.f32 %v2193, %v3019
      %v3022 = vmul.f32 %v2194, %v3020
      %v3023 = vmul.f32 %v2195, %v3019
      %v3024 = vmul.f32 %v2196, %v3020
      %v3025 = vmul.f32 %v2197, %v3019
      %v3026 = vmul.f32 %v2198, %v3020
      %v3027 = vmul.f32 %v2199, %v3019
      %v3028 = vmul.f32 %v2200, %v3020
      %v3029 = vmul.f32 %v2201, %v3019
      %v3030 = vmul.f32 %v2202, %v3020
      %v3031 = vmul.f32 %v2203, %v3019
      %v3032 = vmul.f32 %v2204, %v3020
      %v3033 = vmul.f32 %v2205, %v3019
      %v3034 = vmul.f32 %v2206, %v3020
      %v3035 = vmul.f32 %v2207, %v3019
      %v3036 = vmul.f32 %v2208, %v3020
      %v3037 = vadd.f32 %v3002, %v3021
      %v3038 = vadd.f32 %v3003, %v3022
      %v3039 = vadd.f32 %v3004, %v3023
      %v3040 = vadd.f32 %v3005, %v3024
      %v3041 = vadd.f32 %v3006, %v3025
      %v3042 = vadd.f32 %v3007, %v3026
      %v3043 = vadd.f32 %v3008, %v3027
      %v3044 = vadd.f32 %v3009, %v3028
      %v3045 = vadd.f32 %v3010, %v3029
      %v3046 = vadd.f32 %v3011, %v3030
      %v3047 = vadd.f32 %v3012, %v3031
      %v3048 = vadd.f32 %v3013, %v3032
      %v3049 = vadd.f32 %v3014, %v3033
      %v3050 = vadd.f32 %v3015, %v3034
      %v3051 = vadd.f32 %v3016, %v3035
      %v3052 = vadd.f32 %v3017, %v3036
      %s3053 = scalar_lea.vmem %s1, 640
      %v3054 = vld [vmem:[%s3053] sm:$0xff]
      %v3055 = vld [vmem:[%s3053 + $0x8] sm:$0xff]
      %v3056 = vmul.f32 %v2244, %v3054
      %v3057 = vmul.f32 %v2245, %v3055
      %v3058 = vmul.f32 %v2246, %v3054
      %v3059 = vmul.f32 %v2247, %v3055
      %v3060 = vmul.f32 %v2248, %v3054
      %v3061 = vmul.f32 %v2249, %v3055
      %v3062 = vmul.f32 %v2250, %v3054
      %v3063 = vmul.f32 %v2251, %v3055
      %v3064 = vmul.f32 %v2252, %v3054
      %v3065 = vmul.f32 %v2253, %v3055
      %v3066 = vmul.f32 %v2254, %v3054
      %v3067 = vmul.f32 %v2255, %v3055
      %v3068 = vmul.f32 %v2256, %v3054
      %v3069 = vmul.f32 %v2257, %v3055
      %v3070 = vmul.f32 %v2258, %v3054
      %v3071 = vmul.f32 %v2259, %v3055
      %v3072 = vadd.f32 %v3037, %v3056
      %v3073 = vadd.f32 %v3038, %v3057
      %v3074 = vadd.f32 %v3039, %v3058
      %v3075 = vadd.f32 %v3040, %v3059
      %v3076 = vadd.f32 %v3041, %v3060
      %v3077 = vadd.f32 %v3042, %v3061
      %v3078 = vadd.f32 %v3043, %v3062
      %v3079 = vadd.f32 %v3044, %v3063
      %v3080 = vadd.f32 %v3045, %v3064
      %v3081 = vadd.f32 %v3046, %v3065
      %v3082 = vadd.f32 %v3047, %v3066
      %v3083 = vadd.f32 %v3048, %v3067
      %v3084 = vadd.f32 %v3049, %v3068
      %v3085 = vadd.f32 %v3050, %v3069
      %v3086 = vadd.f32 %v3051, %v3070
      %v3087 = vadd.f32 %v3052, %v3071
      %s3088 = scalar_lea.vmem %s1, 784
      %v3089 = vld [vmem:[%s3088] sm:$0xff]
      %v3090 = vld [vmem:[%s3088 + $0x8] sm:$0xff]
      %v3091 = vmul.f32 %v2296, %v3089
      %v3092 = vmul.f32 %v2297, %v3090
      %v3093 = vmul.f32 %v2298, %v3089
      %v3094 = vmul.f32 %v2299, %v3090
      %v3095 = vmul.f32 %v2300, %v3089
      %v3096 = vmul.f32 %v2301, %v3090
      %v3097 = vmul.f32 %v2302, %v3089
      %v3098 = vmul.f32 %v2303, %v3090
      %v3099 = vmul.f32 %v2304, %v3089
      %v3100 = vmul.f32 %v2305, %v3090
      %v3101 = vmul.f32 %v2306, %v3089
      %v3102 = vmul.f32 %v2307, %v3090
      %v3103 = vmul.f32 %v2308, %v3089
      %v3104 = vmul.f32 %v2309, %v3090
      %v3105 = vmul.f32 %v2310, %v3089
      %v3106 = vmul.f32 %v2311, %v3090
      %v3107 = vadd.f32 %v3072, %v3091
      %v3108 = vadd.f32 %v3073, %v3092
      %v3109 = vadd.f32 %v3074, %v3093
      %v3110 = vadd.f32 %v3075, %v3094
      %v3111 = vadd.f32 %v3076, %v3095
      %v3112 = vadd.f32 %v3077, %v3096
      %v3113 = vadd.f32 %v3078, %v3097
      %v3114 = vadd.f32 %v3079, %v3098
      %v3115 = vadd.f32 %v3080, %v3099
      %v3116 = vadd.f32 %v3081, %v3100
      %v3117 = vadd.f32 %v3082, %v3101
      %v3118 = vadd.f32 %v3083, %v3102
      %v3119 = vadd.f32 %v3084, %v3103
      %v3120 = vadd.f32 %v3085, %v3104
      %v3121 = vadd.f32 %v3086, %v3105
      %v3122 = vadd.f32 %v3087, %v3106
      %s3123 = scalar_lea.vmem %s1, 544
      %v3124 = vld [vmem:[%s3123] sm:$0xff]
      %v3125 = vld [vmem:[%s3123 + $0x8] sm:$0xff]
      %v3126 = vmul.f32 %v2347, %v3124
      %v3127 = vmul.f32 %v2348, %v3125
      %v3128 = vmul.f32 %v2349, %v3124
      %v3129 = vmul.f32 %v2350, %v3125
      %v3130 = vmul.f32 %v2351, %v3124
      %v3131 = vmul.f32 %v2352, %v3125
      %v3132 = vmul.f32 %v2353, %v3124
      %v3133 = vmul.f32 %v2354, %v3125
      %v3134 = vmul.f32 %v2355, %v3124
      %v3135 = vmul.f32 %v2356, %v3125
      %v3136 = vmul.f32 %v2357, %v3124
      %v3137 = vmul.f32 %v2358, %v3125
      %v3138 = vmul.f32 %v2359, %v3124
      %v3139 = vmul.f32 %v2360, %v3125
      %v3140 = vmul.f32 %v2361, %v3124
      %v3141 = vmul.f32 %v2362, %v3125
      %v3142 = vadd.f32 %v3107, %v3126
      %v3143 = vadd.f32 %v3108, %v3127
      %v3144 = vadd.f32 %v3109, %v3128
      %v3145 = vadd.f32 %v3110, %v3129
      %v3146 = vadd.f32 %v3111, %v3130
      %v3147 = vadd.f32 %v3112, %v3131
      %v3148 = vadd.f32 %v3113, %v3132
      %v3149 = vadd.f32 %v3114, %v3133
      %v3150 = vadd.f32 %v3115, %v3134
      %v3151 = vadd.f32 %v3116, %v3135
      %v3152 = vadd.f32 %v3117, %v3136
      %v3153 = vadd.f32 %v3118, %v3137
      %v3154 = vadd.f32 %v3119, %v3138
      %v3155 = vadd.f32 %v3120, %v3139
      %v3156 = vadd.f32 %v3121, %v3140
      %v3157 = vadd.f32 %v3122, %v3141
      %s3158 = scalar_lea.vmem %s1, 688
      %v3159 = vld [vmem:[%s3158] sm:$0xff]
      %v3160 = vld [vmem:[%s3158 + $0x8] sm:$0xff]
      %v3161 = vmul.f32 %v2398, %v3159
      %v3162 = vmul.f32 %v2399, %v3160
      %v3163 = vmul.f32 %v2400, %v3159
      %v3164 = vmul.f32 %v2401, %v3160
      %v3165 = vmul.f32 %v2402, %v3159
      %v3166 = vmul.f32 %v2403, %v3160
      %v3167 = vmul.f32 %v2404, %v3159
      %v3168 = vmul.f32 %v2405, %v3160
      %v3169 = vmul.f32 %v2406, %v3159
      %v3170 = vmul.f32 %v2407, %v3160
      %v3171 = vmul.f32 %v2408, %v3159
      %v3172 = vmul.f32 %v2409, %v3160
      %v3173 = vmul.f32 %v2410, %v3159
      %v3174 = vmul.f32 %v2411, %v3160
      %v3175 = vmul.f32 %v2412, %v3159
      %v3176 = vmul.f32 %v2413, %v3160
      %v3177 = vadd.f32 %v3142, %v3161
      %v3178 = vadd.f32 %v3143, %v3162
      %v3179 = vadd.f32 %v3144, %v3163
      %v3180 = vadd.f32 %v3145, %v3164
      %v3181 = vadd.f32 %v3146, %v3165
      %v3182 = vadd.f32 %v3147, %v3166
      %v3183 = vadd.f32 %v3148, %v3167
      %v3184 = vadd.f32 %v3149, %v3168
      %v3185 = vadd.f32 %v3150, %v3169
      %v3186 = vadd.f32 %v3151, %v3170
      %v3187 = vadd.f32 %v3152, %v3171
      %v3188 = vadd.f32 %v3153, %v3172
      %v3189 = vadd.f32 %v3154, %v3173
      %v3190 = vadd.f32 %v3155, %v3174
      %v3191 = vadd.f32 %v3156, %v3175
      %v3192 = vadd.f32 %v3157, %v3176
      %s3193 = scalar_lea.vmem %s1, 832
      %v3194 = vld [vmem:[%s3193] sm:$0xff]
      %v3195 = vld [vmem:[%s3193 + $0x8] sm:$0xff]
      %v3196 = vmul.f32 %v2450, %v3194
      %v3197 = vmul.f32 %v2451, %v3195
      %v3198 = vmul.f32 %v2452, %v3194
      %v3199 = vmul.f32 %v2453, %v3195
      %v3200 = vmul.f32 %v2454, %v3194
      %v3201 = vmul.f32 %v2455, %v3195
      %v3202 = vmul.f32 %v2456, %v3194
      %v3203 = vmul.f32 %v2457, %v3195
      %v3204 = vmul.f32 %v2458, %v3194
      %v3205 = vmul.f32 %v2459, %v3195
      %v3206 = vmul.f32 %v2460, %v3194
      %v3207 = vmul.f32 %v2461, %v3195
      %v3208 = vmul.f32 %v2462, %v3194
      %v3209 = vmul.f32 %v2463, %v3195
      %v3210 = vmul.f32 %v2464, %v3194
      %v3211 = vmul.f32 %v2465, %v3195
      %v3212 = vadd.f32 %v3177, %v3196
      %v3213 = vadd.f32 %v3178, %v3197
      %v3214 = vadd.f32 %v3179, %v3198
      %v3215 = vadd.f32 %v3180, %v3199
      %v3216 = vadd.f32 %v3181, %v3200
      %v3217 = vadd.f32 %v3182, %v3201
      %v3218 = vadd.f32 %v3183, %v3202
      %v3219 = vadd.f32 %v3184, %v3203
      %v3220 = vadd.f32 %v3185, %v3204
      %v3221 = vadd.f32 %v3186, %v3205
      %v3222 = vadd.f32 %v3187, %v3206
      %v3223 = vadd.f32 %v3188, %v3207
      %v3224 = vadd.f32 %v3189, %v3208
      %v3225 = vadd.f32 %v3190, %v3209
      %v3226 = vadd.f32 %v3191, %v3210
      %v3227 = vadd.f32 %v3192, %v3211
      %s3228 = scalar_lea.vmem %s2, 1
      %v3229 = vld [vmem:[%s3228] ss:$2 sm:$0x3]
      %v3231 = vlaneseq
      %v3232 = vshrl.u32 %v3231, 7
      %v3233 = vsub.s32 0, %v3232
      %v3234 = vrot.slane %v3229, %v3233
      %v3235 = vlaneseq
      %v3236 = vshrl.u32 %v3235, 7
      %v3237 = vsub.s32 1, %v3236
      %v3238 = vrot.slane %v3229, %v3237
      %v3241 = vmul.f32 %v3212, %v3234
      %v3242 = vmul.f32 %v3213, %v3238
      %v3243 = vmul.f32 %v3214, %v3234
      %v3244 = vmul.f32 %v3215, %v3238
      %v3245 = vmul.f32 %v3216, %v3234
      %v3246 = vmul.f32 %v3217, %v3238
      %v3247 = vmul.f32 %v3218, %v3234
      %v3248 = vmul.f32 %v3219, %v3238
      %v3249 = vmul.f32 %v3220, %v3234
      %v3250 = vmul.f32 %v3221, %v3238
      %v3251 = vmul.f32 %v3222, %v3234
      %v3252 = vmul.f32 %v3223, %v3238
      %v3253 = vmul.f32 %v3224, %v3234
      %v3254 = vmul.f32 %v3225, %v3238
      %v3255 = vmul.f32 %v3226, %v3234
      %v3256 = vmul.f32 %v3227, %v3238
      %s3257 = scalar_lea.vmem %s3, 1
      %v3258 = vld [vmem:[%s3257] ss:$2 sm:$0x3]
      %v3260 = vlaneseq
      %v3261 = vshrl.u32 %v3260, 7
      %v3262 = vsub.s32 0, %v3261
      %v3263 = vrot.slane %v3258, %v3262
      %v3264 = vlaneseq
      %v3265 = vshrl.u32 %v3264, 7
      %v3266 = vsub.s32 1, %v3265
      %v3267 = vrot.slane %v3258, %v3266
      %v3270 = vadd.f32 %v3241, %v3263
      %v3271 = vadd.f32 %v3242, %v3267
      %v3272 = vadd.f32 %v3243, %v3263
      %v3273 = vadd.f32 %v3244, %v3267
      %v3274 = vadd.f32 %v3245, %v3263
      %v3275 = vadd.f32 %v3246, %v3267
      %v3276 = vadd.f32 %v3247, %v3263
      %v3277 = vadd.f32 %v3248, %v3267
      %v3278 = vadd.f32 %v3249, %v3263
      %v3279 = vadd.f32 %v3250, %v3267
      %v3280 = vadd.f32 %v3251, %v3263
      %v3281 = vadd.f32 %v3252, %v3267
      %v3282 = vadd.f32 %v3253, %v3263
      %v3283 = vadd.f32 %v3254, %v3267
      %v3284 = vadd.f32 %v3255, %v3263
      %v3285 = vadd.f32 %v3256, %v3267
      %v3286 = vmax.f32 %v3270, 0.0
      %v3287 = vmax.f32 %v3271, 0.0
      %v3288 = vmax.f32 %v3272, 0.0
      %v3289 = vmax.f32 %v3273, 0.0
      %v3290 = vmax.f32 %v3274, 0.0
      %v3291 = vmax.f32 %v3275, 0.0
      %v3292 = vmax.f32 %v3276, 0.0
      %v3293 = vmax.f32 %v3277, 0.0
      %v3294 = vmax.f32 %v3278, 0.0
      %v3295 = vmax.f32 %v3279, 0.0
      %v3296 = vmax.f32 %v3280, 0.0
      %v3297 = vmax.f32 %v3281, 0.0
      %v3298 = vmax.f32 %v3282, 0.0
      %v3299 = vmax.f32 %v3283, 0.0
      %v3300 = vmax.f32 %v3284, 0.0
      %v3301 = vmax.f32 %v3285, 0.0
      %v3302 = vadd.f32 %v3286, %v3288
      %v3303 = vadd.f32 %v3302, %v3290
      %v3304 = vadd.f32 %v3303, %v3292
      %v3305 = vadd.f32 %v3304, %v3294
      %v3306 = vadd.f32 %v3305, %v3296
      %v3307 = vadd.f32 %v3306, %v3298
      %v3308 = vadd.f32 %v3307, %v3300
      %v3309 = vadd.f32 %v3287, %v3289
      %v3310 = vadd.f32 %v3309, %v3291
      %v3311 = vadd.f32 %v3310, %v3293
      %v3312 = vadd.f32 %v3311, %v3295
      %v3313 = vadd.f32 %v3312, %v3297
      %v3314 = vadd.f32 %v3313, %v3299
      %v3315 = vadd.f32 %v3314, %v3301
      %v3316 = vadd.f32 %v1845, %v3308
      %v3317 = vadd.f32 %v1846, %v3315
      %v3318 = vrot.slane %v3316, 4
      %v3319 = vadd.f32 %v3316, %v3318
      %v3320 = vrot.slane %v3319, 2
      %v3321 = vadd.f32 %v3319, %v3320
      %v3322 = vrot.slane %v3321, 1
      %v3323 = vadd.f32 %v3321, %v3322
      %v3324 = vrot.slane %v3317, 4
      %v3325 = vadd.f32 %v3317, %v3324
      %v3326 = vrot.slane %v3325, 2
      %v3327 = vadd.f32 %v3325, %v3326
      %v3328 = vrot.slane %v3327, 1
      %v3329 = vadd.f32 %v3327, %v3328
      %v3330 = vld [vmem:[%s4] sm:$0xff]
      %v3331 = vld [vmem:[%s4 + $0x8] sm:$0xff]
      %v3332 = vld [vmem:[%s4 + $0x10] sm:$0xff]
      %v3333 = vld [vmem:[%s4 + $0x18] sm:$0xff]
      %v3334 = vld [vmem:[%s4 + $0x20] sm:$0xff]
      %v3335 = vld [vmem:[%s4 + $0x28] sm:$0xff]
      %v3336 = vld [vmem:[%s4 + $0x30] sm:$0xff]
      %v3337 = vld [vmem:[%s4 + $0x38] sm:$0xff]
      %v3338 = vld [vmem:[%s4 + $0x40] sm:$0xff]
      %v3339 = vld [vmem:[%s4 + $0x48] sm:$0xff]
      %v3340 = vld [vmem:[%s4 + $0x50] sm:$0xff]
      %v3341 = vld [vmem:[%s4 + $0x58] sm:$0xff]
      %v3342 = vld [vmem:[%s4 + $0x60] sm:$0xff]
      %v3343 = vld [vmem:[%s4 + $0x68] sm:$0xff]
      %v3344 = vld [vmem:[%s4 + $0x70] sm:$0xff]
      %v3345 = vld [vmem:[%s4 + $0x78] sm:$0xff]
      %v3346 = vld [vmem:[%s4 + $0x80] sm:$0xff]
      %v3347 = vld [vmem:[%s4 + $0x88] sm:$0xff]
      %v3348 = vld [vmem:[%s4 + $0x90] sm:$0xff]
      %v3349 = vld [vmem:[%s4 + $0x98] sm:$0xff]
      %v3350 = vld [vmem:[%s4 + $0xa0] sm:$0xff]
      %v3351 = vld [vmem:[%s4 + $0xa8] sm:$0xff]
      %v3352 = vld [vmem:[%s4 + $0xb0] sm:$0xff]
      %v3353 = vld [vmem:[%s4 + $0xb8] sm:$0xff]
      %v3354 = vld [vmem:[%s4 + $0xc0] sm:$0xff]
      %v3355 = vld [vmem:[%s4 + $0xc8] sm:$0xff]
      %v3356 = vld [vmem:[%s4 + $0xd0] sm:$0xff]
      %v3357 = vld [vmem:[%s4 + $0xd8] sm:$0xff]
      %v3358 = vld [vmem:[%s4 + $0xe0] sm:$0xff]
      %v3359 = vld [vmem:[%s4 + $0xe8] sm:$0xff]
      %v3360 = vld [vmem:[%s4 + $0xf0] sm:$0xff]
      %v3361 = vld [vmem:[%s4 + $0xf8] sm:$0xff]
      %3362 = vmatprep.subr.mxu0 0.0
      %3363 = vmatpush1.msra.mxu0 %v3330
      %3364 = vmatprep.subr.mxu0 0.0
      %3365 = vmatpush1.msra.mxu0 %v3331
      %3366 = vmatprep.subr.mxu0 0.0
      %3367 = vmatpush1.msra.mxu0 %v3332
      %3368 = vmatprep.subr.mxu0 0.0
      %3369 = vmatpush1.msra.mxu0 %v3333
      %3370 = vmatprep.subr.mxu0 0.0
      %3371 = vmatpush1.msra.mxu0 %v3334
      %3372 = vmatprep.subr.mxu0 0.0
      %3373 = vmatpush1.msra.mxu0 %v3335
      %3374 = vmatprep.subr.mxu0 0.0
      %3375 = vmatpush1.msra.mxu0 %v3336
      %3376 = vmatprep.subr.mxu0 0.0
      %3377 = vmatpush1.msra.mxu0 %v3337
      %3378 = vmatprep.subr.mxu0 0.0
      %3379 = vmatpush1.msra.mxu0 %v3338
      %3380 = vmatprep.subr.mxu0 0.0
      %3381 = vmatpush1.msra.mxu0 %v3339
      %3382 = vmatprep.subr.mxu0 0.0
      %3383 = vmatpush1.msra.mxu0 %v3340
      %3384 = vmatprep.subr.mxu0 0.0
      %3385 = vmatpush1.msra.mxu0 %v3341
      %3386 = vmatprep.subr.mxu0 0.0
      %3387 = vmatpush1.msra.mxu0 %v3342
      %3388 = vmatprep.subr.mxu0 0.0
      %3389 = vmatpush1.msra.mxu0 %v3343
      %3390 = vmatprep.subr.mxu0 0.0
      %3391 = vmatpush1.msra.mxu0 %v3344
      %3392 = vmatprep.subr.mxu0 0.0
      %3393 = vmatpush1.msra.mxu0 %v3345
      %3394 = vmatprep.subr.mxu0 0.0
      %3395 = vmatpush1.msra.mxu0 %v3346
      %3396 = vmatprep.subr.mxu0 0.0
      %3397 = vmatpush1.msra.mxu0 %v3347
      %3398 = vmatprep.subr.mxu0 0.0
      %3399 = vmatpush1.msra.mxu0 %v3348
      %3400 = vmatprep.subr.mxu0 0.0
      %3401 = vmatpush1.msra.mxu0 %v3349
      %3402 = vmatprep.subr.mxu0 0.0
      %3403 = vmatpush1.msra.mxu0 %v3350
      %3404 = vmatprep.subr.mxu0 0.0
      %3405 = vmatpush1.msra.mxu0 %v3351
      %3406 = vmatprep.subr.mxu0 0.0
      %3407 = vmatpush1.msra.mxu0 %v3352
      %3408 = vmatprep.subr.mxu0 0.0
      %3409 = vmatpush1.msra.mxu0 %v3353
      %3410 = vmatprep.subr.mxu0 0.0
      %3411 = vmatpush1.msra.mxu0 %v3354
      %3412 = vmatprep.subr.mxu0 0.0
      %3413 = vmatpush1.msra.mxu0 %v3355
      %3414 = vmatprep.subr.mxu0 0.0
      %3415 = vmatpush1.msra.mxu0 %v3356
      %3416 = vmatprep.subr.mxu0 0.0
      %3417 = vmatpush1.msra.mxu0 %v3357
      %3418 = vmatprep.subr.mxu0 0.0
      %3419 = vmatpush1.msra.mxu0 %v3358
      %3420 = vmatprep.subr.mxu0 0.0
      %3421 = vmatpush1.msra.mxu0 %v3359
      %3422 = vmatprep.subr.mxu0 0.0
      %3423 = vmatpush1.msra.mxu0 %v3360
      %3424 = vmatprep.subr.mxu0 0.0
      %3425 = vmatpush1.msra.mxu0 %v3361
      %3426 = vmatprep.mubr.f32.mxu0 %v3329
      %3427 = vmatmul.mubr.f32.gmra.mrb[0].mxu0 %v3323
      %v3428 = vpop.f32.mrb[0].mxu0
      %v3429 = vadd.f32 0.0, %v3428
      %v3430 = vpop.f32.mrb[0].mxu0
      %3431 = vdwg.mxu0
      %v3432 = vld [vmem:[%s5] sm:$0x1]
      %v3433 = vmul.f32 %v3429, %v3432
      %v3434 = vld [vmem:[%s6] sm:$0x1]
      %v3435 = vadd.f32 %v3433, %v3434
      %v3436 = vmax.f32 %v3435, 0.0
      %v3437 = vld [vmem:[%s7] sm:$0xff]
      %v3438 = vld [vmem:[%s7 + $0x8] sm:$0xff]
      %v3439 = vld [vmem:[%s7 + $0x10] sm:$0xff]
      %v3440 = vld [vmem:[%s7 + $0x18] sm:$0xff]
      %v3441 = vld [vmem:[%s7 + $0x20] sm:$0xff]
      %v3442 = vld [vmem:[%s7 + $0x28] sm:$0xff]
      %v3443 = vld [vmem:[%s7 + $0x30] sm:$0xff]
      %v3444 = vld [vmem:[%s7 + $0x38] sm:$0xff]
      %vm3445 = vcmask 261120
      %v3447 = vsel %vm3445, %v3436, 0
      %3449 = vmatprep.subr.mxu0 %v3438
      %3450 = vmatpush1.msra.mxu0 %v3437
      %3451 = vmatprep.subr.mxu0 %v3440
      %3452 = vmatpush1.msra.mxu0 %v3439
      %3453 = vmatprep.subr.mxu0 %v3442
      %3454 = vmatpush1.msra.mxu0 %v3441
      %3455 = vmatprep.subr.mxu0 %v3444
      %3456 = vmatpush1.msra.mxu0 %v3443
      %3457 = vmatprep.subr.mxu0 0.0
      %3458 = vmatpush1.msra.mxu0 0.0
      %3459 = vmatprep.subr.mxu0 0.0
      %3460 = vmatpush1.msra.mxu0 0.0
      %3461 = vmatprep.subr.mxu0 0.0
      %3462 = vmatpush1.msra.mxu0 0.0
      %3463 = vmatprep.subr.mxu0 0.0
      %3464 = vmatpush1.msra.mxu0 0.0
      %3465 = vmatprep.subr.mxu0 0.0
      %3466 = vmatpush1.msra.mxu0 0.0
      %3467 = vmatprep.subr.mxu0 0.0
      %3468 = vmatpush1.msra.mxu0 0.0
      %3469 = vmatprep.subr.mxu0 0.0
      %3470 = vmatpush1.msra.mxu0 0.0
      %3471 = vmatprep.subr.mxu0 0.0
      %3472 = vmatpush1.msra.mxu0 0.0
      %3473 = vmatprep.subr.mxu0 0.0
      %3474 = vmatpush1.msra.mxu0 0.0
      %3475 = vmatprep.subr.mxu0 0.0
      %3476 = vmatpush1.msra.mxu0 0.0
      %3477 = vmatprep.subr.mxu0 0.0
      %3478 = vmatpush1.msra.mxu0 0.0
      %3479 = vmatprep.subr.mxu0 0.0
      %3480 = vmatpush1.msra.mxu0 0.0
      %3481 = vmatprep.subr.mxu0 0.0
      %3482 = vmatpush1.msra.mxu0 0.0
      %3483 = vmatprep.subr.mxu0 0.0
      %3484 = vmatpush1.msra.mxu0 0.0
      %3485 = vmatprep.subr.mxu0 0.0
      %3486 = vmatpush1.msra.mxu0 0.0
      %3487 = vmatprep.subr.mxu0 0.0
      %3488 = vmatpush1.msra.mxu0 0.0
      %3489 = vmatprep.subr.mxu0 0.0
      %3490 = vmatpush1.msra.mxu0 0.0
      %3491 = vmatprep.subr.mxu0 0.0
      %3492 = vmatpush1.msra.mxu0 0.0
      %3493 = vmatprep.subr.mxu0 0.0
      %3494 = vmatpush1.msra.mxu0 0.0
      %3495 = vmatprep.subr.mxu0 0.0
      %3496 = vmatpush1.msra.mxu0 0.0
      %3497 = vmatprep.subr.mxu0 0.0
      %3498 = vmatpush1.msra.mxu0 0.0
      %3499 = vmatprep.subr.mxu0 0.0
      %3500 = vmatpush1.msra.mxu0 0.0
      %3501 = vmatprep.subr.mxu0 0.0
      %3502 = vmatpush1.msra.mxu0 0.0
      %3503 = vmatprep.subr.mxu0 0.0
      %3504 = vmatpush1.msra.mxu0 0.0
      %3505 = vmatprep.subr.mxu0 0.0
      %3506 = vmatpush1.msra.mxu0 0.0
      %3507 = vmatprep.subr.mxu0 0.0
      %3508 = vmatpush1.msra.mxu0 0.0
      %3509 = vmatprep.subr.mxu0 0.0
      %3510 = vmatpush1.msra.mxu0 0.0
      %3511 = vmatprep.subr.mxu0 0.0
      %3512 = vmatpush1.msra.mxu0 0.0
      %3513 = vmatprep.mubr.f32.mxu0 0.0
      %3514 = vmatmul.mubr.f32.gmra.mrb[0].mxu0 %v3447
      %v3515 = vpop.f32.mrb[0].mxu0
      %v3516 = vadd.f32 0.0, %v3515
      %v3517 = vpop.f32.mrb[0].mxu0
      %v3518 = vadd.f32 0.0, %v3517
      %3519 = vdwg.mxu0
      %v3520 = vsub.f32 0.0, %v3516
      %v3521 = vsub.f32 0.0, %v3518
      %v3522 = vmul.f32 %v3520, 1.442695
      %v3523 = vpow.pop %v3522
      %v3524 = vmul.f32 %v3521, 1.442695
      %v3525 = vpow.pop %v3524
      %v3526 = vadd.f32 %v3523, 1.0
      %v3527 = vadd.f32 %v3525, 1.0
      %v3528 = vrcp.pop %v3526
      %v3529 = vmul.f32 1.0, %v3528
      %v3530 = vrcp.pop %v3527
      %v3531 = vmul.f32 1.0, %v3530
      %v3532 = vld [vmem:[#allocation3] sm:$0xff]
      %v3533 = vld [vmem:[#allocation3 + $0x8] sm:$0xff]
      %v3534 = vld [vmem:[#allocation3 + $0x10] sm:$0xff]
      %v3535 = vld [vmem:[#allocation3 + $0x18] sm:$0xff]
      %v3536 = vld [vmem:[#allocation3 + $0x20] sm:$0xff]
      %v3537 = vld [vmem:[#allocation3 + $0x28] sm:$0xff]
      %v3538 = vld [vmem:[#allocation3 + $0x30] sm:$0xff]
      %v3539 = vld [vmem:[#allocation3 + $0x38] sm:$0xff]
      %v3540 = vld [vmem:[#allocation3 + $0x40] sm:$0xff]
      %v3541 = vld [vmem:[#allocation3 + $0x48] sm:$0xff]
      %v3542 = vld [vmem:[#allocation3 + $0x50] sm:$0xff]
      %v3543 = vld [vmem:[#allocation3 + $0x58] sm:$0xff]
      %v3544 = vld [vmem:[#allocation3 + $0x60] sm:$0xff]
      %v3545 = vld [vmem:[#allocation3 + $0x68] sm:$0xff]
      %v3546 = vld [vmem:[#allocation3 + $0x70] sm:$0xff]
      %v3547 = vld [vmem:[#allocation3 + $0x78] sm:$0xff]
      %v3548 = vsub.f32 %v3532, %v3286
      %v3549 = vsub.f32 %v3533, %v3287
      %v3550 = vsub.f32 %v3534, %v3288
      %v3551 = vsub.f32 %v3535, %v3289
      %v3552 = vsub.f32 %v3536, %v3290
      %v3553 = vsub.f32 %v3537, %v3291
      %v3554 = vsub.f32 %v3538, %v3292
      %v3555 = vsub.f32 %v3539, %v3293
      %v3556 = vsub.f32 %v3540, %v3294
      %v3557 = vsub.f32 %v3541, %v3295
      %v3558 = vsub.f32 %v3542, %v3296
      %v3559 = vsub.f32 %v3543, %v3297
      %v3560 = vsub.f32 %v3544, %v3298
      %v3561 = vsub.f32 %v3545, %v3299
      %v3562 = vsub.f32 %v3546, %v3300
      %v3563 = vsub.f32 %v3547, %v3301
      %v3564 = vlaneseq
      %v3565 = vshrl.u32 %v3564, 7
      %v3566 = vsub.s32 0, %v3565
      %v3567 = vrot.slane %v3529, %v3566
      %v3568 = vlaneseq
      %v3569 = vshrl.u32 %v3568, 7
      %v3570 = vsub.s32 0, %v3569
      %v3571 = vrot.slane %v3531, %v3570
      %v3572 = vmul.f32 %v3548, %v3567
      %v3573 = vmul.f32 %v3549, %v3571
      %v3574 = vmul.f32 %v3550, %v3567
      %v3575 = vmul.f32 %v3551, %v3571
      %v3576 = vmul.f32 %v3552, %v3567
      %v3577 = vmul.f32 %v3553, %v3571
      %v3578 = vmul.f32 %v3554, %v3567
      %v3579 = vmul.f32 %v3555, %v3571
      %v3580 = vmul.f32 %v3556, %v3567
      %v3581 = vmul.f32 %v3557, %v3571
      %v3582 = vmul.f32 %v3558, %v3567
      %v3583 = vmul.f32 %v3559, %v3571
      %v3584 = vmul.f32 %v3560, %v3567
      %v3585 = vmul.f32 %v3561, %v3571
      %v3586 = vmul.f32 %v3562, %v3567
      %v3587 = vmul.f32 %v3563, %v3571
      %v3588 = vadd.f32 %v3286, %v3572
      %v3589 = vadd.f32 %v3287, %v3573
      %v3590 = vadd.f32 %v3288, %v3574
      %v3591 = vadd.f32 %v3289, %v3575
      %v3592 = vadd.f32 %v3290, %v3576
      %v3593 = vadd.f32 %v3291, %v3577
      %v3594 = vadd.f32 %v3292, %v3578
      %v3595 = vadd.f32 %v3293, %v3579
      %v3596 = vadd.f32 %v3294, %v3580
      %v3597 = vadd.f32 %v3295, %v3581
      %v3598 = vadd.f32 %v3296, %v3582
      %v3599 = vadd.f32 %v3297, %v3583
      %v3600 = vadd.f32 %v3298, %v3584
      %v3601 = vadd.f32 %v3299, %v3585
      %v3602 = vadd.f32 %v3300, %v3586
      %v3603 = vadd.f32 %v3301, %v3587
      %3604 = vst [vmem:[%s305] sm:$0xff] %v3588
      %3605 = vst [vmem:[%s305 + $0x8] sm:$0xff] %v3589
      %3606 = vst [vmem:[%s305 + $0x10] sm:$0xff] %v3590
      %3607 = vst [vmem:[%s305 + $0x18] sm:$0xff] %v3591
      %3608 = vst [vmem:[%s305 + $0x20] sm:$0xff] %v3592
      %3609 = vst [vmem:[%s305 + $0x28] sm:$0xff] %v3593
      %3610 = vst [vmem:[%s305 + $0x30] sm:$0xff] %v3594
      %3611 = vst [vmem:[%s305 + $0x38] sm:$0xff] %v3595
      %3612 = vst [vmem:[%s305 + $0x40] sm:$0xff] %v3596
      %3613 = vst [vmem:[%s305 + $0x48] sm:$0xff] %v3597
      %3614 = vst [vmem:[%s305 + $0x50] sm:$0xff] %v3598
      %3615 = vst [vmem:[%s305 + $0x58] sm:$0xff] %v3599
      %3616 = vst [vmem:[%s305 + $0x60] sm:$0xff] %v3600
      %3617 = vst [vmem:[%s305 + $0x68] sm:$0xff] %v3601
      %3618 = vst [vmem:[%s305 + $0x70] sm:$0xff] %v3602
      %3619 = vst [vmem:[%s305 + $0x78] sm:$0xff] %v3603
      %p3620 = scmp.lt.s32.totalorder %s19, 1
      %s3621 = scalar_select %p3620, %s19, 1
      %s3622 = smul.addr %s3621, 16
      %s3623 = smul.addr %s3622, 8
      %s3624 = scalar_lea.vmem %s8, %s3623
      // Predicated region
      $region53: #{sknet_forward.1} parent=51 // pred_check
        %p3625 = pneg %p210
      $region54: #{sknet_forward.1} parent=51 // pred_check_branch
        %3627 = sbr.rel (%p3625) target = $region56
      $region55: #{sknet_forward.1} parent=51 // pred_region
        _
      $region56: #{sknet_forward.1} parent=51 // pred_fallthru
        _
    $region52: #{sknet_forward.1} parent=5 // pred_fallthru
      _
    %p3628 = scmp.le.s32.totalorder 2, %s14
    // Predicated region
    $region57: #{sknet_forward.1} parent=5 // pred_check
      %p3629 = pneg %p3628
    $region58: #{sknet_forward.1} parent=5 // pred_check_branch
      %3631 = sbr.rel (%p3629) target = $region60
    $region59: #{sknet_forward.1} parent=5 // pred_region
      %s3632 = ssub.s32 %s14, 2
      // Predicated region
      $region61: #{sknet_forward.1} parent=59 // pred_check
        %p3633 = pneg %p216
      $region62: #{sknet_forward.1} parent=59 // pred_check_branch
        %3635 = sbr.rel (%p3633) target = $region64
      $region63: #{sknet_forward.1} parent=59 // pred_region
        %p3636 = scmp.lt.s32.totalorder %s20, 1
        %s3637 = scalar_select %p3636, %s20, 1
        %s3638 = smul.addr %s3637, 16
        %s3639 = smul.addr %s3638, 8
        %s3640 = scalar_lea.vmem %s8, %s3639
      $region64: #{sknet_forward.1} parent=59 // pred_fallthru
        _
    $region60: #{sknet_forward.1} parent=5 // pred_fallthru
      _
  $region6: #{sknet_forward.1} parent=0 // loop_footer
    %s18 = sadd.s32 1, %s14
  $region7: #{sknet_forward.1} parent=0 // loop_footer_branch
    %13 = sbr.rel target = $region3
  $region8: #{sknet_forward.1} parent=0 // loop_exit
    _

</llo_original>
